<compile_context>
chip_gen: v7x
topology: tpu7x:2x2x1
jax: 0.10.0
libtpu: 0.0.40
codegen_flags: <defaults>
</compile_context>

<pallas_src>
import math

import jax
import jax.numpy as jnp
from jax.experimental import pallas as pl
from jax.experimental.pallas import tpu as pltpu

# ---- module configuration: DownBlock(in=4, out=8, kernel_size=3, activation=ReLU, pool_size=2) ----
IN_CH, OUT_CH, KSIZE, POOL = 4, 8, 3, 2
HID = OUT_CH // 2              # CBAM reduction_ratio = 2
SP_K = 7                       # CBAM spatial-gate conv kernel size
SP_PAD = SP_K // 2
PAD = max(0, POOL - 1)         # Conv2d padding
BN_EPS = 1e-5
BN_SCALE = 1.0 / math.sqrt(1.0 + BN_EPS)   # eval-mode BatchNorm2d(1) with default running stats


def _pick_batch_block(n):
    """Largest BB in {8,4,2} dividing n that still leaves >=2 grid steps (v7x megacore); else 1."""
    for bb in (8, 4, 2):
        if n % bb == 0 and n // bb >= 2:
            return bb
    return 1


def down_block_forward(x_nchw, params):
    N, Cin, H, W = x_nchw.shape
    Cout = OUT_CH
    Hp, Wp = H + 2 * PAD, W + 2 * PAD                 # padded conv-input grid (18, 18)
    Ho, Wo = Hp - KSIZE + 1, Wp - KSIZE + 1           # conv output grid (16, 16)
    Hq, Wq = Ho - POOL + 1, Wo - POOL + 1             # pool / final grid (15, 15)
    LX = Hp * Wp                                      # 324: flat padded input length
    LC = (Ho - 1) * Wp + Wo                           # 286: flat conv-output span (stride Wp)
    LQ = (Hq - 1) * Wp + Wq                           # 267: flat pool-output span (stride Wp)
    LO = Hq * Wp                                      # 270: lane-dense output row (gap-padded)
    HALO = SP_PAD * Wp + SP_PAD                       # 57:  zero halo for the 7x7 spatial conv
    BB = _pick_batch_block(N)

    # ---- wrapper-side plumbing (tiny, layout only; no transposes of x) ----
    x = x_nchw.astype(jnp.float32)
    x_flat = jnp.pad(x, ((0, 0), (0, 0), (PAD, PAD), (PAD, PAD))).reshape(N, Cin, LX)
    wc = jnp.transpose(params["w_conv"], (0, 2, 3, 1)).reshape(Cout, KSIZE * KSIZE * Cin)  # (8, 36)
    bc = params["b_conv"].reshape(Cout, 1)
    w1t = params["w1"].T                               # (HID, Cout)
    b1t = params["b1"].reshape(HID, 1)
    w2t = params["w2"].T                               # (Cout, HID)
    b2t = params["b2"].reshape(Cout, 1)
    wsp = params["w_sp"].reshape(2, SP_K * SP_K)       # (2, 49): [max/mean channel, kh*7+kw]
    # valid-column mask on the gap-padded (stride-Wp) flat grid
    mask = ((jnp.arange(LQ) % Wp) < Wq).astype(jnp.float32).reshape(1, LQ)

    def kernel(x_ref, wc_ref, bc_ref, w1_ref, b1_ref, w2_ref, b2_ref, wsp_ref, m_ref, o_ref):
        f32 = jnp.float32
        msk = m_ref[...]                                            # (1, LQ)
        inv_valid = 1.0 / float(Hq * Wq)
        for b in range(BB):                                         # static unroll over batch block
            xb = x_ref[b]                                           # (Cin, LX) lane-dense
            # -- conv3x3 ("same" pad baked into x): 9 shifted-view matmuls accumulated --
            acc = jnp.zeros((Cout, LC), f32)
            for kh in range(KSIZE):
                for kw in range(KSIZE):
                    t = kh * KSIZE + kw
                    xs = xb[:, kh * Wp + kw: kh * Wp + kw + LC]      # (Cin, LC) contiguous lanes
                    wt = wc_ref[:, t * Cin: (t + 1) * Cin]           # (Cout, Cin)
                    acc = acc + jnp.dot(wt, xs, preferred_element_type=f32)
            y = jnp.maximum(acc + bc_ref[...], 0.0)                  # bias + ReLU, (Cout, LC)

            # -- MaxPool2d(2, stride 1): max of 4 lane-shifted slices on the stride-Wp grid --
            p = y[:, 0:LQ]
            for dh in range(POOL):
                for dw in range(POOL):
                    if dh == 0 and dw == 0:
                        continue
                    p = jnp.maximum(p, y[:, dh * Wp + dw: dh * Wp + dw + LQ])
            # gap columns (w >= Wq) of the stride-Wp grid hold garbage -> mask for reductions.
            pm = jnp.where(msk > 0.5, p, -1e30)

            # -- CBAM channel gate: avg/max/lp/lse pools -> shared MLP (transposed) -> sigmoid --
            avg_p = jnp.sum(p * msk, axis=1, keepdims=True) * inv_valid          # (Cout, 1)
            max_p = jnp.max(pm, axis=1, keepdims=True)                           # (Cout, 1)
            lp_p = jnp.sqrt(jnp.sum(p * p * msk, axis=1, keepdims=True))         # (Cout, 1)
            lse_p = max_p + jnp.log(jnp.sum(jnp.exp(pm - max_p), axis=1, keepdims=True))
            pools = jnp.concatenate([avg_p, max_p, lp_p, lse_p], axis=1)         # (Cout, 4)
            hid = jnp.maximum(jnp.dot(w1_ref[...], pools, preferred_element_type=f32)
                              + b1_ref[...], 0.0)                                # (HID, 4)
            att = jnp.dot(w2_ref[...], hid, preferred_element_type=f32) + b2_ref[...]  # (Cout, 4)
            cscale = jax.nn.sigmoid(jnp.sum(att, axis=1, keepdims=True))         # (Cout, 1)
            xc = p * cscale                                                      # (Cout, LQ)

            # -- CBAM spatial gate: ChannelPool -> 7x7 conv as 49 two-channel FMAs -> BN -> sigmoid
            cmax = jnp.max(xc, axis=0, keepdims=True)                            # (1, LQ)
            cmean = jnp.mean(xc, axis=0, keepdims=True)                          # (1, LQ)
            comp = jnp.concatenate([cmax, cmean], axis=0) * msk                  # (2, LQ), gaps = 0
            zhal = jnp.zeros((2, HALO), f32)
            sge = jnp.concatenate([zhal, comp, zhal], axis=1)                    # (2, LQ + 2*HALO)
            sacc = jnp.zeros((2, LQ), f32)
            for dh in range(SP_K):
                for dw in range(SP_K):
                    wk = wsp_ref[:, dh * SP_K + dw: dh * SP_K + dw + 1]          # (2, 1)
                    off = dh * Wp + dw
                    sacc = sacc + wk * sge[:, off: off + LQ]
            sgate = jnp.sum(sacc, axis=0, keepdims=True)                         # (1, LQ)
            # TODO(synk): SpatialGate BatchNorm is modeled in eval mode with default running stats
            # (mean=0, var=1, identity affine); trained BN statistics are not modeled.
            sscale = jax.nn.sigmoid(sgate * BN_SCALE)                            # (1, LQ)
            yout = xc * sscale                                                   # (Cout, LQ)
            o_ref[b] = jnp.concatenate([yout, jnp.zeros((Cout, LO - LQ), f32)], axis=1)

    full = lambda a: pl.BlockSpec(a.shape, lambda b: (0,) * a.ndim)
    out_flat = pl.pallas_call(
        kernel,
        out_shape=jax.ShapeDtypeStruct((N, Cout, LO), jnp.float32),
        grid=(N // BB,),
        in_specs=[pl.BlockSpec((BB, Cin, LX), lambda b: (b, 0, 0)),
                  full(wc), full(bc), full(w1t), full(b1t), full(w2t), full(b2t),
                  full(wsp), full(mask)],
        out_specs=pl.BlockSpec((BB, Cout, LO), lambda b: (b, 0, 0)),
        compiler_params=pltpu.CompilerParams(dimension_semantics=("parallel",)),
    )(x_flat, wc, bc, w1t, b1t, w2t, b2t, wsp, mask)

    # de-gap the stride-Wp flat rows -> (N, Cout, Hq, Wq); cheap contiguous copy, no transpose.
    return out_flat.reshape(N, Cout, Hq, Wp)[..., :Wq]


def init_params(key):
    k = jax.random.split(key, 5)
    fan_in, fan_out = IN_CH * KSIZE * KSIZE, OUT_CH * KSIZE * KSIZE
    std = math.sqrt(2.0 / (fan_in + fan_out))                                    # xavier_normal_
    w_conv = jax.random.normal(k[0], (OUT_CH, IN_CH, KSIZE, KSIZE), jnp.float32) * std
    b_conv = jnp.zeros((OUT_CH,), jnp.float32)                                   # default_init_weights -> 0
    w1 = jax.random.normal(k[1], (OUT_CH, HID), jnp.float32) * (1.0 / math.sqrt(OUT_CH))
    b1 = jax.random.normal(k[2], (HID,), jnp.float32) * 0.01
    w2 = jax.random.normal(k[3], (HID, OUT_CH), jnp.float32) * (1.0 / math.sqrt(HID))
    b2 = jnp.zeros((OUT_CH,), jnp.float32)
    sp_std = math.sqrt(2.0 / (3 * SP_K * SP_K))
    w_sp = jax.random.normal(k[4], (1, 2, SP_K, SP_K), jnp.float32) * sp_std
    return dict(w_conv=w_conv, b_conv=b_conv, w1=w1, b1=b1, w2=w2, b2=b2, w_sp=w_sp)


def reference(x_nchw, params):
    """Pure-JAX reference of the same forward pass (for correctness check)."""
    x = jnp.transpose(x_nchw, (0, 2, 3, 1)).astype(jnp.float32)
    w_hwio = jnp.transpose(params["w_conv"], (2, 3, 1, 0))
    y = jax.lax.conv_general_dilated(x, w_hwio, (1, 1), [(PAD, PAD), (PAD, PAD)],
                                     dimension_numbers=("NHWC", "HWIO", "NHWC"))
    y = jnp.maximum(y + params["b_conv"][None, None, None, :], 0.0)
    y = jax.lax.reduce_window(y, -jnp.inf, jax.lax.max, (1, POOL, POOL, 1), (1, 1, 1, 1), "VALID")
    Nb, Hq, Wq, C = y.shape
    flat = y.reshape(Nb, Hq * Wq, C)
    avg, mx = flat.mean(1), flat.max(1)
    lp = jnp.sqrt((flat * flat).sum(1))
    m = flat.max(1, keepdims=True)
    lse = (m + jnp.log(jnp.exp(flat - m).sum(1, keepdims=True)))[:, 0, :]

    def mlp(v):
        return jnp.maximum(v @ params["w1"] + params["b1"][None], 0.0) @ params["w2"] + params["b2"][None]

    att = mlp(avg) + mlp(mx) + mlp(lp) + mlp(lse)
    y = y * jax.nn.sigmoid(att)[:, None, None, :]
    comp = jnp.concatenate([y.max(-1, keepdims=True), y.mean(-1, keepdims=True)], -1)
    wsp_hwio = jnp.transpose(params["w_sp"], (2, 3, 1, 0))
    sp = jax.lax.conv_general_dilated(comp, wsp_hwio, (1, 1),
                                      [(SP_K // 2,) * 2, (SP_K // 2,) * 2],
                                      dimension_numbers=("NHWC", "HWIO", "NHWC"))
    y = y * jax.nn.sigmoid(sp * BN_SCALE)
    return jnp.transpose(y, (0, 3, 1, 2))


if __name__ == "__main__":
    key = jax.random.PRNGKey(0)
    pkey, xkey = jax.random.split(key)
    params = init_params(pkey)
    x = jax.random.normal(xkey, (2, IN_CH, 16, 16), jnp.float32)   # NCHW, matches PyTorch input
    fwd = jax.jit(down_block_forward)
    out = jax.block_until_ready(fwd(x, params))
    ref = jax.block_until_ready(reference(x, params))
    assert out.shape == (2, OUT_CH, 15, 15), out.shape
    err = float(jnp.max(jnp.abs(out - ref)))
    assert jnp.allclose(out, ref, atol=5e-4, rtol=5e-4), err
    print("KERNEL_OK")
</pallas_src>

<mosaic_0001>
module attributes {stable_mosaic.version = 11 : i64} {
  func.func @kernel(%arg0: i32, %arg1: memref<1x4x324xf32, #tpu.memory_space<vmem>>, %arg2: memref<8x36xf32, #tpu.memory_space<vmem>>, %arg3: memref<8x1xf32, #tpu.memory_space<vmem>>, %arg4: memref<4x8xf32, #tpu.memory_space<vmem>>, %arg5: memref<4x1xf32, #tpu.memory_space<vmem>>, %arg6: memref<8x4xf32, #tpu.memory_space<vmem>>, %arg7: memref<8x1xf32, #tpu.memory_space<vmem>>, %arg8: memref<2x49xf32, #tpu.memory_space<vmem>>, %arg9: memref<1x267xf32, #tpu.memory_space<vmem>>, %arg10: memref<1x8x270xf32, #tpu.memory_space<vmem>>) attributes {dimension_semantics = [#tpu.dimension_semantics<parallel>], iteration_bounds = array<i64: 2>, scalar_prefetch = 0 : i64, scratch_operands = 0 : i64, tpu.core_type = #tpu.core_type<tc>, window_params = [{transform_indices = @transform_0, window_bounds = array<i64: 1, 4, 324>}, {pipeline_mode = #tpu.pipeline_mode<synchronous>, transform_indices = @transform_1, window_bounds = array<i64: 8, 36>}, {pipeline_mode = #tpu.pipeline_mode<synchronous>, transform_indices = @transform_2, window_bounds = array<i64: 8, 1>}, {pipeline_mode = #tpu.pipeline_mode<synchronous>, transform_indices = @transform_3, window_bounds = array<i64: 4, 8>}, {pipeline_mode = #tpu.pipeline_mode<synchronous>, transform_indices = @transform_4, window_bounds = array<i64: 4, 1>}, {pipeline_mode = #tpu.pipeline_mode<synchronous>, transform_indices = @transform_5, window_bounds = array<i64: 8, 4>}, {pipeline_mode = #tpu.pipeline_mode<synchronous>, transform_indices = @transform_6, window_bounds = array<i64: 8, 1>}, {pipeline_mode = #tpu.pipeline_mode<synchronous>, transform_indices = @transform_7, window_bounds = array<i64: 2, 49>}, {pipeline_mode = #tpu.pipeline_mode<synchronous>, transform_indices = @transform_8, window_bounds = array<i64: 1, 267>}, {transform_indices = @transform_9, window_bounds = array<i64: 1, 8, 270>}]} {
    %c0 = arith.constant 0 : index
    %c0_0 = arith.constant 0 : index
    %0 = vector.load %arg9[%c0, %c0_0] : memref<1x267xf32, #tpu.memory_space<vmem>>, vector<1x267xf32>
    %c0_1 = arith.constant 0 : index
    %c0_2 = arith.constant 0 : index
    %c0_3 = arith.constant 0 : index
    %1 = vector.load %arg1[%c0_1, %c0_2, %c0_3] : memref<1x4x324xf32, #tpu.memory_space<vmem>>, vector<1x4x324xf32>
    %2 = vector.shape_cast %1 : vector<1x4x324xf32> to vector<4x324xf32>
    %cst = arith.constant 0.000000e+00 : f32
    %3 = vector.broadcast %cst : f32 to vector<8x286xf32>
    %4 = vector.extract_strided_slice %2 {offsets = [0, 0], sizes = [4, 286], strides = [1, 1]} : vector<4x324xf32> to vector<4x286xf32>
    %c0_4 = arith.constant 0 : index
    %c0_5 = arith.constant 0 : index
    %5 = vector.load %arg2[%c0_4, %c0_5] : memref<8x36xf32, #tpu.memory_space<vmem>>, vector<8x4xf32>
    %cst_6 = arith.constant dense<0.000000e+00> : vector<8x286xf32>
    %6 = tpu.matmul %5, %4, %cst_6 {dimension_numbers = #tpu.dot_dimension_numbers<[1], [0], [0], [1], [0, 0, 1, 1], [], []>} : vector<8x4xf32>, vector<4x286xf32>, vector<8x286xf32> -> vector<8x286xf32>
    %7 = arith.addf %3, %6 : vector<8x286xf32>
    %8 = vector.extract_strided_slice %2 {offsets = [0, 1], sizes = [4, 286], strides = [1, 1]} : vector<4x324xf32> to vector<4x286xf32>
    %c0_7 = arith.constant 0 : index
    %c4 = arith.constant 4 : index
    %9 = vector.load %arg2[%c0_7, %c4] : memref<8x36xf32, #tpu.memory_space<vmem>>, vector<8x4xf32>
    %cst_8 = arith.constant dense<0.000000e+00> : vector<8x286xf32>
    %10 = tpu.matmul %9, %8, %cst_8 {dimension_numbers = #tpu.dot_dimension_numbers<[1], [0], [0], [1], [0, 0, 1, 1], [], []>} : vector<8x4xf32>, vector<4x286xf32>, vector<8x286xf32> -> vector<8x286xf32>
    %11 = arith.addf %7, %10 : vector<8x286xf32>
    %12 = vector.extract_strided_slice %2 {offsets = [0, 2], sizes = [4, 286], strides = [1, 1]} : vector<4x324xf32> to vector<4x286xf32>
    %c0_9 = arith.constant 0 : index
    %c8 = arith.constant 8 : index
    %13 = vector.load %arg2[%c0_9, %c8] : memref<8x36xf32, #tpu.memory_space<vmem>>, vector<8x4xf32>
    %cst_10 = arith.constant dense<0.000000e+00> : vector<8x286xf32>
    %14 = tpu.matmul %13, %12, %cst_10 {dimension_numbers = #tpu.dot_dimension_numbers<[1], [0], [0], [1], [0, 0, 1, 1], [], []>} : vector<8x4xf32>, vector<4x286xf32>, vector<8x286xf32> -> vector<8x286xf32>
    %15 = arith.addf %11, %14 : vector<8x286xf32>
    %16 = vector.extract_strided_slice %2 {offsets = [0, 18], sizes = [4, 286], strides = [1, 1]} : vector<4x324xf32> to vector<4x286xf32>
    %c0_11 = arith.constant 0 : index
    %c12 = arith.constant 12 : index
    %17 = vector.load %arg2[%c0_11, %c12] : memref<8x36xf32, #tpu.memory_space<vmem>>, vector<8x4xf32>
    %cst_12 = arith.constant dense<0.000000e+00> : vector<8x286xf32>
    %18 = tpu.matmul %17, %16, %cst_12 {dimension_numbers = #tpu.dot_dimension_numbers<[1], [0], [0], [1], [0, 0, 1, 1], [], []>} : vector<8x4xf32>, vector<4x286xf32>, vector<8x286xf32> -> vector<8x286xf32>
    %19 = arith.addf %15, %18 : vector<8x286xf32>
    %20 = vector.extract_strided_slice %2 {offsets = [0, 19], sizes = [4, 286], strides = [1, 1]} : vector<4x324xf32> to vector<4x286xf32>
    %c0_13 = arith.constant 0 : index
    %c16 = arith.constant 16 : index
    %21 = vector.load %arg2[%c0_13, %c16] : memref<8x36xf32, #tpu.memory_space<vmem>>, vector<8x4xf32>
    %cst_14 = arith.constant dense<0.000000e+00> : vector<8x286xf32>
    %22 = tpu.matmul %21, %20, %cst_14 {dimension_numbers = #tpu.dot_dimension_numbers<[1], [0], [0], [1], [0, 0, 1, 1], [], []>} : vector<8x4xf32>, vector<4x286xf32>, vector<8x286xf32> -> vector<8x286xf32>
    %23 = arith.addf %19, %22 : vector<8x286xf32>
    %24 = vector.extract_strided_slice %2 {offsets = [0, 20], sizes = [4, 286], strides = [1, 1]} : vector<4x324xf32> to vector<4x286xf32>
    %c0_15 = arith.constant 0 : index
    %c20 = arith.constant 20 : index
    %25 = vector.load %arg2[%c0_15, %c20] : memref<8x36xf32, #tpu.memory_space<vmem>>, vector<8x4xf32>
    %cst_16 = arith.constant dense<0.000000e+00> : vector<8x286xf32>
    %26 = tpu.matmul %25, %24, %cst_16 {dimension_numbers = #tpu.dot_dimension_numbers<[1], [0], [0], [1], [0, 0, 1, 1], [], []>} : vector<8x4xf32>, vector<4x286xf32>, vector<8x286xf32> -> vector<8x286xf32>
    %27 = arith.addf %23, %26 : vector<8x286xf32>
    %28 = vector.extract_strided_slice %2 {offsets = [0, 36], sizes = [4, 286], strides = [1, 1]} : vector<4x324xf32> to vector<4x286xf32>
    %c0_17 = arith.constant 0 : index
    %c24 = arith.constant 24 : index
    %29 = vector.load %arg2[%c0_17, %c24] : memref<8x36xf32, #tpu.memory_space<vmem>>, vector<8x4xf32>
    %cst_18 = arith.constant dense<0.000000e+00> : vector<8x286xf32>
    %30 = tpu.matmul %29, %28, %cst_18 {dimension_numbers = #tpu.dot_dimension_numbers<[1], [0], [0], [1], [0, 0, 1, 1], [], []>} : vector<8x4xf32>, vector<4x286xf32>, vector<8x286xf32> -> vector<8x286xf32>
    %31 = arith.addf %27, %30 : vector<8x286xf32>
    %32 = vector.extract_strided_slice %2 {offsets = [0, 37], sizes = [4, 286], strides = [1, 1]} : vector<4x324xf32> to vector<4x286xf32>
    %c0_19 = arith.constant 0 : index
    %c28 = arith.constant 28 : index
    %33 = vector.load %arg2[%c0_19, %c28] : memref<8x36xf32, #tpu.memory_space<vmem>>, vector<8x4xf32>
    %cst_20 = arith.constant dense<0.000000e+00> : vector<8x286xf32>
    %34 = tpu.matmul %33, %32, %cst_20 {dimension_numbers = #tpu.dot_dimension_numbers<[1], [0], [0], [1], [0, 0, 1, 1], [], []>} : vector<8x4xf32>, vector<4x286xf32>, vector<8x286xf32> -> vector<8x286xf32>
    %35 = arith.addf %31, %34 : vector<8x286xf32>
    %36 = vector.extract_strided_slice %2 {offsets = [0, 38], sizes = [4, 286], strides = [1, 1]} : vector<4x324xf32> to vector<4x286xf32>
    %c0_21 = arith.constant 0 : index
    %c32 = arith.constant 32 : index
    %37 = vector.load %arg2[%c0_21, %c32] : memref<8x36xf32, #tpu.memory_space<vmem>>, vector<8x4xf32>
    %cst_22 = arith.constant dense<0.000000e+00> : vector<8x286xf32>
    %38 = tpu.matmul %37, %36, %cst_22 {dimension_numbers = #tpu.dot_dimension_numbers<[1], [0], [0], [1], [0, 0, 1, 1], [], []>} : vector<8x4xf32>, vector<4x286xf32>, vector<8x286xf32> -> vector<8x286xf32>
    %39 = arith.addf %35, %38 : vector<8x286xf32>
    %c0_23 = arith.constant 0 : index
    %c0_24 = arith.constant 0 : index
    %40 = vector.load %arg3[%c0_23, %c0_24] : memref<8x1xf32, #tpu.memory_space<vmem>>, vector<8x1xf32>
    %41 = vector.broadcast %40 : vector<8x1xf32> to vector<8x286xf32>
    %42 = arith.addf %39, %41 : vector<8x286xf32>
    %cst_25 = arith.constant 0.000000e+00 : f32
    %43 = vector.broadcast %cst_25 : f32 to vector<8x286xf32>
    %44 = arith.maximumf %42, %43 : vector<8x286xf32>
    %45 = vector.extract_strided_slice %44 {offsets = [0, 0], sizes = [8, 267], strides = [1, 1]} : vector<8x286xf32> to vector<8x267xf32>
    %46 = vector.extract_strided_slice %44 {offsets = [0, 1], sizes = [8, 267], strides = [1, 1]} : vector<8x286xf32> to vector<8x267xf32>
    %47 = arith.maximumf %45, %46 : vector<8x267xf32>
    %48 = vector.extract_strided_slice %44 {offsets = [0, 18], sizes = [8, 267], strides = [1, 1]} : vector<8x286xf32> to vector<8x267xf32>
    %49 = arith.maximumf %47, %48 : vector<8x267xf32>
    %50 = vector.extract_strided_slice %44 {offsets = [0, 19], sizes = [8, 267], strides = [1, 1]} : vector<8x286xf32> to vector<8x267xf32>
    %51 = arith.maximumf %49, %50 : vector<8x267xf32>
    %cst_26 = arith.constant 5.000000e-01 : f32
    %52 = vector.broadcast %cst_26 : f32 to vector<1x267xf32>
    %53 = arith.cmpf ogt, %0, %52 : vector<1x267xf32>
    %cst_27 = arith.constant -1.000000e+30 : f32
    %54 = vector.shape_cast %53 : vector<1x267xi1> to vector<1x267xi1>
    %55 = vector.broadcast %54 : vector<1x267xi1> to vector<8x267xi1>
    %56 = vector.broadcast %cst_27 : f32 to vector<8x267xf32>
    %57 = arith.select %55, %51, %56 : vector<8x267xi1>, vector<8x267xf32>
    %58 = vector.broadcast %0 : vector<1x267xf32> to vector<8x267xf32>
    %59 = arith.mulf %51, %58 : vector<8x267xf32>
    %cst_28 = arith.constant dense<0.000000e+00> : vector<8xf32>
    %60 = vector.multi_reduction <add>, %59, %cst_28 [1] : vector<8x267xf32> to vector<8xf32>
    %61 = vector.shape_cast %60 : vector<8xf32> to vector<8x1xf32>
    %cst_29 = arith.constant 0.00444444455 : f32
    %62 = vector.broadcast %cst_29 : f32 to vector<8x1xf32>
    %63 = arith.mulf %61, %62 : vector<8x1xf32>
    %cst_30 = arith.constant dense<0xFF800000> : vector<8xf32>
    %64 = vector.multi_reduction <maximumf>, %57, %cst_30 [1] : vector<8x267xf32> to vector<8xf32>
    %65 = vector.shape_cast %64 : vector<8xf32> to vector<8x1xf32>
    %66 = arith.mulf %51, %51 : vector<8x267xf32>
    %67 = vector.broadcast %0 : vector<1x267xf32> to vector<8x267xf32>
    %68 = arith.mulf %66, %67 : vector<8x267xf32>
    %cst_31 = arith.constant dense<0.000000e+00> : vector<8xf32>
    %69 = vector.multi_reduction <add>, %68, %cst_31 [1] : vector<8x267xf32> to vector<8xf32>
    %70 = vector.shape_cast %69 : vector<8xf32> to vector<8x1xf32>
    %71 = math.sqrt %70 : vector<8x1xf32>
    %72 = vector.broadcast %65 : vector<8x1xf32> to vector<8x267xf32>
    %73 = arith.subf %57, %72 : vector<8x267xf32>
    %74 = math.exp %73 : vector<8x267xf32>
    %cst_32 = arith.constant dense<0.000000e+00> : vector<8xf32>
    %75 = vector.multi_reduction <add>, %74, %cst_32 [1] : vector<8x267xf32> to vector<8xf32>
    %76 = vector.shape_cast %75 : vector<8xf32> to vector<8x1xf32>
    %77 = math.log %76 : vector<8x1xf32>
    %78 = arith.addf %65, %77 : vector<8x1xf32>
    %79 = tpu.concatenate %63, %65, %71, %78 in 1 : vector<8x1xf32>, vector<8x1xf32>, vector<8x1xf32>, vector<8x1xf32> -> vector<8x4xf32>
    %c0_33 = arith.constant 0 : index
    %c0_34 = arith.constant 0 : index
    %80 = vector.load %arg4[%c0_33, %c0_34] : memref<4x8xf32, #tpu.memory_space<vmem>>, vector<4x8xf32>
    %cst_35 = arith.constant dense<0.000000e+00> : vector<4x4xf32>
    %81 = tpu.matmul %80, %79, %cst_35 {dimension_numbers = #tpu.dot_dimension_numbers<[1], [0], [0], [1], [0, 0, 1, 1], [], []>} : vector<4x8xf32>, vector<8x4xf32>, vector<4x4xf32> -> vector<4x4xf32>
    %c0_36 = arith.constant 0 : index
    %c0_37 = arith.constant 0 : index
    %82 = vector.load %arg5[%c0_36, %c0_37] : memref<4x1xf32, #tpu.memory_space<vmem>>, vector<4x1xf32>
    %83 = vector.broadcast %82 : vector<4x1xf32> to vector<4x4xf32>
    %84 = arith.addf %81, %83 : vector<4x4xf32>
    %cst_38 = arith.constant 0.000000e+00 : f32
    %85 = vector.broadcast %cst_38 : f32 to vector<4x4xf32>
    %86 = arith.maximumf %84, %85 : vector<4x4xf32>
    %c0_39 = arith.constant 0 : index
    %c0_40 = arith.constant 0 : index
    %87 = vector.load %arg6[%c0_39, %c0_40] : memref<8x4xf32, #tpu.memory_space<vmem>>, vector<8x4xf32>
    %cst_41 = arith.constant dense<0.000000e+00> : vector<8x4xf32>
    %88 = tpu.matmul %87, %86, %cst_41 {dimension_numbers = #tpu.dot_dimension_numbers<[1], [0], [0], [1], [0, 0, 1, 1], [], []>} : vector<8x4xf32>, vector<4x4xf32>, vector<8x4xf32> -> vector<8x4xf32>
    %c0_42 = arith.constant 0 : index
    %c0_43 = arith.constant 0 : index
    %89 = vector.load %arg7[%c0_42, %c0_43] : memref<8x1xf32, #tpu.memory_space<vmem>>, vector<8x1xf32>
    %90 = vector.broadcast %89 : vector<8x1xf32> to vector<8x4xf32>
    %91 = arith.addf %88, %90 : vector<8x4xf32>
    %cst_44 = arith.constant dense<0.000000e+00> : vector<8xf32>
    %92 = vector.multi_reduction <add>, %91, %cst_44 [1] : vector<8x4xf32> to vector<8xf32>
    %93 = vector.shape_cast %92 : vector<8xf32> to vector<8x1xf32>
    %94 = arith.negf %93 : vector<8x1xf32>
    %95 = math.exp %94 : vector<8x1xf32>
    %cst_45 = arith.constant 1.000000e+00 : f32
    %96 = vector.broadcast %cst_45 : f32 to vector<8x1xf32>
    %97 = arith.addf %96, %95 : vector<8x1xf32>
    %98 = arith.divf %96, %97 : vector<8x1xf32>
    %99 = vector.broadcast %98 : vector<8x1xf32> to vector<8x267xf32>
    %100 = arith.mulf %51, %99 : vector<8x267xf32>
    %cst_46 = arith.constant dense<0xFF800000> : vector<267xf32>
    %101 = vector.multi_reduction <maximumf>, %100, %cst_46 [0] : vector<8x267xf32> to vector<267xf32>
    %102 = vector.shape_cast %101 : vector<267xf32> to vector<1x267xf32>
    %cst_47 = arith.constant dense<0.000000e+00> : vector<267xf32>
    %103 = vector.multi_reduction <add>, %100, %cst_47 [0] : vector<8x267xf32> to vector<267xf32>
    %104 = vector.shape_cast %103 : vector<267xf32> to vector<1x267xf32>
    %cst_48 = arith.constant 8.000000e+00 : f32
    %105 = vector.broadcast %cst_48 : f32 to vector<1x267xf32>
    %106 = arith.divf %104, %105 : vector<1x267xf32>
    %107 = tpu.concatenate %102, %106 in 0 : vector<1x267xf32>, vector<1x267xf32> -> vector<2x267xf32>
    %108 = vector.broadcast %0 : vector<1x267xf32> to vector<2x267xf32>
    %109 = arith.mulf %107, %108 : vector<2x267xf32>
    %cst_49 = arith.constant 0.000000e+00 : f32
    %110 = vector.broadcast %cst_49 : f32 to vector<2x57xf32>
    %111 = tpu.concatenate %110, %109, %110 in 1 : vector<2x57xf32>, vector<2x267xf32>, vector<2x57xf32> -> vector<2x381xf32>
    %cst_50 = arith.constant 0.000000e+00 : f32
    %112 = vector.broadcast %cst_50 : f32 to vector<2x267xf32>
    %c0_51 = arith.constant 0 : index
    %c0_52 = arith.constant 0 : index
    %113 = vector.load %arg8[%c0_51, %c0_52] : memref<2x49xf32, #tpu.memory_space<vmem>>, vector<2x1xf32>
    %114 = vector.extract_strided_slice %111 {offsets = [0, 0], sizes = [2, 267], strides = [1, 1]} : vector<2x381xf32> to vector<2x267xf32>
    %115 = vector.broadcast %113 : vector<2x1xf32> to vector<2x267xf32>
    %116 = arith.mulf %115, %114 : vector<2x267xf32>
    %117 = arith.addf %112, %116 : vector<2x267xf32>
    %c0_53 = arith.constant 0 : index
    %c1 = arith.constant 1 : index
    %118 = vector.load %arg8[%c0_53, %c1] : memref<2x49xf32, #tpu.memory_space<vmem>>, vector<2x1xf32>
    %119 = vector.extract_strided_slice %111 {offsets = [0, 1], sizes = [2, 267], strides = [1, 1]} : vector<2x381xf32> to vector<2x267xf32>
    %120 = vector.broadcast %118 : vector<2x1xf32> to vector<2x267xf32>
    %121 = arith.mulf %120, %119 : vector<2x267xf32>
    %122 = arith.addf %117, %121 : vector<2x267xf32>
    %c0_54 = arith.constant 0 : index
    %c2 = arith.constant 2 : index
    %123 = vector.load %arg8[%c0_54, %c2] : memref<2x49xf32, #tpu.memory_space<vmem>>, vector<2x1xf32>
    %124 = vector.extract_strided_slice %111 {offsets = [0, 2], sizes = [2, 267], strides = [1, 1]} : vector<2x381xf32> to vector<2x267xf32>
    %125 = vector.broadcast %123 : vector<2x1xf32> to vector<2x267xf32>
    %126 = arith.mulf %125, %124 : vector<2x267xf32>
    %127 = arith.addf %122, %126 : vector<2x267xf32>
    %c0_55 = arith.constant 0 : index
    %c3 = arith.constant 3 : index
    %128 = vector.load %arg8[%c0_55, %c3] : memref<2x49xf32, #tpu.memory_space<vmem>>, vector<2x1xf32>
    %129 = vector.extract_strided_slice %111 {offsets = [0, 3], sizes = [2, 267], strides = [1, 1]} : vector<2x381xf32> to vector<2x267xf32>
    %130 = vector.broadcast %128 : vector<2x1xf32> to vector<2x267xf32>
    %131 = arith.mulf %130, %129 : vector<2x267xf32>
    %132 = arith.addf %127, %131 : vector<2x267xf32>
    %c0_56 = arith.constant 0 : index
    %c4_57 = arith.constant 4 : index
    %133 = vector.load %arg8[%c0_56, %c4_57] : memref<2x49xf32, #tpu.memory_space<vmem>>, vector<2x1xf32>
    %134 = vector.extract_strided_slice %111 {offsets = [0, 4], sizes = [2, 267], strides = [1, 1]} : vector<2x381xf32> to vector<2x267xf32>
    %135 = vector.broadcast %133 : vector<2x1xf32> to vector<2x267xf32>
    %136 = arith.mulf %135, %134 : vector<2x267xf32>
    %137 = arith.addf %132, %136 : vector<2x267xf32>
    %c0_58 = arith.constant 0 : index
    %c5 = arith.constant 5 : index
    %138 = vector.load %arg8[%c0_58, %c5] : memref<2x49xf32, #tpu.memory_space<vmem>>, vector<2x1xf32>
    %139 = vector.extract_strided_slice %111 {offsets = [0, 5], sizes = [2, 267], strides = [1, 1]} : vector<2x381xf32> to vector<2x267xf32>
    %140 = vector.broadcast %138 : vector<2x1xf32> to vector<2x267xf32>
    %141 = arith.mulf %140, %139 : vector<2x267xf32>
    %142 = arith.addf %137, %141 : vector<2x267xf32>
    %c0_59 = arith.constant 0 : index
    %c6 = arith.constant 6 : index
    %143 = vector.load %arg8[%c0_59, %c6] : memref<2x49xf32, #tpu.memory_space<vmem>>, vector<2x1xf32>
    %144 = vector.extract_strided_slice %111 {offsets = [0, 6], sizes = [2, 267], strides = [1, 1]} : vector<2x381xf32> to vector<2x267xf32>
    %145 = vector.broadcast %143 : vector<2x1xf32> to vector<2x267xf32>
    %146 = arith.mulf %145, %144 : vector<2x267xf32>
    %147 = arith.addf %142, %146 : vector<2x267xf32>
    %c0_60 = arith.constant 0 : index
    %c7 = arith.constant 7 : index
    %148 = vector.load %arg8[%c0_60, %c7] : memref<2x49xf32, #tpu.memory_space<vmem>>, vector<2x1xf32>
    %149 = vector.extract_strided_slice %111 {offsets = [0, 18], sizes = [2, 267], strides = [1, 1]} : vector<2x381xf32> to vector<2x267xf32>
    %150 = vector.broadcast %148 : vector<2x1xf32> to vector<2x267xf32>
    %151 = arith.mulf %150, %149 : vector<2x267xf32>
    %152 = arith.addf %147, %151 : vector<2x267xf32>
    %c0_61 = arith.constant 0 : index
    %c8_62 = arith.constant 8 : index
    %153 = vector.load %arg8[%c0_61, %c8_62] : memref<2x49xf32, #tpu.memory_space<vmem>>, vector<2x1xf32>
    %154 = vector.extract_strided_slice %111 {offsets = [0, 19], sizes = [2, 267], strides = [1, 1]} : vector<2x381xf32> to vector<2x267xf32>
    %155 = vector.broadcast %153 : vector<2x1xf32> to vector<2x267xf32>
    %156 = arith.mulf %155, %154 : vector<2x267xf32>
    %157 = arith.addf %152, %156 : vector<2x267xf32>
    %c0_63 = arith.constant 0 : index
    %c9 = arith.constant 9 : index
    %158 = vector.load %arg8[%c0_63, %c9] : memref<2x49xf32, #tpu.memory_space<vmem>>, vector<2x1xf32>
    %159 = vector.extract_strided_slice %111 {offsets = [0, 20], sizes = [2, 267], strides = [1, 1]} : vector<2x381xf32> to vector<2x267xf32>
    %160 = vector.broadcast %158 : vector<2x1xf32> to vector<2x267xf32>
    %161 = arith.mulf %160, %159 : vector<2x267xf32>
    %162 = arith.addf %157, %161 : vector<2x267xf32>
    %c0_64 = arith.constant 0 : index
    %c10 = arith.constant 10 : index
    %163 = vector.load %arg8[%c0_64, %c10] : memref<2x49xf32, #tpu.memory_space<vmem>>, vector<2x1xf32>
    %164 = vector.extract_strided_slice %111 {offsets = [0, 21], sizes = [2, 267], strides = [1, 1]} : vector<2x381xf32> to vector<2x267xf32>
    %165 = vector.broadcast %163 : vector<2x1xf32> to vector<2x267xf32>
    %166 = arith.mulf %165, %164 : vector<2x267xf32>
    %167 = arith.addf %162, %166 : vector<2x267xf32>
    %c0_65 = arith.constant 0 : index
    %c11 = arith.constant 11 : index
    %168 = vector.load %arg8[%c0_65, %c11] : memref<2x49xf32, #tpu.memory_space<vmem>>, vector<2x1xf32>
    %169 = vector.extract_strided_slice %111 {offsets = [0, 22], sizes = [2, 267], strides = [1, 1]} : vector<2x381xf32> to vector<2x267xf32>
    %170 = vector.broadcast %168 : vector<2x1xf32> to vector<2x267xf32>
    %171 = arith.mulf %170, %169 : vector<2x267xf32>
    %172 = arith.addf %167, %171 : vector<2x267xf32>
    %c0_66 = arith.constant 0 : index
    %c12_67 = arith.constant 12 : index
    %173 = vector.load %arg8[%c0_66, %c12_67] : memref<2x49xf32, #tpu.memory_space<vmem>>, vector<2x1xf32>
    %174 = vector.extract_strided_slice %111 {offsets = [0, 23], sizes = [2, 267], strides = [1, 1]} : vector<2x381xf32> to vector<2x267xf32>
    %175 = vector.broadcast %173 : vector<2x1xf32> to vector<2x267xf32>
    %176 = arith.mulf %175, %174 : vector<2x267xf32>
    %177 = arith.addf %172, %176 : vector<2x267xf32>
    %c0_68 = arith.constant 0 : index
    %c13 = arith.constant 13 : index
    %178 = vector.load %arg8[%c0_68, %c13] : memref<2x49xf32, #tpu.memory_space<vmem>>, vector<2x1xf32>
    %179 = vector.extract_strided_slice %111 {offsets = [0, 24], sizes = [2, 267], strides = [1, 1]} : vector<2x381xf32> to vector<2x267xf32>
    %180 = vector.broadcast %178 : vector<2x1xf32> to vector<2x267xf32>
    %181 = arith.mulf %180, %179 : vector<2x267xf32>
    %182 = arith.addf %177, %181 : vector<2x267xf32>
    %c0_69 = arith.constant 0 : index
    %c14 = arith.constant 14 : index
    %183 = vector.load %arg8[%c0_69, %c14] : memref<2x49xf32, #tpu.memory_space<vmem>>, vector<2x1xf32>
    %184 = vector.extract_strided_slice %111 {offsets = [0, 36], sizes = [2, 267], strides = [1, 1]} : vector<2x381xf32> to vector<2x267xf32>
    %185 = vector.broadcast %183 : vector<2x1xf32> to vector<2x267xf32>
    %186 = arith.mulf %185, %184 : vector<2x267xf32>
    %187 = arith.addf %182, %186 : vector<2x267xf32>
    %c0_70 = arith.constant 0 : index
    %c15 = arith.constant 15 : index
    %188 = vector.load %arg8[%c0_70, %c15] : memref<2x49xf32, #tpu.memory_space<vmem>>, vector<2x1xf32>
    %189 = vector.extract_strided_slice %111 {offsets = [0, 37], sizes = [2, 267], strides = [1, 1]} : vector<2x381xf32> to vector<2x267xf32>
    %190 = vector.broadcast %188 : vector<2x1xf32> to vector<2x267xf32>
    %191 = arith.mulf %190, %189 : vector<2x267xf32>
    %192 = arith.addf %187, %191 : vector<2x267xf32>
    %c0_71 = arith.constant 0 : index
    %c16_72 = arith.constant 16 : index
    %193 = vector.load %arg8[%c0_71, %c16_72] : memref<2x49xf32, #tpu.memory_space<vmem>>, vector<2x1xf32>
    %194 = vector.extract_strided_slice %111 {offsets = [0, 38], sizes = [2, 267], strides = [1, 1]} : vector<2x381xf32> to vector<2x267xf32>
    %195 = vector.broadcast %193 : vector<2x1xf32> to vector<2x267xf32>
    %196 = arith.mulf %195, %194 : vector<2x267xf32>
    %197 = arith.addf %192, %196 : vector<2x267xf32>
    %c0_73 = arith.constant 0 : index
    %c17 = arith.constant 17 : index
    %198 = vector.load %arg8[%c0_73, %c17] : memref<2x49xf32, #tpu.memory_space<vmem>>, vector<2x1xf32>
    %199 = vector.extract_strided_slice %111 {offsets = [0, 39], sizes = [2, 267], strides = [1, 1]} : vector<2x381xf32> to vector<2x267xf32>
    %200 = vector.broadcast %198 : vector<2x1xf32> to vector<2x267xf32>
    %201 = arith.mulf %200, %199 : vector<2x267xf32>
    %202 = arith.addf %197, %201 : vector<2x267xf32>
    %c0_74 = arith.constant 0 : index
    %c18 = arith.constant 18 : index
    %203 = vector.load %arg8[%c0_74, %c18] : memref<2x49xf32, #tpu.memory_space<vmem>>, vector<2x1xf32>
    %204 = vector.extract_strided_slice %111 {offsets = [0, 40], sizes = [2, 267], strides = [1, 1]} : vector<2x381xf32> to vector<2x267xf32>
    %205 = vector.broadcast %203 : vector<2x1xf32> to vector<2x267xf32>
    %206 = arith.mulf %205, %204 : vector<2x267xf32>
    %207 = arith.addf %202, %206 : vector<2x267xf32>
    %c0_75 = arith.constant 0 : index
    %c19 = arith.constant 19 : index
    %208 = vector.load %arg8[%c0_75, %c19] : memref<2x49xf32, #tpu.memory_space<vmem>>, vector<2x1xf32>
    %209 = vector.extract_strided_slice %111 {offsets = [0, 41], sizes = [2, 267], strides = [1, 1]} : vector<2x381xf32> to vector<2x267xf32>
    %210 = vector.broadcast %208 : vector<2x1xf32> to vector<2x267xf32>
    %211 = arith.mulf %210, %209 : vector<2x267xf32>
    %212 = arith.addf %207, %211 : vector<2x267xf32>
    %c0_76 = arith.constant 0 : index
    %c20_77 = arith.constant 20 : index
    %213 = vector.load %arg8[%c0_76, %c20_77] : memref<2x49xf32, #tpu.memory_space<vmem>>, vector<2x1xf32>
    %214 = vector.extract_strided_slice %111 {offsets = [0, 42], sizes = [2, 267], strides = [1, 1]} : vector<2x381xf32> to vector<2x267xf32>
    %215 = vector.broadcast %213 : vector<2x1xf32> to vector<2x267xf32>
    %216 = arith.mulf %215, %214 : vector<2x267xf32>
    %217 = arith.addf %212, %216 : vector<2x267xf32>
    %c0_78 = arith.constant 0 : index
    %c21 = arith.constant 21 : index
    %218 = vector.load %arg8[%c0_78, %c21] : memref<2x49xf32, #tpu.memory_space<vmem>>, vector<2x1xf32>
    %219 = vector.extract_strided_slice %111 {offsets = [0, 54], sizes = [2, 267], strides = [1, 1]} : vector<2x381xf32> to vector<2x267xf32>
    %220 = vector.broadcast %218 : vector<2x1xf32> to vector<2x267xf32>
    %221 = arith.mulf %220, %219 : vector<2x267xf32>
    %222 = arith.addf %217, %221 : vector<2x267xf32>
    %c0_79 = arith.constant 0 : index
    %c22 = arith.constant 22 : index
    %223 = vector.load %arg8[%c0_79, %c22] : memref<2x49xf32, #tpu.memory_space<vmem>>, vector<2x1xf32>
    %224 = vector.extract_strided_slice %111 {offsets = [0, 55], sizes = [2, 267], strides = [1, 1]} : vector<2x381xf32> to vector<2x267xf32>
    %225 = vector.broadcast %223 : vector<2x1xf32> to vector<2x267xf32>
    %226 = arith.mulf %225, %224 : vector<2x267xf32>
    %227 = arith.addf %222, %226 : vector<2x267xf32>
    %c0_80 = arith.constant 0 : index
    %c23 = arith.constant 23 : index
    %228 = vector.load %arg8[%c0_80, %c23] : memref<2x49xf32, #tpu.memory_space<vmem>>, vector<2x1xf32>
    %229 = vector.extract_strided_slice %111 {offsets = [0, 56], sizes = [2, 267], strides = [1, 1]} : vector<2x381xf32> to vector<2x267xf32>
    %230 = vector.broadcast %228 : vector<2x1xf32> to vector<2x267xf32>
    %231 = arith.mulf %230, %229 : vector<2x267xf32>
    %232 = arith.addf %227, %231 : vector<2x267xf32>
    %c0_81 = arith.constant 0 : index
    %c24_82 = arith.constant 24 : index
    %233 = vector.load %arg8[%c0_81, %c24_82] : memref<2x49xf32, #tpu.memory_space<vmem>>, vector<2x1xf32>
    %234 = vector.extract_strided_slice %111 {offsets = [0, 57], sizes = [2, 267], strides = [1, 1]} : vector<2x381xf32> to vector<2x267xf32>
    %235 = vector.broadcast %233 : vector<2x1xf32> to vector<2x267xf32>
    %236 = arith.mulf %235, %234 : vector<2x267xf32>
    %237 = arith.addf %232, %236 : vector<2x267xf32>
    %c0_83 = arith.constant 0 : index
    %c25 = arith.constant 25 : index
    %238 = vector.load %arg8[%c0_83, %c25] : memref<2x49xf32, #tpu.memory_space<vmem>>, vector<2x1xf32>
    %239 = vector.extract_strided_slice %111 {offsets = [0, 58], sizes = [2, 267], strides = [1, 1]} : vector<2x381xf32> to vector<2x267xf32>
    %240 = vector.broadcast %238 : vector<2x1xf32> to vector<2x267xf32>
    %241 = arith.mulf %240, %239 : vector<2x267xf32>
    %242 = arith.addf %237, %241 : vector<2x267xf32>
    %c0_84 = arith.constant 0 : index
    %c26 = arith.constant 26 : index
    %243 = vector.load %arg8[%c0_84, %c26] : memref<2x49xf32, #tpu.memory_space<vmem>>, vector<2x1xf32>
    %244 = vector.extract_strided_slice %111 {offsets = [0, 59], sizes = [2, 267], strides = [1, 1]} : vector<2x381xf32> to vector<2x267xf32>
    %245 = vector.broadcast %243 : vector<2x1xf32> to vector<2x267xf32>
    %246 = arith.mulf %245, %244 : vector<2x267xf32>
    %247 = arith.addf %242, %246 : vector<2x267xf32>
    %c0_85 = arith.constant 0 : index
    %c27 = arith.constant 27 : index
    %248 = vector.load %arg8[%c0_85, %c27] : memref<2x49xf32, #tpu.memory_space<vmem>>, vector<2x1xf32>
    %249 = vector.extract_strided_slice %111 {offsets = [0, 60], sizes = [2, 267], strides = [1, 1]} : vector<2x381xf32> to vector<2x267xf32>
    %250 = vector.broadcast %248 : vector<2x1xf32> to vector<2x267xf32>
    %251 = arith.mulf %250, %249 : vector<2x267xf32>
    %252 = arith.addf %247, %251 : vector<2x267xf32>
    %c0_86 = arith.constant 0 : index
    %c28_87 = arith.constant 28 : index
    %253 = vector.load %arg8[%c0_86, %c28_87] : memref<2x49xf32, #tpu.memory_space<vmem>>, vector<2x1xf32>
    %254 = vector.extract_strided_slice %111 {offsets = [0, 72], sizes = [2, 267], strides = [1, 1]} : vector<2x381xf32> to vector<2x267xf32>
    %255 = vector.broadcast %253 : vector<2x1xf32> to vector<2x267xf32>
    %256 = arith.mulf %255, %254 : vector<2x267xf32>
    %257 = arith.addf %252, %256 : vector<2x267xf32>
    %c0_88 = arith.constant 0 : index
    %c29 = arith.constant 29 : index
    %258 = vector.load %arg8[%c0_88, %c29] : memref<2x49xf32, #tpu.memory_space<vmem>>, vector<2x1xf32>
    %259 = vector.extract_strided_slice %111 {offsets = [0, 73], sizes = [2, 267], strides = [1, 1]} : vector<2x381xf32> to vector<2x267xf32>
    %260 = vector.broadcast %258 : vector<2x1xf32> to vector<2x267xf32>
    %261 = arith.mulf %260, %259 : vector<2x267xf32>
    %262 = arith.addf %257, %261 : vector<2x267xf32>
    %c0_89 = arith.constant 0 : index
    %c30 = arith.constant 30 : index
    %263 = vector.load %arg8[%c0_89, %c30] : memref<2x49xf32, #tpu.memory_space<vmem>>, vector<2x1xf32>
    %264 = vector.extract_strided_slice %111 {offsets = [0, 74], sizes = [2, 267], strides = [1, 1]} : vector<2x381xf32> to vector<2x267xf32>
    %265 = vector.broadcast %263 : vector<2x1xf32> to vector<2x267xf32>
    %266 = arith.mulf %265, %264 : vector<2x267xf32>
    %267 = arith.addf %262, %266 : vector<2x267xf32>
    %c0_90 = arith.constant 0 : index
    %c31 = arith.constant 31 : index
    %268 = vector.load %arg8[%c0_90, %c31] : memref<2x49xf32, #tpu.memory_space<vmem>>, vector<2x1xf32>
    %269 = vector.extract_strided_slice %111 {offsets = [0, 75], sizes = [2, 267], strides = [1, 1]} : vector<2x381xf32> to vector<2x267xf32>
    %270 = vector.broadcast %268 : vector<2x1xf32> to vector<2x267xf32>
    %271 = arith.mulf %270, %269 : vector<2x267xf32>
    %272 = arith.addf %267, %271 : vector<2x267xf32>
    %c0_91 = arith.constant 0 : index
    %c32_92 = arith.constant 32 : index
    %273 = vector.load %arg8[%c0_91, %c32_92] : memref<2x49xf32, #tpu.memory_space<vmem>>, vector<2x1xf32>
    %274 = vector.extract_strided_slice %111 {offsets = [0, 76], sizes = [2, 267], strides = [1, 1]} : vector<2x381xf32> to vector<2x267xf32>
    %275 = vector.broadcast %273 : vector<2x1xf32> to vector<2x267xf32>
    %276 = arith.mulf %275, %274 : vector<2x267xf32>
    %277 = arith.addf %272, %276 : vector<2x267xf32>
    %c0_93 = arith.constant 0 : index
    %c33 = arith.constant 33 : index
    %278 = vector.load %arg8[%c0_93, %c33] : memref<2x49xf32, #tpu.memory_space<vmem>>, vector<2x1xf32>
    %279 = vector.extract_strided_slice %111 {offsets = [0, 77], sizes = [2, 267], strides = [1, 1]} : vector<2x381xf32> to vector<2x267xf32>
    %280 = vector.broadcast %278 : vector<2x1xf32> to vector<2x267xf32>
    %281 = arith.mulf %280, %279 : vector<2x267xf32>
    %282 = arith.addf %277, %281 : vector<2x267xf32>
    %c0_94 = arith.constant 0 : index
    %c34 = arith.constant 34 : index
    %283 = vector.load %arg8[%c0_94, %c34] : memref<2x49xf32, #tpu.memory_space<vmem>>, vector<2x1xf32>
    %284 = vector.extract_strided_slice %111 {offsets = [0, 78], sizes = [2, 267], strides = [1, 1]} : vector<2x381xf32> to vector<2x267xf32>
    %285 = vector.broadcast %283 : vector<2x1xf32> to vector<2x267xf32>
    %286 = arith.mulf %285, %284 : vector<2x267xf32>
    %287 = arith.addf %282, %286 : vector<2x267xf32>
    %c0_95 = arith.constant 0 : index
    %c35 = arith.constant 35 : index
    %288 = vector.load %arg8[%c0_95, %c35] : memref<2x49xf32, #tpu.memory_space<vmem>>, vector<2x1xf32>
    %289 = vector.extract_strided_slice %111 {offsets = [0, 90], sizes = [2, 267], strides = [1, 1]} : vector<2x381xf32> to vector<2x267xf32>
    %290 = vector.broadcast %288 : vector<2x1xf32> to vector<2x267xf32>
    %291 = arith.mulf %290, %289 : vector<2x267xf32>
    %292 = arith.addf %287, %291 : vector<2x267xf32>
    %c0_96 = arith.constant 0 : index
    %c36 = arith.constant 36 : index
    %293 = vector.load %arg8[%c0_96, %c36] : memref<2x49xf32, #tpu.memory_space<vmem>>, vector<2x1xf32>
    %294 = vector.extract_strided_slice %111 {offsets = [0, 91], sizes = [2, 267], strides = [1, 1]} : vector<2x381xf32> to vector<2x267xf32>
    %295 = vector.broadcast %293 : vector<2x1xf32> to vector<2x267xf32>
    %296 = arith.mulf %295, %294 : vector<2x267xf32>
    %297 = arith.addf %292, %296 : vector<2x267xf32>
    %c0_97 = arith.constant 0 : index
    %c37 = arith.constant 37 : index
    %298 = vector.load %arg8[%c0_97, %c37] : memref<2x49xf32, #tpu.memory_space<vmem>>, vector<2x1xf32>
    %299 = vector.extract_strided_slice %111 {offsets = [0, 92], sizes = [2, 267], strides = [1, 1]} : vector<2x381xf32> to vector<2x267xf32>
    %300 = vector.broadcast %298 : vector<2x1xf32> to vector<2x267xf32>
    %301 = arith.mulf %300, %299 : vector<2x267xf32>
    %302 = arith.addf %297, %301 : vector<2x267xf32>
    %c0_98 = arith.constant 0 : index
    %c38 = arith.constant 38 : index
    %303 = vector.load %arg8[%c0_98, %c38] : memref<2x49xf32, #tpu.memory_space<vmem>>, vector<2x1xf32>
    %304 = vector.extract_strided_slice %111 {offsets = [0, 93], sizes = [2, 267], strides = [1, 1]} : vector<2x381xf32> to vector<2x267xf32>
    %305 = vector.broadcast %303 : vector<2x1xf32> to vector<2x267xf32>
    %306 = arith.mulf %305, %304 : vector<2x267xf32>
    %307 = arith.addf %302, %306 : vector<2x267xf32>
    %c0_99 = arith.constant 0 : index
    %c39 = arith.constant 39 : index
    %308 = vector.load %arg8[%c0_99, %c39] : memref<2x49xf32, #tpu.memory_space<vmem>>, vector<2x1xf32>
    %309 = vector.extract_strided_slice %111 {offsets = [0, 94], sizes = [2, 267], strides = [1, 1]} : vector<2x381xf32> to vector<2x267xf32>
    %310 = vector.broadcast %308 : vector<2x1xf32> to vector<2x267xf32>
    %311 = arith.mulf %310, %309 : vector<2x267xf32>
    %312 = arith.addf %307, %311 : vector<2x267xf32>
    %c0_100 = arith.constant 0 : index
    %c40 = arith.constant 40 : index
    %313 = vector.load %arg8[%c0_100, %c40] : memref<2x49xf32, #tpu.memory_space<vmem>>, vector<2x1xf32>
    %314 = vector.extract_strided_slice %111 {offsets = [0, 95], sizes = [2, 267], strides = [1, 1]} : vector<2x381xf32> to vector<2x267xf32>
    %315 = vector.broadcast %313 : vector<2x1xf32> to vector<2x267xf32>
    %316 = arith.mulf %315, %314 : vector<2x267xf32>
    %317 = arith.addf %312, %316 : vector<2x267xf32>
    %c0_101 = arith.constant 0 : index
    %c41 = arith.constant 41 : index
    %318 = vector.load %arg8[%c0_101, %c41] : memref<2x49xf32, #tpu.memory_space<vmem>>, vector<2x1xf32>
    %319 = vector.extract_strided_slice %111 {offsets = [0, 96], sizes = [2, 267], strides = [1, 1]} : vector<2x381xf32> to vector<2x267xf32>
    %320 = vector.broadcast %318 : vector<2x1xf32> to vector<2x267xf32>
    %321 = arith.mulf %320, %319 : vector<2x267xf32>
    %322 = arith.addf %317, %321 : vector<2x267xf32>
    %c0_102 = arith.constant 0 : index
    %c42 = arith.constant 42 : index
    %323 = vector.load %arg8[%c0_102, %c42] : memref<2x49xf32, #tpu.memory_space<vmem>>, vector<2x1xf32>
    %324 = vector.extract_strided_slice %111 {offsets = [0, 108], sizes = [2, 267], strides = [1, 1]} : vector<2x381xf32> to vector<2x267xf32>
    %325 = vector.broadcast %323 : vector<2x1xf32> to vector<2x267xf32>
    %326 = arith.mulf %325, %324 : vector<2x267xf32>
    %327 = arith.addf %322, %326 : vector<2x267xf32>
    %c0_103 = arith.constant 0 : index
    %c43 = arith.constant 43 : index
    %328 = vector.load %arg8[%c0_103, %c43] : memref<2x49xf32, #tpu.memory_space<vmem>>, vector<2x1xf32>
    %329 = vector.extract_strided_slice %111 {offsets = [0, 109], sizes = [2, 267], strides = [1, 1]} : vector<2x381xf32> to vector<2x267xf32>
    %330 = vector.broadcast %328 : vector<2x1xf32> to vector<2x267xf32>
    %331 = arith.mulf %330, %329 : vector<2x267xf32>
    %332 = arith.addf %327, %331 : vector<2x267xf32>
    %c0_104 = arith.constant 0 : index
    %c44 = arith.constant 44 : index
    %333 = vector.load %arg8[%c0_104, %c44] : memref<2x49xf32, #tpu.memory_space<vmem>>, vector<2x1xf32>
    %334 = vector.extract_strided_slice %111 {offsets = [0, 110], sizes = [2, 267], strides = [1, 1]} : vector<2x381xf32> to vector<2x267xf32>
    %335 = vector.broadcast %333 : vector<2x1xf32> to vector<2x267xf32>
    %336 = arith.mulf %335, %334 : vector<2x267xf32>
    %337 = arith.addf %332, %336 : vector<2x267xf32>
    %c0_105 = arith.constant 0 : index
    %c45 = arith.constant 45 : index
    %338 = vector.load %arg8[%c0_105, %c45] : memref<2x49xf32, #tpu.memory_space<vmem>>, vector<2x1xf32>
    %339 = vector.extract_strided_slice %111 {offsets = [0, 111], sizes = [2, 267], strides = [1, 1]} : vector<2x381xf32> to vector<2x267xf32>
    %340 = vector.broadcast %338 : vector<2x1xf32> to vector<2x267xf32>
    %341 = arith.mulf %340, %339 : vector<2x267xf32>
    %342 = arith.addf %337, %341 : vector<2x267xf32>
    %c0_106 = arith.constant 0 : index
    %c46 = arith.constant 46 : index
    %343 = vector.load %arg8[%c0_106, %c46] : memref<2x49xf32, #tpu.memory_space<vmem>>, vector<2x1xf32>
    %344 = vector.extract_strided_slice %111 {offsets = [0, 112], sizes = [2, 267], strides = [1, 1]} : vector<2x381xf32> to vector<2x267xf32>
    %345 = vector.broadcast %343 : vector<2x1xf32> to vector<2x267xf32>
    %346 = arith.mulf %345, %344 : vector<2x267xf32>
    %347 = arith.addf %342, %346 : vector<2x267xf32>
    %c0_107 = arith.constant 0 : index
    %c47 = arith.constant 47 : index
    %348 = vector.load %arg8[%c0_107, %c47] : memref<2x49xf32, #tpu.memory_space<vmem>>, vector<2x1xf32>
    %349 = vector.extract_strided_slice %111 {offsets = [0, 113], sizes = [2, 267], strides = [1, 1]} : vector<2x381xf32> to vector<2x267xf32>
    %350 = vector.broadcast %348 : vector<2x1xf32> to vector<2x267xf32>
    %351 = arith.mulf %350, %349 : vector<2x267xf32>
    %352 = arith.addf %347, %351 : vector<2x267xf32>
    %c0_108 = arith.constant 0 : index
    %c48 = arith.constant 48 : index
    %353 = vector.load %arg8[%c0_108, %c48] : memref<2x49xf32, #tpu.memory_space<vmem>>, vector<2x1xf32>
    %354 = vector.extract_strided_slice %111 {offsets = [0, 114], sizes = [2, 267], strides = [1, 1]} : vector<2x381xf32> to vector<2x267xf32>
    %355 = vector.broadcast %353 : vector<2x1xf32> to vector<2x267xf32>
    %356 = arith.mulf %355, %354 : vector<2x267xf32>
    %357 = arith.addf %352, %356 : vector<2x267xf32>
    %cst_109 = arith.constant dense<0.000000e+00> : vector<267xf32>
    %358 = vector.multi_reduction <add>, %357, %cst_109 [0] : vector<2x267xf32> to vector<267xf32>
    %359 = vector.shape_cast %358 : vector<267xf32> to vector<1x267xf32>
    %cst_110 = arith.constant 0.999994993 : f32
    %360 = vector.broadcast %cst_110 : f32 to vector<1x267xf32>
    %361 = arith.mulf %359, %360 : vector<1x267xf32>
    %362 = arith.negf %361 : vector<1x267xf32>
    %363 = math.exp %362 : vector<1x267xf32>
    %cst_111 = arith.constant 1.000000e+00 : f32
    %364 = vector.broadcast %cst_111 : f32 to vector<1x267xf32>
    %365 = arith.addf %364, %363 : vector<1x267xf32>
    %366 = arith.divf %364, %365 : vector<1x267xf32>
    %367 = vector.broadcast %366 : vector<1x267xf32> to vector<8x267xf32>
    %368 = arith.mulf %100, %367 : vector<8x267xf32>
    %cst_112 = arith.constant 0.000000e+00 : f32
    %369 = vector.broadcast %cst_112 : f32 to vector<8x3xf32>
    %370 = tpu.concatenate %368, %369 in 1 : vector<8x267xf32>, vector<8x3xf32> -> vector<8x270xf32>
    %c0_113 = arith.constant 0 : index
    %c0_114 = arith.constant 0 : index
    %c0_115 = arith.constant 0 : index
    %371 = vector.load %arg10[%c0_113, %c0_114, %c0_115] : memref<1x8x270xf32, #tpu.memory_space<vmem>>, vector<1x8x270xf32>
    %372 = vector.shape_cast %371 : vector<1x8x270xf32> to vector<8x270xf32>
    %373 = vector.shape_cast %370 : vector<8x270xf32> to vector<1x8x270xf32>
    tpu.vector_store %arg10[%c0_113, %c0_114, %c0_115], %373 {strides = array<i32>} : memref<1x8x270xf32, #tpu.memory_space<vmem>>, vector<1x8x270xf32>,
    return
  }
  func.func @transform_0(%arg0: i32) -> (i32, i32, i32) {
    %c0_i32 = arith.constant 0 : i32
    %c0_i32_0 = arith.constant 0 : i32
    %c0_i32_1 = arith.constant 0 : i32
    return %arg0, %c0_i32, %c0_i32_0 : i32, i32, i32
  }
  func.func @transform_1(%arg0: i32) -> (i32, i32) {
    %c0_i32 = arith.constant 0 : i32
    %c0_i32_0 = arith.constant 0 : i32
    %c0_i32_1 = arith.constant 0 : i32
    return %c0_i32, %c0_i32_0 : i32, i32
  }
  func.func @transform_2(%arg0: i32) -> (i32, i32) {
    %c0_i32 = arith.constant 0 : i32
    %c0_i32_0 = arith.constant 0 : i32
    %c0_i32_1 = arith.constant 0 : i32
    return %c0_i32, %c0_i32_0 : i32, i32
  }
  func.func @transform_3(%arg0: i32) -> (i32, i32) {
    %c0_i32 = arith.constant 0 : i32
    %c0_i32_0 = arith.constant 0 : i32
    %c0_i32_1 = arith.constant 0 : i32
    return %c0_i32, %c0_i32_0 : i32, i32
  }
  func.func @transform_4(%arg0: i32) -> (i32, i32) {
    %c0_i32 = arith.constant 0 : i32
    %c0_i32_0 = arith.constant 0 : i32
    %c0_i32_1 = arith.constant 0 : i32
    return %c0_i32, %c0_i32_0 : i32, i32
  }
  func.func @transform_5(%arg0: i32) -> (i32, i32) {
    %c0_i32 = arith.constant 0 : i32
    %c0_i32_0 = arith.constant 0 : i32
    %c0_i32_1 = arith.constant 0 : i32
    return %c0_i32, %c0_i32_0 : i32, i32
  }
  func.func @transform_6(%arg0: i32) -> (i32, i32) {
    %c0_i32 = arith.constant 0 : i32
    %c0_i32_0 = arith.constant 0 : i32
    %c0_i32_1 = arith.constant 0 : i32
    return %c0_i32, %c0_i32_0 : i32, i32
  }
  func.func @transform_7(%arg0: i32) -> (i32, i32) {
    %c0_i32 = arith.constant 0 : i32
    %c0_i32_0 = arith.constant 0 : i32
    %c0_i32_1 = arith.constant 0 : i32
    return %c0_i32, %c0_i32_0 : i32, i32
  }
  func.func @transform_8(%arg0: i32) -> (i32, i32) {
    %c0_i32 = arith.constant 0 : i32
    %c0_i32_0 = arith.constant 0 : i32
    %c0_i32_1 = arith.constant 0 : i32
    return %c0_i32, %c0_i32_0 : i32, i32
  }
  func.func @transform_9(%arg0: i32) -> (i32, i32, i32) {
    %c0_i32 = arith.constant 0 : i32
    %c0_i32_0 = arith.constant 0 : i32
    %c0_i32_1 = arith.constant 0 : i32
    return %arg0, %c0_i32, %c0_i32_0 : i32, i32, i32
  }
}

</mosaic_0001>

<llo_original>
// kernel: down_block_forward.1
$region0: #{down_block_forward.1}
  #allocation0 [shape = 'u32[]', space=smem, size = 0x4, offset = 0x4, fixed_abs, tag = 'smem constant byte address 0x4 - core index']
  #allocation1 [shape = 'u32[144,128]{1,0:T(1,128)}', space=vmem, size = 0x12000, scoped, tag = 'internal scratch']
  %s0 = inlined_call_operand.vmem [shape: f32[2,4,324], index: 0, kind: input, shape index: {}]
  %s1 = inlined_call_operand.vmem [shape: f32[8,36], index: 1, kind: input, shape index: {}]
  %s2 = inlined_call_operand.vmem [shape: f32[8,1], index: 2, kind: input, shape index: {}]
  %s3 = inlined_call_operand.vmem [shape: f32[4,8], index: 3, kind: input, shape index: {}]
  %s4 = inlined_call_operand.vmem [shape: f32[4,1], index: 4, kind: input, shape index: {}]
  %s5 = inlined_call_operand.vmem [shape: f32[8,4], index: 5, kind: input, shape index: {}]
  %s6 = inlined_call_operand.vmem [shape: f32[8,1], index: 6, kind: input, shape index: {}]
  %s7 = inlined_call_operand.vmem [shape: f32[2,49], index: 7, kind: input, shape index: {}]
  %s8 = inlined_call_operand.vmem [shape: f32[1,267], index: 8, kind: input, shape index: {}]
  %s9 = inlined_call_operand.vmem [shape: f32[2,8,270], index: 9, kind: output, shape index: {}]
  %s10 = sld [smem:[#allocation0]]
  $region69: #{down_block_forward.1} parent=0
    _
  %s12 = ssub.s32 1, %s10
  %s13 = scalar_select 0, %s12, %s10
  loop: start=0, step=1, limit=4
  $region2: #{down_block_forward.1} parent=0 // loop_pre_header
    _
  $region3: #{down_block_forward.1} parent=0 // loop_header
    %s15 = sphi 0, %s19
    %p16 = scmp.ge.s32.totalorder %s15, 4
    %s25 = sphi 0, %s27
    %s28 = sphi 0, %s25
    %s29 = sphi 0, %s28
    %s45 = sphi 0, %s29
    %s49 = sphi 0, %s49
    %s51 = sphi 0, %s49
    %s52 = sphi 0, %s51
    %s66 = sphi 0, %s52
    %s70 = sphi 0, %s70
    %s72 = sphi 0, %s70
    %s73 = sphi 0, %s72
    %s87 = sphi 0, %s73
    %s91 = sphi 0, %s91
    %s93 = sphi 0, %s91
    %s94 = sphi 0, %s93
    %s108 = sphi 0, %s94
    %s112 = sphi 0, %s112
    %s114 = sphi 0, %s112
    %s115 = sphi 0, %s114
    %s129 = sphi 0, %s115
    %s133 = sphi 0, %s133
    %s135 = sphi 0, %s133
    %s136 = sphi 0, %s135
    %s150 = sphi 0, %s136
    %s154 = sphi 0, %s154
    %s156 = sphi 0, %s154
    %s157 = sphi 0, %s156
    %s171 = sphi 0, %s157
    %s175 = sphi 0, %s175
    %s177 = sphi 0, %s175
    %s178 = sphi 0, %s177
    %s192 = sphi 0, %s178
    %s196 = sphi 0, %s196
    %s198 = sphi 0, %s196
    %s199 = sphi 0, %s198
    %s213 = sphi 0, %s199
    %s219 = sphi 0, %s221
    %s222 = sphi 0, %s219
    %s223 = sphi 0, %s222
    %s239 = sphi 0, %s223
  $region4: #{down_block_forward.1} parent=0 // loop_header_branch
    %18 = sbr.rel (%p16) target = $region8
  $region5: #{down_block_forward.1} parent=0 // loop_body
    %s20 = ssub.s32 %s15, 1
    %s21 = ssub.s32 %s15, 2
    %s22 = sadd.s32 %s15, 1
    %s23 = ssub.s32 %s15, %s22
    %p24 = scmp.eq.s32.totalorder %s23, 0
    %s26 = sadd.s32 %s25, 1
    %s27 = scalar_select %p24, %s25, %s26
    %p30 = pneg %p24
    %p31 = scmp.eq.s32.totalorder %s15, 1
    %p32 = por %p30, %p31
    %p33 = scmp.ne.s32.totalorder %s25, %s28
    %p34 = scmp.eq.s32.totalorder %s15, 0
    %p35 = por %p33, %p34
    %p36 = scmp.ne.s32.totalorder %s25, %s28
    %p37 = scmp.eq.s32.totalorder %s20, 1
    %p38 = por %p36, %p37
    %p39 = scmp.ne.s32.totalorder %s28, %s29
    %p40 = scmp.eq.s32.totalorder %s20, 0
    %p41 = por %p39, %p40
    %p42 = scmp.ne.s32.totalorder %s28, %s29
    %p43 = scmp.eq.s32.totalorder %s21, 1
    %p44 = por %p42, %p43
    %p46 = scmp.ne.s32.totalorder %s29, %s45
    %p47 = scmp.eq.s32.totalorder %s21, 0
    %p48 = por %p46, %p47
    %s50 = sadd.s32 %s49, 1
    %p53 = scmp.eq.s32.totalorder %s15, 1
    %p54 = scmp.ne.s32.totalorder %s49, %s51
    %p55 = scmp.eq.s32.totalorder %s15, 0
    %p56 = por %p54, %p55
    %p57 = scmp.ne.s32.totalorder %s49, %s51
    %p58 = scmp.eq.s32.totalorder %s20, 1
    %p59 = por %p57, %p58
    %p60 = scmp.ne.s32.totalorder %s51, %s52
    %p61 = scmp.eq.s32.totalorder %s20, 0
    %p62 = por %p60, %p61
    %p63 = scmp.ne.s32.totalorder %s51, %s52
    %p64 = scmp.eq.s32.totalorder %s21, 1
    %p65 = por %p63, %p64
    %p67 = scmp.ne.s32.totalorder %s52, %s66
    %p68 = scmp.eq.s32.totalorder %s21, 0
    %p69 = por %p67, %p68
    %s71 = sadd.s32 %s70, 1
    %p74 = scmp.eq.s32.totalorder %s15, 1
    %p75 = scmp.ne.s32.totalorder %s70, %s72
    %p76 = scmp.eq.s32.totalorder %s15, 0
    %p77 = por %p75, %p76
    %p78 = scmp.ne.s32.totalorder %s70, %s72
    %p79 = scmp.eq.s32.totalorder %s20, 1
    %p80 = por %p78, %p79
    %p81 = scmp.ne.s32.totalorder %s72, %s73
    %p82 = scmp.eq.s32.totalorder %s20, 0
    %p83 = por %p81, %p82
    %p84 = scmp.ne.s32.totalorder %s72, %s73
    %p85 = scmp.eq.s32.totalorder %s21, 1
    %p86 = por %p84, %p85
    %p88 = scmp.ne.s32.totalorder %s73, %s87
    %p89 = scmp.eq.s32.totalorder %s21, 0
    %p90 = por %p88, %p89
    %s92 = sadd.s32 %s91, 1
    %p95 = scmp.eq.s32.totalorder %s15, 1
    %p96 = scmp.ne.s32.totalorder %s91, %s93
    %p97 = scmp.eq.s32.totalorder %s15, 0
    %p98 = por %p96, %p97
    %p99 = scmp.ne.s32.totalorder %s91, %s93
    %p100 = scmp.eq.s32.totalorder %s20, 1
    %p101 = por %p99, %p100
    %p102 = scmp.ne.s32.totalorder %s93, %s94
    %p103 = scmp.eq.s32.totalorder %s20, 0
    %p104 = por %p102, %p103
    %p105 = scmp.ne.s32.totalorder %s93, %s94
    %p106 = scmp.eq.s32.totalorder %s21, 1
    %p107 = por %p105, %p106
    %p109 = scmp.ne.s32.totalorder %s94, %s108
    %p110 = scmp.eq.s32.totalorder %s21, 0
    %p111 = por %p109, %p110
    %s113 = sadd.s32 %s112, 1
    %p116 = scmp.eq.s32.totalorder %s15, 1
    %p117 = scmp.ne.s32.totalorder %s112, %s114
    %p118 = scmp.eq.s32.totalorder %s15, 0
    %p119 = por %p117, %p118
    %p120 = scmp.ne.s32.totalorder %s112, %s114
    %p121 = scmp.eq.s32.totalorder %s20, 1
    %p122 = por %p120, %p121
    %p123 = scmp.ne.s32.totalorder %s114, %s115
    %p124 = scmp.eq.s32.totalorder %s20, 0
    %p125 = por %p123, %p124
    %p126 = scmp.ne.s32.totalorder %s114, %s115
    %p127 = scmp.eq.s32.totalorder %s21, 1
    %p128 = por %p126, %p127
    %p130 = scmp.ne.s32.totalorder %s115, %s129
    %p131 = scmp.eq.s32.totalorder %s21, 0
    %p132 = por %p130, %p131
    %s134 = sadd.s32 %s133, 1
    %p137 = scmp.eq.s32.totalorder %s15, 1
    %p138 = scmp.ne.s32.totalorder %s133, %s135
    %p139 = scmp.eq.s32.totalorder %s15, 0
    %p140 = por %p138, %p139
    %p141 = scmp.ne.s32.totalorder %s133, %s135
    %p142 = scmp.eq.s32.totalorder %s20, 1
    %p143 = por %p141, %p142
    %p144 = scmp.ne.s32.totalorder %s135, %s136
    %p145 = scmp.eq.s32.totalorder %s20, 0
    %p146 = por %p144, %p145
    %p147 = scmp.ne.s32.totalorder %s135, %s136
    %p148 = scmp.eq.s32.totalorder %s21, 1
    %p149 = por %p147, %p148
    %p151 = scmp.ne.s32.totalorder %s136, %s150
    %p152 = scmp.eq.s32.totalorder %s21, 0
    %p153 = por %p151, %p152
    %s155 = sadd.s32 %s154, 1
    %p158 = scmp.eq.s32.totalorder %s15, 1
    %p159 = scmp.ne.s32.totalorder %s154, %s156
    %p160 = scmp.eq.s32.totalorder %s15, 0
    %p161 = por %p159, %p160
    %p162 = scmp.ne.s32.totalorder %s154, %s156
    %p163 = scmp.eq.s32.totalorder %s20, 1
    %p164 = por %p162, %p163
    %p165 = scmp.ne.s32.totalorder %s156, %s157
    %p166 = scmp.eq.s32.totalorder %s20, 0
    %p167 = por %p165, %p166
    %p168 = scmp.ne.s32.totalorder %s156, %s157
    %p169 = scmp.eq.s32.totalorder %s21, 1
    %p170 = por %p168, %p169
    %p172 = scmp.ne.s32.totalorder %s157, %s171
    %p173 = scmp.eq.s32.totalorder %s21, 0
    %p174 = por %p172, %p173
    %s176 = sadd.s32 %s175, 1
    %p179 = scmp.eq.s32.totalorder %s15, 1
    %p180 = scmp.ne.s32.totalorder %s175, %s177
    %p181 = scmp.eq.s32.totalorder %s15, 0
    %p182 = por %p180, %p181
    %p183 = scmp.ne.s32.totalorder %s175, %s177
    %p184 = scmp.eq.s32.totalorder %s20, 1
    %p185 = por %p183, %p184
    %p186 = scmp.ne.s32.totalorder %s177, %s178
    %p187 = scmp.eq.s32.totalorder %s20, 0
    %p188 = por %p186, %p187
    %p189 = scmp.ne.s32.totalorder %s177, %s178
    %p190 = scmp.eq.s32.totalorder %s21, 1
    %p191 = por %p189, %p190
    %p193 = scmp.ne.s32.totalorder %s178, %s192
    %p194 = scmp.eq.s32.totalorder %s21, 0
    %p195 = por %p193, %p194
    %s197 = sadd.s32 %s196, 1
    %p200 = scmp.eq.s32.totalorder %s15, 1
    %p201 = scmp.ne.s32.totalorder %s196, %s198
    %p202 = scmp.eq.s32.totalorder %s15, 0
    %p203 = por %p201, %p202
    %p204 = scmp.ne.s32.totalorder %s196, %s198
    %p205 = scmp.eq.s32.totalorder %s20, 1
    %p206 = por %p204, %p205
    %p207 = scmp.ne.s32.totalorder %s198, %s199
    %p208 = scmp.eq.s32.totalorder %s20, 0
    %p209 = por %p207, %p208
    %p210 = scmp.ne.s32.totalorder %s198, %s199
    %p211 = scmp.eq.s32.totalorder %s21, 1
    %p212 = por %p210, %p211
    %p214 = scmp.ne.s32.totalorder %s199, %s213
    %p215 = scmp.eq.s32.totalorder %s21, 0
    %p216 = por %p214, %p215
    %s217 = ssub.s32 %s15, %s22
    %p218 = scmp.eq.s32.totalorder %s217, 0
    %s220 = sadd.s32 %s219, 1
    %s221 = scalar_select %p218, %s219, %s220
    %p224 = pneg %p218
    %p225 = scmp.eq.s32.totalorder %s15, 1
    %p226 = por %p224, %p225
    %p227 = scmp.ne.s32.totalorder %s219, %s222
    %p228 = scmp.eq.s32.totalorder %s15, 0
    %p229 = por %p227, %p228
    %p230 = scmp.ne.s32.totalorder %s219, %s222
    %p231 = scmp.eq.s32.totalorder %s20, 1
    %p232 = por %p230, %p231
    %p233 = scmp.ne.s32.totalorder %s222, %s223
    %p234 = scmp.eq.s32.totalorder %s20, 0
    %p235 = por %p233, %p234
    %p236 = scmp.ne.s32.totalorder %s222, %s223
    %p237 = scmp.eq.s32.totalorder %s21, 1
    %p238 = por %p236, %p237
    %p240 = scmp.ne.s32.totalorder %s223, %s239
    %p241 = scmp.eq.s32.totalorder %s21, 0
    %p242 = por %p240, %p241
    %p243 = scmp.le.s32.totalorder 1, %s15
    %p244 = scmp.lt.s32.totalorder %s15, 3
    %p245 = pnand %p243, %p244
    %p246 = pneg %p245
    // Predicated region
    $region9: #{down_block_forward.1} parent=5 // pred_check
      _
    $region10: #{down_block_forward.1} parent=5 // pred_check_branch
      %248 = sbr.rel (%p245) target = $region12
    $region11: #{down_block_forward.1} parent=5 // pred_region
      %s249 = ssub.s32 %s15, 1
      // Predicated region
      $region13: #{down_block_forward.1} parent=11 // pred_check
        %p250 = pneg %p62
      $region14: #{down_block_forward.1} parent=11 // pred_check_branch
        %252 = sbr.rel (%p250) target = $region16
      $region15: #{down_block_forward.1} parent=11 // pred_region
        _
      $region16: #{down_block_forward.1} parent=11 // pred_fallthru
        _
      // Predicated region
      $region17: #{down_block_forward.1} parent=11 // pred_check
        %p253 = pneg %p83
      $region18: #{down_block_forward.1} parent=11 // pred_check_branch
        %255 = sbr.rel (%p253) target = $region20
      $region19: #{down_block_forward.1} parent=11 // pred_region
        _
      $region20: #{down_block_forward.1} parent=11 // pred_fallthru
        _
      // Predicated region
      $region21: #{down_block_forward.1} parent=11 // pred_check
        %p256 = pneg %p104
      $region22: #{down_block_forward.1} parent=11 // pred_check_branch
        %258 = sbr.rel (%p256) target = $region24
      $region23: #{down_block_forward.1} parent=11 // pred_region
        _
      $region24: #{down_block_forward.1} parent=11 // pred_fallthru
        _
      // Predicated region
      $region25: #{down_block_forward.1} parent=11 // pred_check
        %p259 = pneg %p125
      $region26: #{down_block_forward.1} parent=11 // pred_check_branch
        %261 = sbr.rel (%p259) target = $region28
      $region27: #{down_block_forward.1} parent=11 // pred_region
        _
      $region28: #{down_block_forward.1} parent=11 // pred_fallthru
        _
      // Predicated region
      $region29: #{down_block_forward.1} parent=11 // pred_check
        %p262 = pneg %p146
      $region30: #{down_block_forward.1} parent=11 // pred_check_branch
        %264 = sbr.rel (%p262) target = $region32
      $region31: #{down_block_forward.1} parent=11 // pred_region
        _
      $region32: #{down_block_forward.1} parent=11 // pred_fallthru
        _
      // Predicated region
      $region33: #{down_block_forward.1} parent=11 // pred_check
        %p265 = pneg %p167
      $region34: #{down_block_forward.1} parent=11 // pred_check_branch
        %267 = sbr.rel (%p265) target = $region36
      $region35: #{down_block_forward.1} parent=11 // pred_region
        _
      $region36: #{down_block_forward.1} parent=11 // pred_fallthru
        _
      // Predicated region
      $region37: #{down_block_forward.1} parent=11 // pred_check
        %p268 = pneg %p188
      $region38: #{down_block_forward.1} parent=11 // pred_check_branch
        %270 = sbr.rel (%p268) target = $region40
      $region39: #{down_block_forward.1} parent=11 // pred_region
        _
      $region40: #{down_block_forward.1} parent=11 // pred_fallthru
        _
      // Predicated region
      $region41: #{down_block_forward.1} parent=11 // pred_check
        %p271 = pneg %p209
      $region42: #{down_block_forward.1} parent=11 // pred_check_branch
        %273 = sbr.rel (%p271) target = $region44
      $region43: #{down_block_forward.1} parent=11 // pred_region
        _
      $region44: #{down_block_forward.1} parent=11 // pred_fallthru
        _
    $region12: #{down_block_forward.1} parent=5 // pred_fallthru
      _
    %p274 = scmp.lt.s32.totalorder %s15, 2
    // Predicated region
    $region45: #{down_block_forward.1} parent=5 // pred_check
      %p275 = pneg %p274
    $region46: #{down_block_forward.1} parent=5 // pred_check_branch
      %277 = sbr.rel (%p275) target = $region48
    $region47: #{down_block_forward.1} parent=5 // pred_region
      // Predicated region
      $region49: #{down_block_forward.1} parent=47 // pred_check
        %p278 = pneg %p35
      $region50: #{down_block_forward.1} parent=47 // pred_check_branch
        %280 = sbr.rel (%p278) target = $region52
      $region51: #{down_block_forward.1} parent=47 // pred_region
        %p281 = scmp.lt.s32.totalorder %s15, 1
        %s282 = scalar_select %p281, %s15, 1
        %s283 = smul.addr %s282, 3
        %s284 = smul.addr %s283, 4
        %s285 = scalar_lea.vmem %s0, %s284
      $region52: #{down_block_forward.1} parent=47 // pred_fallthru
        _
    $region48: #{down_block_forward.1} parent=5 // pred_fallthru
      _
    %p286 = scmp.le.s32.totalorder 1, %s15
    %p287 = scmp.lt.s32.totalorder %s15, 3
    %p288 = pnand %p286, %p287
    %p289 = pneg %p288
    // Predicated region
    $region53: #{down_block_forward.1} parent=5 // pred_check
      _
    $region54: #{down_block_forward.1} parent=5 // pred_check_branch
      %291 = sbr.rel (%p288) target = $region56
    $region55: #{down_block_forward.1} parent=5 // pred_region
      %s292 = ssub.s32 %s15, 1
      %p293 = scmp.lt.s32.totalorder %s20, 1
      %s294 = scalar_select %p293, %s20, 1
      %s295 = smul.addr %s294, 3
      %s296 = smul.addr %s295, 4
      %s297 = scalar_lea.vmem %s0, %s296
      %p298 = pneg %p41
      %p299 = pneg %p38
      %p300 = pneg %p62
      %p301 = pneg %p59
      %p302 = pneg %p83
      %p303 = pneg %p80
      %p304 = pneg %p104
      %p305 = pneg %p101
      %p306 = pneg %p125
      %p307 = pneg %p122
      %p308 = pneg %p146
      %p309 = pneg %p143
      %p310 = pneg %p167
      %p311 = pneg %p164
      %p312 = pneg %p188
      %p313 = pneg %p185
      %p314 = pneg %p209
      %p315 = pneg %p206
      %p316 = pneg %p235
      %p317 = pneg %p232
      %p318 = scmp.lt.s32.totalorder %s20, 1
      %s319 = scalar_select %p318, %s20, 1
      %s320 = smul.addr %s319, 3
      %s321 = smul.addr %s320, 8
      %s322 = scalar_lea.vmem %s9, %s321
      %p323 = scmp.lt.s32.totalorder %s20, 1
      %s324 = scalar_select %p323, %s20, 1
      %s325 = smul.addr %s324, 3
      %s326 = smul.addr %s325, 4
      %s327 = scalar_lea.vmem %s0, %s326
      %p328 = scmp.lt.s32.totalorder %s20, 1
      %s329 = scalar_select %p328, %s20, 1
      %s330 = smul.addr %s329, 3
      %s331 = smul.addr %s330, 8
      %s332 = scalar_lea.vmem %s9, %s331
      %v333 = vld [vmem:[%s8] sm:$0x7]
      %v334 = vld [vmem:[%s327] sm:$0xff]
      %v335 = vld [vmem:[%s327 + $0x8] sm:$0xf]
      %v336 = vld [vmem:[%s1] sm:$0xff]
      %338 = vrot.lane.b32.xlu0 %v336, 124
      %v339 = vpop.permute.xlu0 %338
      %v342 = vcombine.high %v334, %v334
      %343 = vrot.lane.b32.xlu0 %v334, 127
      %v344 = vpop.permute.xlu0 %343
      %345 = vrot.lane.b32.xlu0 %v342, 127
      %v346 = vpop.permute.xlu0 %345
      %347 = vrot.lane.b32.xlu0 %v335, 127
      %v348 = vpop.permute.xlu0 %347
      %vm349 = vcmask 1039360
      %v350 = vsel %vm349, %v344, %v346
      %v351 = vsel %vm349, %v346, %v348
      %vm352 = vcmask 31744
      %v353 = vsel %vm352, %v339, 0
      %vm355 = vcmask 1043456
      %v356 = vsel %vm355, %v350, 0
      %v358 = vsel %vm355, %v351, 0
      %v360 = vsel %vm355, %v348, 0
      %362 = vmatprep.subr.mxu0 %v358
      %363 = vmatpush1.msra.mxu0 %v356
      %364 = vmatprep.subr.mxu0 0.0
      %365 = vmatpush1.msra.mxu0 0.0
      %366 = vmatprep.subr.mxu0 0.0
      %367 = vmatpush1.msra.mxu0 0.0
      %368 = vmatprep.subr.mxu0 0.0
      %369 = vmatpush1.msra.mxu0 0.0
      %370 = vmatprep.subr.mxu0 0.0
      %371 = vmatpush1.msra.mxu0 0.0
      %372 = vmatprep.subr.mxu0 0.0
      %373 = vmatpush1.msra.mxu0 0.0
      %374 = vmatprep.subr.mxu0 0.0
      %375 = vmatpush1.msra.mxu0 0.0
      %376 = vmatprep.subr.mxu0 0.0
      %377 = vmatpush1.msra.mxu0 0.0
      %378 = vmatprep.subr.mxu0 0.0
      %379 = vmatpush1.msra.mxu0 0.0
      %380 = vmatprep.subr.mxu0 0.0
      %381 = vmatpush1.msra.mxu0 0.0
      %382 = vmatprep.subr.mxu0 0.0
      %383 = vmatpush1.msra.mxu0 0.0
      %384 = vmatprep.subr.mxu0 0.0
      %385 = vmatpush1.msra.mxu0 0.0
      %386 = vmatprep.subr.mxu0 0.0
      %387 = vmatpush1.msra.mxu0 0.0
      %388 = vmatprep.subr.mxu0 0.0
      %389 = vmatpush1.msra.mxu0 0.0
      %390 = vmatprep.subr.mxu0 0.0
      %391 = vmatpush1.msra.mxu0 0.0
      %392 = vmatprep.subr.mxu0 0.0
      %393 = vmatpush1.msra.mxu0 0.0
      %394 = vmatprep.subr.mxu0 0.0
      %395 = vmatpush1.msra.mxu0 0.0
      %396 = vmatprep.subr.mxu0 0.0
      %397 = vmatpush1.msra.mxu0 0.0
      %398 = vmatprep.subr.mxu0 0.0
      %399 = vmatpush1.msra.mxu0 0.0
      %400 = vmatprep.subr.mxu0 0.0
      %401 = vmatpush1.msra.mxu0 0.0
      %402 = vmatprep.subr.mxu0 0.0
      %403 = vmatpush1.msra.mxu0 0.0
      %404 = vmatprep.subr.mxu0 0.0
      %405 = vmatpush1.msra.mxu0 0.0
      %406 = vmatprep.subr.mxu0 0.0
      %407 = vmatpush1.msra.mxu0 0.0
      %408 = vmatprep.subr.mxu0 0.0
      %409 = vmatpush1.msra.mxu0 0.0
      %410 = vmatprep.subr.mxu0 0.0
      %411 = vmatpush1.msra.mxu0 0.0
      %412 = vmatprep.subr.mxu0 0.0
      %413 = vmatpush1.msra.mxu0 0.0
      %414 = vmatprep.subr.mxu0 0.0
      %415 = vmatpush1.msra.mxu0 0.0
      %416 = vmatprep.subr.mxu0 0.0
      %417 = vmatpush1.msra.mxu0 0.0
      %418 = vmatprep.subr.mxu0 0.0
      %419 = vmatpush1.msra.mxu0 0.0
      %420 = vmatprep.subr.mxu0 0.0
      %421 = vmatpush1.msra.mxu0 0.0
      %422 = vmatprep.subr.mxu0 0.0
      %423 = vmatpush1.msra.mxu0 0.0
      %424 = vmatprep.subr.mxu0 0.0
      %425 = vmatpush1.msra.mxu0 0.0
      %426 = vmatprep.mubr.f32.mxu0 0.0
      %427 = vmatmul.mubr.f32.gmra.mrb[0].mxu0 %v353
      %v428 = vpop.f32.mrb[0].mxu0
      %v429 = vadd.f32 0.0, %v428
      %v430 = vpop.f32.mrb[0].mxu0
      %v431 = vadd.f32 0.0, %v430
      %432 = vdwg.mxu0
      %433 = vmatprep.subr.mxu0 0.0
      %434 = vmatpush1.msra.mxu0 %v360
      %435 = vmatprep.subr.mxu0 0.0
      %436 = vmatpush1.msra.mxu0 0.0
      %437 = vmatprep.subr.mxu0 0.0
      %438 = vmatpush1.msra.mxu0 0.0
      %439 = vmatprep.subr.mxu0 0.0
      %440 = vmatpush1.msra.mxu0 0.0
      %441 = vmatprep.subr.mxu0 0.0
      %442 = vmatpush1.msra.mxu0 0.0
      %443 = vmatprep.subr.mxu0 0.0
      %444 = vmatpush1.msra.mxu0 0.0
      %445 = vmatprep.subr.mxu0 0.0
      %446 = vmatpush1.msra.mxu0 0.0
      %447 = vmatprep.subr.mxu0 0.0
      %448 = vmatpush1.msra.mxu0 0.0
      %449 = vmatprep.subr.mxu0 0.0
      %450 = vmatpush1.msra.mxu0 0.0
      %451 = vmatprep.subr.mxu0 0.0
      %452 = vmatpush1.msra.mxu0 0.0
      %453 = vmatprep.subr.mxu0 0.0
      %454 = vmatpush1.msra.mxu0 0.0
      %455 = vmatprep.subr.mxu0 0.0
      %456 = vmatpush1.msra.mxu0 0.0
      %457 = vmatprep.subr.mxu0 0.0
      %458 = vmatpush1.msra.mxu0 0.0
      %459 = vmatprep.subr.mxu0 0.0
      %460 = vmatpush1.msra.mxu0 0.0
      %461 = vmatprep.subr.mxu0 0.0
      %462 = vmatpush1.msra.mxu0 0.0
      %463 = vmatprep.subr.mxu0 0.0
      %464 = vmatpush1.msra.mxu0 0.0
      %465 = vmatprep.subr.mxu0 0.0
      %466 = vmatpush1.msra.mxu0 0.0
      %467 = vmatprep.subr.mxu0 0.0
      %468 = vmatpush1.msra.mxu0 0.0
      %469 = vmatprep.subr.mxu0 0.0
      %470 = vmatpush1.msra.mxu0 0.0
      %471 = vmatprep.subr.mxu0 0.0
      %472 = vmatpush1.msra.mxu0 0.0
      %473 = vmatprep.subr.mxu0 0.0
      %474 = vmatpush1.msra.mxu0 0.0
      %475 = vmatprep.subr.mxu0 0.0
      %476 = vmatpush1.msra.mxu0 0.0
      %477 = vmatprep.subr.mxu0 0.0
      %478 = vmatpush1.msra.mxu0 0.0
      %479 = vmatprep.subr.mxu0 0.0
      %480 = vmatpush1.msra.mxu0 0.0
      %481 = vmatprep.subr.mxu0 0.0
      %482 = vmatpush1.msra.mxu0 0.0
      %483 = vmatprep.subr.mxu0 0.0
      %484 = vmatpush1.msra.mxu0 0.0
      %485 = vmatprep.subr.mxu0 0.0
      %486 = vmatpush1.msra.mxu0 0.0
      %487 = vmatprep.subr.mxu0 0.0
      %488 = vmatpush1.msra.mxu0 0.0
      %489 = vmatprep.subr.mxu0 0.0
      %490 = vmatpush1.msra.mxu0 0.0
      %491 = vmatprep.subr.mxu0 0.0
      %492 = vmatpush1.msra.mxu0 0.0
      %493 = vmatprep.subr.mxu0 0.0
      %494 = vmatpush1.msra.mxu0 0.0
      %495 = vmatprep.subr.mxu0 0.0
      %496 = vmatpush1.msra.mxu0 0.0
      %497 = vmatprep.mubr.f32.mxu0 0.0
      %498 = vmatmul.mubr.f32.gmra.mrb[0].mxu0 %v353
      %v499 = vpop.f32.mrb[0].mxu0
      %v500 = vadd.f32 0.0, %v499
      %v501 = vpop.f32.mrb[0].mxu0
      %502 = vdwg.mxu0
      %v503 = vsel %vm352, %v336, 0
      %v505 = vsel %vm355, %v334, 0
      %v507 = vsel %vm355, %v342, 0
      %v509 = vsel %vm355, %v335, 0
      %511 = vmatprep.subr.mxu0 %v507
      %512 = vmatpush1.msra.mxu0 %v505
      %513 = vmatprep.subr.mxu0 0.0
      %514 = vmatpush1.msra.mxu0 0.0
      %515 = vmatprep.subr.mxu0 0.0
      %516 = vmatpush1.msra.mxu0 0.0
      %517 = vmatprep.subr.mxu0 0.0
      %518 = vmatpush1.msra.mxu0 0.0
      %519 = vmatprep.subr.mxu0 0.0
      %520 = vmatpush1.msra.mxu0 0.0
      %521 = vmatprep.subr.mxu0 0.0
      %522 = vmatpush1.msra.mxu0 0.0
      %523 = vmatprep.subr.mxu0 0.0
      %524 = vmatpush1.msra.mxu0 0.0
      %525 = vmatprep.subr.mxu0 0.0
      %526 = vmatpush1.msra.mxu0 0.0
      %527 = vmatprep.subr.mxu0 0.0
      %528 = vmatpush1.msra.mxu0 0.0
      %529 = vmatprep.subr.mxu0 0.0
      %530 = vmatpush1.msra.mxu0 0.0
      %531 = vmatprep.subr.mxu0 0.0
      %532 = vmatpush1.msra.mxu0 0.0
      %533 = vmatprep.subr.mxu0 0.0
      %534 = vmatpush1.msra.mxu0 0.0
      %535 = vmatprep.subr.mxu0 0.0
      %536 = vmatpush1.msra.mxu0 0.0
      %537 = vmatprep.subr.mxu0 0.0
      %538 = vmatpush1.msra.mxu0 0.0
      %539 = vmatprep.subr.mxu0 0.0
      %540 = vmatpush1.msra.mxu0 0.0
      %541 = vmatprep.subr.mxu0 0.0
      %542 = vmatpush1.msra.mxu0 0.0
      %543 = vmatprep.subr.mxu0 0.0
      %544 = vmatpush1.msra.mxu0 0.0
      %545 = vmatprep.subr.mxu0 0.0
      %546 = vmatpush1.msra.mxu0 0.0
      %547 = vmatprep.subr.mxu0 0.0
      %548 = vmatpush1.msra.mxu0 0.0
      %549 = vmatprep.subr.mxu0 0.0
      %550 = vmatpush1.msra.mxu0 0.0
      %551 = vmatprep.subr.mxu0 0.0
      %552 = vmatpush1.msra.mxu0 0.0
      %553 = vmatprep.subr.mxu0 0.0
      %554 = vmatpush1.msra.mxu0 0.0
      %555 = vmatprep.subr.mxu0 0.0
      %556 = vmatpush1.msra.mxu0 0.0
      %557 = vmatprep.subr.mxu0 0.0
      %558 = vmatpush1.msra.mxu0 0.0
      %559 = vmatprep.subr.mxu0 0.0
      %560 = vmatpush1.msra.mxu0 0.0
      %561 = vmatprep.subr.mxu0 0.0
      %562 = vmatpush1.msra.mxu0 0.0
      %563 = vmatprep.subr.mxu0 0.0
      %564 = vmatpush1.msra.mxu0 0.0
      %565 = vmatprep.subr.mxu0 0.0
      %566 = vmatpush1.msra.mxu0 0.0
      %567 = vmatprep.subr.mxu0 0.0
      %568 = vmatpush1.msra.mxu0 0.0
      %569 = vmatprep.subr.mxu0 0.0
      %570 = vmatpush1.msra.mxu0 0.0
      %571 = vmatprep.subr.mxu0 0.0
      %572 = vmatpush1.msra.mxu0 0.0
      %573 = vmatprep.subr.mxu0 0.0
      %574 = vmatpush1.msra.mxu0 0.0
      %575 = vmatprep.mubr.f32.mxu0 0.0
      %576 = vmatmul.mubr.f32.gmra.mrb[0].mxu0 %v503
      %v577 = vpop.f32.mrb[0].mxu0
      %v578 = vadd.f32 %v429, %v577
      %v579 = vpop.f32.mrb[0].mxu0
      %v580 = vadd.f32 %v431, %v579
      %581 = vdwg.mxu0
      %582 = vmatprep.subr.mxu0 0.0
      %583 = vmatpush1.msra.mxu0 %v509
      %584 = vmatprep.subr.mxu0 0.0
      %585 = vmatpush1.msra.mxu0 0.0
      %586 = vmatprep.subr.mxu0 0.0
      %587 = vmatpush1.msra.mxu0 0.0
      %588 = vmatprep.subr.mxu0 0.0
      %589 = vmatpush1.msra.mxu0 0.0
      %590 = vmatprep.subr.mxu0 0.0
      %591 = vmatpush1.msra.mxu0 0.0
      %592 = vmatprep.subr.mxu0 0.0
      %593 = vmatpush1.msra.mxu0 0.0
      %594 = vmatprep.subr.mxu0 0.0
      %595 = vmatpush1.msra.mxu0 0.0
      %596 = vmatprep.subr.mxu0 0.0
      %597 = vmatpush1.msra.mxu0 0.0
      %598 = vmatprep.subr.mxu0 0.0
      %599 = vmatpush1.msra.mxu0 0.0
      %600 = vmatprep.subr.mxu0 0.0
      %601 = vmatpush1.msra.mxu0 0.0
      %602 = vmatprep.subr.mxu0 0.0
      %603 = vmatpush1.msra.mxu0 0.0
      %604 = vmatprep.subr.mxu0 0.0
      %605 = vmatpush1.msra.mxu0 0.0
      %606 = vmatprep.subr.mxu0 0.0
      %607 = vmatpush1.msra.mxu0 0.0
      %608 = vmatprep.subr.mxu0 0.0
      %609 = vmatpush1.msra.mxu0 0.0
      %610 = vmatprep.subr.mxu0 0.0
      %611 = vmatpush1.msra.mxu0 0.0
      %612 = vmatprep.subr.mxu0 0.0
      %613 = vmatpush1.msra.mxu0 0.0
      %614 = vmatprep.subr.mxu0 0.0
      %615 = vmatpush1.msra.mxu0 0.0
      %616 = vmatprep.subr.mxu0 0.0
      %617 = vmatpush1.msra.mxu0 0.0
      %618 = vmatprep.subr.mxu0 0.0
      %619 = vmatpush1.msra.mxu0 0.0
      %620 = vmatprep.subr.mxu0 0.0
      %621 = vmatpush1.msra.mxu0 0.0
      %622 = vmatprep.subr.mxu0 0.0
      %623 = vmatpush1.msra.mxu0 0.0
      %624 = vmatprep.subr.mxu0 0.0
      %625 = vmatpush1.msra.mxu0 0.0
      %626 = vmatprep.subr.mxu0 0.0
      %627 = vmatpush1.msra.mxu0 0.0
      %628 = vmatprep.subr.mxu0 0.0
      %629 = vmatpush1.msra.mxu0 0.0
      %630 = vmatprep.subr.mxu0 0.0
      %631 = vmatpush1.msra.mxu0 0.0
      %632 = vmatprep.subr.mxu0 0.0
      %633 = vmatpush1.msra.mxu0 0.0
      %634 = vmatprep.subr.mxu0 0.0
      %635 = vmatpush1.msra.mxu0 0.0
      %636 = vmatprep.subr.mxu0 0.0
      %637 = vmatpush1.msra.mxu0 0.0
      %638 = vmatprep.subr.mxu0 0.0
      %639 = vmatpush1.msra.mxu0 0.0
      %640 = vmatprep.subr.mxu0 0.0
      %641 = vmatpush1.msra.mxu0 0.0
      %642 = vmatprep.subr.mxu0 0.0
      %643 = vmatpush1.msra.mxu0 0.0
      %644 = vmatprep.subr.mxu0 0.0
      %645 = vmatpush1.msra.mxu0 0.0
      %646 = vmatprep.mubr.f32.mxu0 0.0
      %647 = vmatmul.mubr.f32.gmra.mrb[0].mxu0 %v503
      %v648 = vpop.f32.mrb[0].mxu0
      %v649 = vadd.f32 %v500, %v648
      %v650 = vpop.f32.mrb[0].mxu0
      %651 = vdwg.mxu0
      %v652 = vld [vmem:[%s1] sm:$0xff]
      %654 = vrot.lane.b32.xlu0 %v652, 120
      %v655 = vpop.permute.xlu0 %654
      %656 = vrot.lane.b32.xlu0 %v334, 126
      %v657 = vpop.permute.xlu0 %656
      %658 = vrot.lane.b32.xlu0 %v342, 126
      %v659 = vpop.permute.xlu0 %658
      %660 = vrot.lane.b32.xlu0 %v335, 126
      %v661 = vpop.permute.xlu0 %660
      %vm662 = vcmask 1031168
      %v663 = vsel %vm662, %v657, %v659
      %v664 = vsel %vm662, %v659, %v661
      %v665 = vsel %vm352, %v655, 0
      %v667 = vsel %vm355, %v663, 0
      %v669 = vsel %vm355, %v664, 0
      %v671 = vsel %vm355, %v661, 0
      %673 = vmatprep.subr.mxu0 %v669
      %674 = vmatpush1.msra.mxu0 %v667
      %675 = vmatprep.subr.mxu0 0.0
      %676 = vmatpush1.msra.mxu0 0.0
      %677 = vmatprep.subr.mxu0 0.0
      %678 = vmatpush1.msra.mxu0 0.0
      %679 = vmatprep.subr.mxu0 0.0
      %680 = vmatpush1.msra.mxu0 0.0
      %681 = vmatprep.subr.mxu0 0.0
      %682 = vmatpush1.msra.mxu0 0.0
      %683 = vmatprep.subr.mxu0 0.0
      %684 = vmatpush1.msra.mxu0 0.0
      %685 = vmatprep.subr.mxu0 0.0
      %686 = vmatpush1.msra.mxu0 0.0
      %687 = vmatprep.subr.mxu0 0.0
      %688 = vmatpush1.msra.mxu0 0.0
      %689 = vmatprep.subr.mxu0 0.0
      %690 = vmatpush1.msra.mxu0 0.0
      %691 = vmatprep.subr.mxu0 0.0
      %692 = vmatpush1.msra.mxu0 0.0
      %693 = vmatprep.subr.mxu0 0.0
      %694 = vmatpush1.msra.mxu0 0.0
      %695 = vmatprep.subr.mxu0 0.0
      %696 = vmatpush1.msra.mxu0 0.0
      %697 = vmatprep.subr.mxu0 0.0
      %698 = vmatpush1.msra.mxu0 0.0
      %699 = vmatprep.subr.mxu0 0.0
      %700 = vmatpush1.msra.mxu0 0.0
      %701 = vmatprep.subr.mxu0 0.0
      %702 = vmatpush1.msra.mxu0 0.0
      %703 = vmatprep.subr.mxu0 0.0
      %704 = vmatpush1.msra.mxu0 0.0
      %705 = vmatprep.subr.mxu0 0.0
      %706 = vmatpush1.msra.mxu0 0.0
      %707 = vmatprep.subr.mxu0 0.0
      %708 = vmatpush1.msra.mxu0 0.0
      %709 = vmatprep.subr.mxu0 0.0
      %710 = vmatpush1.msra.mxu0 0.0
      %711 = vmatprep.subr.mxu0 0.0
      %712 = vmatpush1.msra.mxu0 0.0
      %713 = vmatprep.subr.mxu0 0.0
      %714 = vmatpush1.msra.mxu0 0.0
      %715 = vmatprep.subr.mxu0 0.0
      %716 = vmatpush1.msra.mxu0 0.0
      %717 = vmatprep.subr.mxu0 0.0
      %718 = vmatpush1.msra.mxu0 0.0
      %719 = vmatprep.subr.mxu0 0.0
      %720 = vmatpush1.msra.mxu0 0.0
      %721 = vmatprep.subr.mxu0 0.0
      %722 = vmatpush1.msra.mxu0 0.0
      %723 = vmatprep.subr.mxu0 0.0
      %724 = vmatpush1.msra.mxu0 0.0
      %725 = vmatprep.subr.mxu0 0.0
      %726 = vmatpush1.msra.mxu0 0.0
      %727 = vmatprep.subr.mxu0 0.0
      %728 = vmatpush1.msra.mxu0 0.0
      %729 = vmatprep.subr.mxu0 0.0
      %730 = vmatpush1.msra.mxu0 0.0
      %731 = vmatprep.subr.mxu0 0.0
      %732 = vmatpush1.msra.mxu0 0.0
      %733 = vmatprep.subr.mxu0 0.0
      %734 = vmatpush1.msra.mxu0 0.0
      %735 = vmatprep.subr.mxu0 0.0
      %736 = vmatpush1.msra.mxu0 0.0
      %737 = vmatprep.mubr.f32.mxu0 0.0
      %738 = vmatmul.mubr.f32.gmra.mrb[0].mxu0 %v665
      %v739 = vpop.f32.mrb[0].mxu0
      %v740 = vadd.f32 0.0, %v739
      %v741 = vpop.f32.mrb[0].mxu0
      %v742 = vadd.f32 0.0, %v741
      %743 = vdwg.mxu0
      %744 = vmatprep.subr.mxu0 0.0
      %745 = vmatpush1.msra.mxu0 %v671
      %746 = vmatprep.subr.mxu0 0.0
      %747 = vmatpush1.msra.mxu0 0.0
      %748 = vmatprep.subr.mxu0 0.0
      %749 = vmatpush1.msra.mxu0 0.0
      %750 = vmatprep.subr.mxu0 0.0
      %751 = vmatpush1.msra.mxu0 0.0
      %752 = vmatprep.subr.mxu0 0.0
      %753 = vmatpush1.msra.mxu0 0.0
      %754 = vmatprep.subr.mxu0 0.0
      %755 = vmatpush1.msra.mxu0 0.0
      %756 = vmatprep.subr.mxu0 0.0
      %757 = vmatpush1.msra.mxu0 0.0
      %758 = vmatprep.subr.mxu0 0.0
      %759 = vmatpush1.msra.mxu0 0.0
      %760 = vmatprep.subr.mxu0 0.0
      %761 = vmatpush1.msra.mxu0 0.0
      %762 = vmatprep.subr.mxu0 0.0
      %763 = vmatpush1.msra.mxu0 0.0
      %764 = vmatprep.subr.mxu0 0.0
      %765 = vmatpush1.msra.mxu0 0.0
      %766 = vmatprep.subr.mxu0 0.0
      %767 = vmatpush1.msra.mxu0 0.0
      %768 = vmatprep.subr.mxu0 0.0
      %769 = vmatpush1.msra.mxu0 0.0
      %770 = vmatprep.subr.mxu0 0.0
      %771 = vmatpush1.msra.mxu0 0.0
      %772 = vmatprep.subr.mxu0 0.0
      %773 = vmatpush1.msra.mxu0 0.0
      %774 = vmatprep.subr.mxu0 0.0
      %775 = vmatpush1.msra.mxu0 0.0
      %776 = vmatprep.subr.mxu0 0.0
      %777 = vmatpush1.msra.mxu0 0.0
      %778 = vmatprep.subr.mxu0 0.0
      %779 = vmatpush1.msra.mxu0 0.0
      %780 = vmatprep.subr.mxu0 0.0
      %781 = vmatpush1.msra.mxu0 0.0
      %782 = vmatprep.subr.mxu0 0.0
      %783 = vmatpush1.msra.mxu0 0.0
      %784 = vmatprep.subr.mxu0 0.0
      %785 = vmatpush1.msra.mxu0 0.0
      %786 = vmatprep.subr.mxu0 0.0
      %787 = vmatpush1.msra.mxu0 0.0
      %788 = vmatprep.subr.mxu0 0.0
      %789 = vmatpush1.msra.mxu0 0.0
      %790 = vmatprep.subr.mxu0 0.0
      %791 = vmatpush1.msra.mxu0 0.0
      %792 = vmatprep.subr.mxu0 0.0
      %793 = vmatpush1.msra.mxu0 0.0
      %794 = vmatprep.subr.mxu0 0.0
      %795 = vmatpush1.msra.mxu0 0.0
      %796 = vmatprep.subr.mxu0 0.0
      %797 = vmatpush1.msra.mxu0 0.0
      %798 = vmatprep.subr.mxu0 0.0
      %799 = vmatpush1.msra.mxu0 0.0
      %800 = vmatprep.subr.mxu0 0.0
      %801 = vmatpush1.msra.mxu0 0.0
      %802 = vmatprep.subr.mxu0 0.0
      %803 = vmatpush1.msra.mxu0 0.0
      %804 = vmatprep.subr.mxu0 0.0
      %805 = vmatpush1.msra.mxu0 0.0
      %806 = vmatprep.subr.mxu0 0.0
      %807 = vmatpush1.msra.mxu0 0.0
      %808 = vmatprep.mubr.f32.mxu0 0.0
      %809 = vmatmul.mubr.f32.gmra.mrb[0].mxu0 %v665
      %v810 = vpop.f32.mrb[0].mxu0
      %v811 = vadd.f32 0.0, %v810
      %v812 = vpop.f32.mrb[0].mxu0
      %813 = vdwg.mxu0
      %v814 = vadd.f32 %v578, %v740
      %v815 = vadd.f32 %v580, %v742
      %v816 = vadd.f32 %v649, %v811
      %v817 = vld [vmem:[%s1] sm:$0xff]
      %819 = vrot.lane.b32.xlu0 %v817, 116
      %v820 = vpop.permute.xlu0 %819
      %821 = vrot.lane.b32.xlu0 %v334, 110
      %v822 = vpop.permute.xlu0 %821
      %823 = vrot.lane.b32.xlu0 %v342, 110
      %v824 = vpop.permute.xlu0 %823
      %825 = vrot.lane.b32.xlu0 %v335, 110
      %v826 = vpop.permute.xlu0 %825
      %vm827 = vcmask 900096
      %v828 = vsel %vm827, %v822, %v824
      %v829 = vsel %vm827, %v824, %v826
      %v830 = vsel %vm352, %v820, 0
      %v832 = vsel %vm355, %v828, 0
      %v834 = vsel %vm355, %v829, 0
      %v836 = vsel %vm355, %v826, 0
      %838 = vmatprep.subr.mxu0 %v834
      %839 = vmatpush1.msra.mxu0 %v832
      %840 = vmatprep.subr.mxu0 0.0
      %841 = vmatpush1.msra.mxu0 0.0
      %842 = vmatprep.subr.mxu0 0.0
      %843 = vmatpush1.msra.mxu0 0.0
      %844 = vmatprep.subr.mxu0 0.0
      %845 = vmatpush1.msra.mxu0 0.0
      %846 = vmatprep.subr.mxu0 0.0
      %847 = vmatpush1.msra.mxu0 0.0
      %848 = vmatprep.subr.mxu0 0.0
      %849 = vmatpush1.msra.mxu0 0.0
      %850 = vmatprep.subr.mxu0 0.0
      %851 = vmatpush1.msra.mxu0 0.0
      %852 = vmatprep.subr.mxu0 0.0
      %853 = vmatpush1.msra.mxu0 0.0
      %854 = vmatprep.subr.mxu0 0.0
      %855 = vmatpush1.msra.mxu0 0.0
      %856 = vmatprep.subr.mxu0 0.0
      %857 = vmatpush1.msra.mxu0 0.0
      %858 = vmatprep.subr.mxu0 0.0
      %859 = vmatpush1.msra.mxu0 0.0
      %860 = vmatprep.subr.mxu0 0.0
      %861 = vmatpush1.msra.mxu0 0.0
      %862 = vmatprep.subr.mxu0 0.0
      %863 = vmatpush1.msra.mxu0 0.0
      %864 = vmatprep.subr.mxu0 0.0
      %865 = vmatpush1.msra.mxu0 0.0
      %866 = vmatprep.subr.mxu0 0.0
      %867 = vmatpush1.msra.mxu0 0.0
      %868 = vmatprep.subr.mxu0 0.0
      %869 = vmatpush1.msra.mxu0 0.0
      %870 = vmatprep.subr.mxu0 0.0
      %871 = vmatpush1.msra.mxu0 0.0
      %872 = vmatprep.subr.mxu0 0.0
      %873 = vmatpush1.msra.mxu0 0.0
      %874 = vmatprep.subr.mxu0 0.0
      %875 = vmatpush1.msra.mxu0 0.0
      %876 = vmatprep.subr.mxu0 0.0
      %877 = vmatpush1.msra.mxu0 0.0
      %878 = vmatprep.subr.mxu0 0.0
      %879 = vmatpush1.msra.mxu0 0.0
      %880 = vmatprep.subr.mxu0 0.0
      %881 = vmatpush1.msra.mxu0 0.0
      %882 = vmatprep.subr.mxu0 0.0
      %883 = vmatpush1.msra.mxu0 0.0
      %884 = vmatprep.subr.mxu0 0.0
      %885 = vmatpush1.msra.mxu0 0.0
      %886 = vmatprep.subr.mxu0 0.0
      %887 = vmatpush1.msra.mxu0 0.0
      %888 = vmatprep.subr.mxu0 0.0
      %889 = vmatpush1.msra.mxu0 0.0
      %890 = vmatprep.subr.mxu0 0.0
      %891 = vmatpush1.msra.mxu0 0.0
      %892 = vmatprep.subr.mxu0 0.0
      %893 = vmatpush1.msra.mxu0 0.0
      %894 = vmatprep.subr.mxu0 0.0
      %895 = vmatpush1.msra.mxu0 0.0
      %896 = vmatprep.subr.mxu0 0.0
      %897 = vmatpush1.msra.mxu0 0.0
      %898 = vmatprep.subr.mxu0 0.0
      %899 = vmatpush1.msra.mxu0 0.0
      %900 = vmatprep.subr.mxu0 0.0
      %901 = vmatpush1.msra.mxu0 0.0
      %902 = vmatprep.mubr.f32.mxu0 0.0
      %903 = vmatmul.mubr.f32.gmra.mrb[0].mxu0 %v830
      %v904 = vpop.f32.mrb[0].mxu0
      %v905 = vadd.f32 0.0, %v904
      %v906 = vpop.f32.mrb[0].mxu0
      %v907 = vadd.f32 0.0, %v906
      %908 = vdwg.mxu0
      %909 = vmatprep.subr.mxu0 0.0
      %910 = vmatpush1.msra.mxu0 %v836
      %911 = vmatprep.subr.mxu0 0.0
      %912 = vmatpush1.msra.mxu0 0.0
      %913 = vmatprep.subr.mxu0 0.0
      %914 = vmatpush1.msra.mxu0 0.0
      %915 = vmatprep.subr.mxu0 0.0
      %916 = vmatpush1.msra.mxu0 0.0
      %917 = vmatprep.subr.mxu0 0.0
      %918 = vmatpush1.msra.mxu0 0.0
      %919 = vmatprep.subr.mxu0 0.0
      %920 = vmatpush1.msra.mxu0 0.0
      %921 = vmatprep.subr.mxu0 0.0
      %922 = vmatpush1.msra.mxu0 0.0
      %923 = vmatprep.subr.mxu0 0.0
      %924 = vmatpush1.msra.mxu0 0.0
      %925 = vmatprep.subr.mxu0 0.0
      %926 = vmatpush1.msra.mxu0 0.0
      %927 = vmatprep.subr.mxu0 0.0
      %928 = vmatpush1.msra.mxu0 0.0
      %929 = vmatprep.subr.mxu0 0.0
      %930 = vmatpush1.msra.mxu0 0.0
      %931 = vmatprep.subr.mxu0 0.0
      %932 = vmatpush1.msra.mxu0 0.0
      %933 = vmatprep.subr.mxu0 0.0
      %934 = vmatpush1.msra.mxu0 0.0
      %935 = vmatprep.subr.mxu0 0.0
      %936 = vmatpush1.msra.mxu0 0.0
      %937 = vmatprep.subr.mxu0 0.0
      %938 = vmatpush1.msra.mxu0 0.0
      %939 = vmatprep.subr.mxu0 0.0
      %940 = vmatpush1.msra.mxu0 0.0
      %941 = vmatprep.subr.mxu0 0.0
      %942 = vmatpush1.msra.mxu0 0.0
      %943 = vmatprep.subr.mxu0 0.0
      %944 = vmatpush1.msra.mxu0 0.0
      %945 = vmatprep.subr.mxu0 0.0
      %946 = vmatpush1.msra.mxu0 0.0
      %947 = vmatprep.subr.mxu0 0.0
      %948 = vmatpush1.msra.mxu0 0.0
      %949 = vmatprep.subr.mxu0 0.0
      %950 = vmatpush1.msra.mxu0 0.0
      %951 = vmatprep.subr.mxu0 0.0
      %952 = vmatpush1.msra.mxu0 0.0
      %953 = vmatprep.subr.mxu0 0.0
      %954 = vmatpush1.msra.mxu0 0.0
      %955 = vmatprep.subr.mxu0 0.0
      %956 = vmatpush1.msra.mxu0 0.0
      %957 = vmatprep.subr.mxu0 0.0
      %958 = vmatpush1.msra.mxu0 0.0
      %959 = vmatprep.subr.mxu0 0.0
      %960 = vmatpush1.msra.mxu0 0.0
      %961 = vmatprep.subr.mxu0 0.0
      %962 = vmatpush1.msra.mxu0 0.0
      %963 = vmatprep.subr.mxu0 0.0
      %964 = vmatpush1.msra.mxu0 0.0
      %965 = vmatprep.subr.mxu0 0.0
      %966 = vmatpush1.msra.mxu0 0.0
      %967 = vmatprep.subr.mxu0 0.0
      %968 = vmatpush1.msra.mxu0 0.0
      %969 = vmatprep.subr.mxu0 0.0
      %970 = vmatpush1.msra.mxu0 0.0
      %971 = vmatprep.subr.mxu0 0.0
      %972 = vmatpush1.msra.mxu0 0.0
      %973 = vmatprep.mubr.f32.mxu0 0.0
      %974 = vmatmul.mubr.f32.gmra.mrb[0].mxu0 %v830
      %v975 = vpop.f32.mrb[0].mxu0
      %v976 = vadd.f32 0.0, %v975
      %v977 = vpop.f32.mrb[0].mxu0
      %978 = vdwg.mxu0
      %v979 = vadd.f32 %v814, %v905
      %v980 = vadd.f32 %v815, %v907
      %v981 = vadd.f32 %v816, %v976
      %v982 = vld [vmem:[%s1] sm:$0xff]
      %984 = vrot.lane.b32.xlu0 %v982, 112
      %v985 = vpop.permute.xlu0 %984
      %986 = vrot.lane.b32.xlu0 %v334, 109
      %v987 = vpop.permute.xlu0 %986
      %988 = vrot.lane.b32.xlu0 %v342, 109
      %v989 = vpop.permute.xlu0 %988
      %990 = vrot.lane.b32.xlu0 %v335, 109
      %v991 = vpop.permute.xlu0 %990
      %vm992 = vcmask 891904
      %v993 = vsel %vm992, %v987, %v989
      %v994 = vsel %vm992, %v989, %v991
      %v995 = vsel %vm352, %v985, 0
      %v997 = vsel %vm355, %v993, 0
      %v999 = vsel %vm355, %v994, 0
      %v1001 = vsel %vm355, %v991, 0
      %1003 = vmatprep.subr.mxu0 %v999
      %1004 = vmatpush1.msra.mxu0 %v997
      %1005 = vmatprep.subr.mxu0 0.0
      %1006 = vmatpush1.msra.mxu0 0.0
      %1007 = vmatprep.subr.mxu0 0.0
      %1008 = vmatpush1.msra.mxu0 0.0
      %1009 = vmatprep.subr.mxu0 0.0
      %1010 = vmatpush1.msra.mxu0 0.0
      %1011 = vmatprep.subr.mxu0 0.0
      %1012 = vmatpush1.msra.mxu0 0.0
      %1013 = vmatprep.subr.mxu0 0.0
      %1014 = vmatpush1.msra.mxu0 0.0
      %1015 = vmatprep.subr.mxu0 0.0
      %1016 = vmatpush1.msra.mxu0 0.0
      %1017 = vmatprep.subr.mxu0 0.0
      %1018 = vmatpush1.msra.mxu0 0.0
      %1019 = vmatprep.subr.mxu0 0.0
      %1020 = vmatpush1.msra.mxu0 0.0
      %1021 = vmatprep.subr.mxu0 0.0
      %1022 = vmatpush1.msra.mxu0 0.0
      %1023 = vmatprep.subr.mxu0 0.0
      %1024 = vmatpush1.msra.mxu0 0.0
      %1025 = vmatprep.subr.mxu0 0.0
      %1026 = vmatpush1.msra.mxu0 0.0
      %1027 = vmatprep.subr.mxu0 0.0
      %1028 = vmatpush1.msra.mxu0 0.0
      %1029 = vmatprep.subr.mxu0 0.0
      %1030 = vmatpush1.msra.mxu0 0.0
      %1031 = vmatprep.subr.mxu0 0.0
      %1032 = vmatpush1.msra.mxu0 0.0
      %1033 = vmatprep.subr.mxu0 0.0
      %1034 = vmatpush1.msra.mxu0 0.0
      %1035 = vmatprep.subr.mxu0 0.0
      %1036 = vmatpush1.msra.mxu0 0.0
      %1037 = vmatprep.subr.mxu0 0.0
      %1038 = vmatpush1.msra.mxu0 0.0
      %1039 = vmatprep.subr.mxu0 0.0
      %1040 = vmatpush1.msra.mxu0 0.0
      %1041 = vmatprep.subr.mxu0 0.0
      %1042 = vmatpush1.msra.mxu0 0.0
      %1043 = vmatprep.subr.mxu0 0.0
      %1044 = vmatpush1.msra.mxu0 0.0
      %1045 = vmatprep.subr.mxu0 0.0
      %1046 = vmatpush1.msra.mxu0 0.0
      %1047 = vmatprep.subr.mxu0 0.0
      %1048 = vmatpush1.msra.mxu0 0.0
      %1049 = vmatprep.subr.mxu0 0.0
      %1050 = vmatpush1.msra.mxu0 0.0
      %1051 = vmatprep.subr.mxu0 0.0
      %1052 = vmatpush1.msra.mxu0 0.0
      %1053 = vmatprep.subr.mxu0 0.0
      %1054 = vmatpush1.msra.mxu0 0.0
      %1055 = vmatprep.subr.mxu0 0.0
      %1056 = vmatpush1.msra.mxu0 0.0
      %1057 = vmatprep.subr.mxu0 0.0
      %1058 = vmatpush1.msra.mxu0 0.0
      %1059 = vmatprep.subr.mxu0 0.0
      %1060 = vmatpush1.msra.mxu0 0.0
      %1061 = vmatprep.subr.mxu0 0.0
      %1062 = vmatpush1.msra.mxu0 0.0
      %1063 = vmatprep.subr.mxu0 0.0
      %1064 = vmatpush1.msra.mxu0 0.0
      %1065 = vmatprep.subr.mxu0 0.0
      %1066 = vmatpush1.msra.mxu0 0.0
      %1067 = vmatprep.mubr.f32.mxu0 0.0
      %1068 = vmatmul.mubr.f32.gmra.mrb[0].mxu0 %v995
      %v1069 = vpop.f32.mrb[0].mxu0
      %v1070 = vadd.f32 0.0, %v1069
      %v1071 = vpop.f32.mrb[0].mxu0
      %v1072 = vadd.f32 0.0, %v1071
      %1073 = vdwg.mxu0
      %1074 = vmatprep.subr.mxu0 0.0
      %1075 = vmatpush1.msra.mxu0 %v1001
      %1076 = vmatprep.subr.mxu0 0.0
      %1077 = vmatpush1.msra.mxu0 0.0
      %1078 = vmatprep.subr.mxu0 0.0
      %1079 = vmatpush1.msra.mxu0 0.0
      %1080 = vmatprep.subr.mxu0 0.0
      %1081 = vmatpush1.msra.mxu0 0.0
      %1082 = vmatprep.subr.mxu0 0.0
      %1083 = vmatpush1.msra.mxu0 0.0
      %1084 = vmatprep.subr.mxu0 0.0
      %1085 = vmatpush1.msra.mxu0 0.0
      %1086 = vmatprep.subr.mxu0 0.0
      %1087 = vmatpush1.msra.mxu0 0.0
      %1088 = vmatprep.subr.mxu0 0.0
      %1089 = vmatpush1.msra.mxu0 0.0
      %1090 = vmatprep.subr.mxu0 0.0
      %1091 = vmatpush1.msra.mxu0 0.0
      %1092 = vmatprep.subr.mxu0 0.0
      %1093 = vmatpush1.msra.mxu0 0.0
      %1094 = vmatprep.subr.mxu0 0.0
      %1095 = vmatpush1.msra.mxu0 0.0
      %1096 = vmatprep.subr.mxu0 0.0
      %1097 = vmatpush1.msra.mxu0 0.0
      %1098 = vmatprep.subr.mxu0 0.0
      %1099 = vmatpush1.msra.mxu0 0.0
      %1100 = vmatprep.subr.mxu0 0.0
      %1101 = vmatpush1.msra.mxu0 0.0
      %1102 = vmatprep.subr.mxu0 0.0
      %1103 = vmatpush1.msra.mxu0 0.0
      %1104 = vmatprep.subr.mxu0 0.0
      %1105 = vmatpush1.msra.mxu0 0.0
      %1106 = vmatprep.subr.mxu0 0.0
      %1107 = vmatpush1.msra.mxu0 0.0
      %1108 = vmatprep.subr.mxu0 0.0
      %1109 = vmatpush1.msra.mxu0 0.0
      %1110 = vmatprep.subr.mxu0 0.0
      %1111 = vmatpush1.msra.mxu0 0.0
      %1112 = vmatprep.subr.mxu0 0.0
      %1113 = vmatpush1.msra.mxu0 0.0
      %1114 = vmatprep.subr.mxu0 0.0
      %1115 = vmatpush1.msra.mxu0 0.0
      %1116 = vmatprep.subr.mxu0 0.0
      %1117 = vmatpush1.msra.mxu0 0.0
      %1118 = vmatprep.subr.mxu0 0.0
      %1119 = vmatpush1.msra.mxu0 0.0
      %1120 = vmatprep.subr.mxu0 0.0
      %1121 = vmatpush1.msra.mxu0 0.0
      %1122 = vmatprep.subr.mxu0 0.0
      %1123 = vmatpush1.msra.mxu0 0.0
      %1124 = vmatprep.subr.mxu0 0.0
      %1125 = vmatpush1.msra.mxu0 0.0
      %1126 = vmatprep.subr.mxu0 0.0
      %1127 = vmatpush1.msra.mxu0 0.0
      %1128 = vmatprep.subr.mxu0 0.0
      %1129 = vmatpush1.msra.mxu0 0.0
      %1130 = vmatprep.subr.mxu0 0.0
      %1131 = vmatpush1.msra.mxu0 0.0
      %1132 = vmatprep.subr.mxu0 0.0
      %1133 = vmatpush1.msra.mxu0 0.0
      %1134 = vmatprep.subr.mxu0 0.0
      %1135 = vmatpush1.msra.mxu0 0.0
      %1136 = vmatprep.subr.mxu0 0.0
      %1137 = vmatpush1.msra.mxu0 0.0
      %1138 = vmatprep.mubr.f32.mxu0 0.0
      %1139 = vmatmul.mubr.f32.gmra.mrb[0].mxu0 %v995
      %v1140 = vpop.f32.mrb[0].mxu0
      %v1141 = vadd.f32 0.0, %v1140
      %v1142 = vpop.f32.mrb[0].mxu0
      %1143 = vdwg.mxu0
      %v1144 = vadd.f32 %v979, %v1070
      %v1145 = vadd.f32 %v980, %v1072
      %v1146 = vadd.f32 %v981, %v1141
      %v1147 = vld [vmem:[%s1] sm:$0xff]
      %1149 = vrot.lane.b32.xlu0 %v1147, 108
      %v1150 = vpop.permute.xlu0 %1149
      %1151 = vrot.lane.b32.xlu0 %v334, 108
      %v1152 = vpop.permute.xlu0 %1151
      %1153 = vrot.lane.b32.xlu0 %v342, 108
      %v1154 = vpop.permute.xlu0 %1153
      %1155 = vrot.lane.b32.xlu0 %v335, 108
      %v1156 = vpop.permute.xlu0 %1155
      %vm1157 = vcmask 883712
      %v1158 = vsel %vm1157, %v1152, %v1154
      %v1159 = vsel %vm1157, %v1154, %v1156
      %v1160 = vsel %vm352, %v1150, 0
      %v1162 = vsel %vm355, %v1158, 0
      %v1164 = vsel %vm355, %v1159, 0
      %v1166 = vsel %vm355, %v1156, 0
      %1168 = vmatprep.subr.mxu0 %v1164
      %1169 = vmatpush1.msra.mxu0 %v1162
      %1170 = vmatprep.subr.mxu0 0.0
      %1171 = vmatpush1.msra.mxu0 0.0
      %1172 = vmatprep.subr.mxu0 0.0
      %1173 = vmatpush1.msra.mxu0 0.0
      %1174 = vmatprep.subr.mxu0 0.0
      %1175 = vmatpush1.msra.mxu0 0.0
      %1176 = vmatprep.subr.mxu0 0.0
      %1177 = vmatpush1.msra.mxu0 0.0
      %1178 = vmatprep.subr.mxu0 0.0
      %1179 = vmatpush1.msra.mxu0 0.0
      %1180 = vmatprep.subr.mxu0 0.0
      %1181 = vmatpush1.msra.mxu0 0.0
      %1182 = vmatprep.subr.mxu0 0.0
      %1183 = vmatpush1.msra.mxu0 0.0
      %1184 = vmatprep.subr.mxu0 0.0
      %1185 = vmatpush1.msra.mxu0 0.0
      %1186 = vmatprep.subr.mxu0 0.0
      %1187 = vmatpush1.msra.mxu0 0.0
      %1188 = vmatprep.subr.mxu0 0.0
      %1189 = vmatpush1.msra.mxu0 0.0
      %1190 = vmatprep.subr.mxu0 0.0
      %1191 = vmatpush1.msra.mxu0 0.0
      %1192 = vmatprep.subr.mxu0 0.0
      %1193 = vmatpush1.msra.mxu0 0.0
      %1194 = vmatprep.subr.mxu0 0.0
      %1195 = vmatpush1.msra.mxu0 0.0
      %1196 = vmatprep.subr.mxu0 0.0
      %1197 = vmatpush1.msra.mxu0 0.0
      %1198 = vmatprep.subr.mxu0 0.0
      %1199 = vmatpush1.msra.mxu0 0.0
      %1200 = vmatprep.subr.mxu0 0.0
      %1201 = vmatpush1.msra.mxu0 0.0
      %1202 = vmatprep.subr.mxu0 0.0
      %1203 = vmatpush1.msra.mxu0 0.0
      %1204 = vmatprep.subr.mxu0 0.0
      %1205 = vmatpush1.msra.mxu0 0.0
      %1206 = vmatprep.subr.mxu0 0.0
      %1207 = vmatpush1.msra.mxu0 0.0
      %1208 = vmatprep.subr.mxu0 0.0
      %1209 = vmatpush1.msra.mxu0 0.0
      %1210 = vmatprep.subr.mxu0 0.0
      %1211 = vmatpush1.msra.mxu0 0.0
      %1212 = vmatprep.subr.mxu0 0.0
      %1213 = vmatpush1.msra.mxu0 0.0
      %1214 = vmatprep.subr.mxu0 0.0
      %1215 = vmatpush1.msra.mxu0 0.0
      %1216 = vmatprep.subr.mxu0 0.0
      %1217 = vmatpush1.msra.mxu0 0.0
      %1218 = vmatprep.subr.mxu0 0.0
      %1219 = vmatpush1.msra.mxu0 0.0
      %1220 = vmatprep.subr.mxu0 0.0
      %1221 = vmatpush1.msra.mxu0 0.0
      %1222 = vmatprep.subr.mxu0 0.0
      %1223 = vmatpush1.msra.mxu0 0.0
      %1224 = vmatprep.subr.mxu0 0.0
      %1225 = vmatpush1.msra.mxu0 0.0
      %1226 = vmatprep.subr.mxu0 0.0
      %1227 = vmatpush1.msra.mxu0 0.0
      %1228 = vmatprep.subr.mxu0 0.0
      %1229 = vmatpush1.msra.mxu0 0.0
      %1230 = vmatprep.subr.mxu0 0.0
      %1231 = vmatpush1.msra.mxu0 0.0
      %1232 = vmatprep.mubr.f32.mxu0 0.0
      %1233 = vmatmul.mubr.f32.gmra.mrb[0].mxu0 %v1160
      %v1234 = vpop.f32.mrb[0].mxu0
      %v1235 = vadd.f32 0.0, %v1234
      %v1236 = vpop.f32.mrb[0].mxu0
      %v1237 = vadd.f32 0.0, %v1236
      %1238 = vdwg.mxu0
      %1239 = vmatprep.subr.mxu0 0.0
      %1240 = vmatpush1.msra.mxu0 %v1166
      %1241 = vmatprep.subr.mxu0 0.0
      %1242 = vmatpush1.msra.mxu0 0.0
      %1243 = vmatprep.subr.mxu0 0.0
      %1244 = vmatpush1.msra.mxu0 0.0
      %1245 = vmatprep.subr.mxu0 0.0
      %1246 = vmatpush1.msra.mxu0 0.0
      %1247 = vmatprep.subr.mxu0 0.0
      %1248 = vmatpush1.msra.mxu0 0.0
      %1249 = vmatprep.subr.mxu0 0.0
      %1250 = vmatpush1.msra.mxu0 0.0
      %1251 = vmatprep.subr.mxu0 0.0
      %1252 = vmatpush1.msra.mxu0 0.0
      %1253 = vmatprep.subr.mxu0 0.0
      %1254 = vmatpush1.msra.mxu0 0.0
      %1255 = vmatprep.subr.mxu0 0.0
      %1256 = vmatpush1.msra.mxu0 0.0
      %1257 = vmatprep.subr.mxu0 0.0
      %1258 = vmatpush1.msra.mxu0 0.0
      %1259 = vmatprep.subr.mxu0 0.0
      %1260 = vmatpush1.msra.mxu0 0.0
      %1261 = vmatprep.subr.mxu0 0.0
      %1262 = vmatpush1.msra.mxu0 0.0
      %1263 = vmatprep.subr.mxu0 0.0
      %1264 = vmatpush1.msra.mxu0 0.0
      %1265 = vmatprep.subr.mxu0 0.0
      %1266 = vmatpush1.msra.mxu0 0.0
      %1267 = vmatprep.subr.mxu0 0.0
      %1268 = vmatpush1.msra.mxu0 0.0
      %1269 = vmatprep.subr.mxu0 0.0
      %1270 = vmatpush1.msra.mxu0 0.0
      %1271 = vmatprep.subr.mxu0 0.0
      %1272 = vmatpush1.msra.mxu0 0.0
      %1273 = vmatprep.subr.mxu0 0.0
      %1274 = vmatpush1.msra.mxu0 0.0
      %1275 = vmatprep.subr.mxu0 0.0
      %1276 = vmatpush1.msra.mxu0 0.0
      %1277 = vmatprep.subr.mxu0 0.0
      %1278 = vmatpush1.msra.mxu0 0.0
      %1279 = vmatprep.subr.mxu0 0.0
      %1280 = vmatpush1.msra.mxu0 0.0
      %1281 = vmatprep.subr.mxu0 0.0
      %1282 = vmatpush1.msra.mxu0 0.0
      %1283 = vmatprep.subr.mxu0 0.0
      %1284 = vmatpush1.msra.mxu0 0.0
      %1285 = vmatprep.subr.mxu0 0.0
      %1286 = vmatpush1.msra.mxu0 0.0
      %1287 = vmatprep.subr.mxu0 0.0
      %1288 = vmatpush1.msra.mxu0 0.0
      %1289 = vmatprep.subr.mxu0 0.0
      %1290 = vmatpush1.msra.mxu0 0.0
      %1291 = vmatprep.subr.mxu0 0.0
      %1292 = vmatpush1.msra.mxu0 0.0
      %1293 = vmatprep.subr.mxu0 0.0
      %1294 = vmatpush1.msra.mxu0 0.0
      %1295 = vmatprep.subr.mxu0 0.0
      %1296 = vmatpush1.msra.mxu0 0.0
      %1297 = vmatprep.subr.mxu0 0.0
      %1298 = vmatpush1.msra.mxu0 0.0
      %1299 = vmatprep.subr.mxu0 0.0
      %1300 = vmatpush1.msra.mxu0 0.0
      %1301 = vmatprep.subr.mxu0 0.0
      %1302 = vmatpush1.msra.mxu0 0.0
      %1303 = vmatprep.mubr.f32.mxu0 0.0
      %1304 = vmatmul.mubr.f32.gmra.mrb[0].mxu0 %v1160
      %v1305 = vpop.f32.mrb[0].mxu0
      %v1306 = vadd.f32 0.0, %v1305
      %v1307 = vpop.f32.mrb[0].mxu0
      %1308 = vdwg.mxu0
      %v1309 = vadd.f32 %v1144, %v1235
      %v1310 = vadd.f32 %v1145, %v1237
      %v1311 = vadd.f32 %v1146, %v1306
      %v1312 = vld [vmem:[%s1] sm:$0xff]
      %1314 = vrot.lane.b32.xlu0 %v1312, 104
      %v1315 = vpop.permute.xlu0 %1314
      %1316 = vrot.lane.b32.xlu0 %v334, 92
      %v1317 = vpop.permute.xlu0 %1316
      %1318 = vrot.lane.b32.xlu0 %v342, 92
      %v1319 = vpop.permute.xlu0 %1318
      %1320 = vrot.lane.b32.xlu0 %v335, 92
      %v1321 = vpop.permute.xlu0 %1320
      %vm1322 = vcmask 752640
      %v1323 = vsel %vm1322, %v1317, %v1319
      %v1324 = vsel %vm1322, %v1319, %v1321
      %v1325 = vsel %vm352, %v1315, 0
      %v1327 = vsel %vm355, %v1323, 0
      %v1329 = vsel %vm355, %v1324, 0
      %v1331 = vsel %vm355, %v1321, 0
      %1333 = vmatprep.subr.mxu0 %v1329
      %1334 = vmatpush1.msra.mxu0 %v1327
      %1335 = vmatprep.subr.mxu0 0.0
      %1336 = vmatpush1.msra.mxu0 0.0
      %1337 = vmatprep.subr.mxu0 0.0
      %1338 = vmatpush1.msra.mxu0 0.0
      %1339 = vmatprep.subr.mxu0 0.0
      %1340 = vmatpush1.msra.mxu0 0.0
      %1341 = vmatprep.subr.mxu0 0.0
      %1342 = vmatpush1.msra.mxu0 0.0
      %1343 = vmatprep.subr.mxu0 0.0
      %1344 = vmatpush1.msra.mxu0 0.0
      %1345 = vmatprep.subr.mxu0 0.0
      %1346 = vmatpush1.msra.mxu0 0.0
      %1347 = vmatprep.subr.mxu0 0.0
      %1348 = vmatpush1.msra.mxu0 0.0
      %1349 = vmatprep.subr.mxu0 0.0
      %1350 = vmatpush1.msra.mxu0 0.0
      %1351 = vmatprep.subr.mxu0 0.0
      %1352 = vmatpush1.msra.mxu0 0.0
      %1353 = vmatprep.subr.mxu0 0.0
      %1354 = vmatpush1.msra.mxu0 0.0
      %1355 = vmatprep.subr.mxu0 0.0
      %1356 = vmatpush1.msra.mxu0 0.0
      %1357 = vmatprep.subr.mxu0 0.0
      %1358 = vmatpush1.msra.mxu0 0.0
      %1359 = vmatprep.subr.mxu0 0.0
      %1360 = vmatpush1.msra.mxu0 0.0
      %1361 = vmatprep.subr.mxu0 0.0
      %1362 = vmatpush1.msra.mxu0 0.0
      %1363 = vmatprep.subr.mxu0 0.0
      %1364 = vmatpush1.msra.mxu0 0.0
      %1365 = vmatprep.subr.mxu0 0.0
      %1366 = vmatpush1.msra.mxu0 0.0
      %1367 = vmatprep.subr.mxu0 0.0
      %1368 = vmatpush1.msra.mxu0 0.0
      %1369 = vmatprep.subr.mxu0 0.0
      %1370 = vmatpush1.msra.mxu0 0.0
      %1371 = vmatprep.subr.mxu0 0.0
      %1372 = vmatpush1.msra.mxu0 0.0
      %1373 = vmatprep.subr.mxu0 0.0
      %1374 = vmatpush1.msra.mxu0 0.0
      %1375 = vmatprep.subr.mxu0 0.0
      %1376 = vmatpush1.msra.mxu0 0.0
      %1377 = vmatprep.subr.mxu0 0.0
      %1378 = vmatpush1.msra.mxu0 0.0
      %1379 = vmatprep.subr.mxu0 0.0
      %1380 = vmatpush1.msra.mxu0 0.0
      %1381 = vmatprep.subr.mxu0 0.0
      %1382 = vmatpush1.msra.mxu0 0.0
      %1383 = vmatprep.subr.mxu0 0.0
      %1384 = vmatpush1.msra.mxu0 0.0
      %1385 = vmatprep.subr.mxu0 0.0
      %1386 = vmatpush1.msra.mxu0 0.0
      %1387 = vmatprep.subr.mxu0 0.0
      %1388 = vmatpush1.msra.mxu0 0.0
      %1389 = vmatprep.subr.mxu0 0.0
      %1390 = vmatpush1.msra.mxu0 0.0
      %1391 = vmatprep.subr.mxu0 0.0
      %1392 = vmatpush1.msra.mxu0 0.0
      %1393 = vmatprep.subr.mxu0 0.0
      %1394 = vmatpush1.msra.mxu0 0.0
      %1395 = vmatprep.subr.mxu0 0.0
      %1396 = vmatpush1.msra.mxu0 0.0
      %1397 = vmatprep.mubr.f32.mxu0 0.0
      %1398 = vmatmul.mubr.f32.gmra.mrb[0].mxu0 %v1325
      %v1399 = vpop.f32.mrb[0].mxu0
      %v1400 = vadd.f32 0.0, %v1399
      %v1401 = vpop.f32.mrb[0].mxu0
      %v1402 = vadd.f32 0.0, %v1401
      %1403 = vdwg.mxu0
      %1404 = vmatprep.subr.mxu0 0.0
      %1405 = vmatpush1.msra.mxu0 %v1331
      %1406 = vmatprep.subr.mxu0 0.0
      %1407 = vmatpush1.msra.mxu0 0.0
      %1408 = vmatprep.subr.mxu0 0.0
      %1409 = vmatpush1.msra.mxu0 0.0
      %1410 = vmatprep.subr.mxu0 0.0
      %1411 = vmatpush1.msra.mxu0 0.0
      %1412 = vmatprep.subr.mxu0 0.0
      %1413 = vmatpush1.msra.mxu0 0.0
      %1414 = vmatprep.subr.mxu0 0.0
      %1415 = vmatpush1.msra.mxu0 0.0
      %1416 = vmatprep.subr.mxu0 0.0
      %1417 = vmatpush1.msra.mxu0 0.0
      %1418 = vmatprep.subr.mxu0 0.0
      %1419 = vmatpush1.msra.mxu0 0.0
      %1420 = vmatprep.subr.mxu0 0.0
      %1421 = vmatpush1.msra.mxu0 0.0
      %1422 = vmatprep.subr.mxu0 0.0
      %1423 = vmatpush1.msra.mxu0 0.0
      %1424 = vmatprep.subr.mxu0 0.0
      %1425 = vmatpush1.msra.mxu0 0.0
      %1426 = vmatprep.subr.mxu0 0.0
      %1427 = vmatpush1.msra.mxu0 0.0
      %1428 = vmatprep.subr.mxu0 0.0
      %1429 = vmatpush1.msra.mxu0 0.0
      %1430 = vmatprep.subr.mxu0 0.0
      %1431 = vmatpush1.msra.mxu0 0.0
      %1432 = vmatprep.subr.mxu0 0.0
      %1433 = vmatpush1.msra.mxu0 0.0
      %1434 = vmatprep.subr.mxu0 0.0
      %1435 = vmatpush1.msra.mxu0 0.0
      %1436 = vmatprep.subr.mxu0 0.0
      %1437 = vmatpush1.msra.mxu0 0.0
      %1438 = vmatprep.subr.mxu0 0.0
      %1439 = vmatpush1.msra.mxu0 0.0
      %1440 = vmatprep.subr.mxu0 0.0
      %1441 = vmatpush1.msra.mxu0 0.0
      %1442 = vmatprep.subr.mxu0 0.0
      %1443 = vmatpush1.msra.mxu0 0.0
      %1444 = vmatprep.subr.mxu0 0.0
      %1445 = vmatpush1.msra.mxu0 0.0
      %1446 = vmatprep.subr.mxu0 0.0
      %1447 = vmatpush1.msra.mxu0 0.0
      %1448 = vmatprep.subr.mxu0 0.0
      %1449 = vmatpush1.msra.mxu0 0.0
      %1450 = vmatprep.subr.mxu0 0.0
      %1451 = vmatpush1.msra.mxu0 0.0
      %1452 = vmatprep.subr.mxu0 0.0
      %1453 = vmatpush1.msra.mxu0 0.0
      %1454 = vmatprep.subr.mxu0 0.0
      %1455 = vmatpush1.msra.mxu0 0.0
      %1456 = vmatprep.subr.mxu0 0.0
      %1457 = vmatpush1.msra.mxu0 0.0
      %1458 = vmatprep.subr.mxu0 0.0
      %1459 = vmatpush1.msra.mxu0 0.0
      %1460 = vmatprep.subr.mxu0 0.0
      %1461 = vmatpush1.msra.mxu0 0.0
      %1462 = vmatprep.subr.mxu0 0.0
      %1463 = vmatpush1.msra.mxu0 0.0
      %1464 = vmatprep.subr.mxu0 0.0
      %1465 = vmatpush1.msra.mxu0 0.0
      %1466 = vmatprep.subr.mxu0 0.0
      %1467 = vmatpush1.msra.mxu0 0.0
      %1468 = vmatprep.mubr.f32.mxu0 0.0
      %1469 = vmatmul.mubr.f32.gmra.mrb[0].mxu0 %v1325
      %v1470 = vpop.f32.mrb[0].mxu0
      %v1471 = vadd.f32 0.0, %v1470
      %v1472 = vpop.f32.mrb[0].mxu0
      %1473 = vdwg.mxu0
      %v1474 = vadd.f32 %v1309, %v1400
      %v1475 = vadd.f32 %v1310, %v1402
      %v1476 = vadd.f32 %v1311, %v1471
      %v1477 = vld [vmem:[%s1] sm:$0xff]
      %1479 = vrot.lane.b32.xlu0 %v1477, 100
      %v1480 = vpop.permute.xlu0 %1479
      %1481 = vrot.lane.b32.xlu0 %v334, 91
      %v1482 = vpop.permute.xlu0 %1481
      %1483 = vrot.lane.b32.xlu0 %v342, 91
      %v1484 = vpop.permute.xlu0 %1483
      %1485 = vrot.lane.b32.xlu0 %v335, 91
      %v1486 = vpop.permute.xlu0 %1485
      %vm1487 = vcmask 744448
      %v1488 = vsel %vm1487, %v1482, %v1484
      %v1489 = vsel %vm1487, %v1484, %v1486
      %v1490 = vsel %vm352, %v1480, 0
      %v1492 = vsel %vm355, %v1488, 0
      %v1494 = vsel %vm355, %v1489, 0
      %v1496 = vsel %vm355, %v1486, 0
      %1498 = vmatprep.subr.mxu0 %v1494
      %1499 = vmatpush1.msra.mxu0 %v1492
      %1500 = vmatprep.subr.mxu0 0.0
      %1501 = vmatpush1.msra.mxu0 0.0
      %1502 = vmatprep.subr.mxu0 0.0
      %1503 = vmatpush1.msra.mxu0 0.0
      %1504 = vmatprep.subr.mxu0 0.0
      %1505 = vmatpush1.msra.mxu0 0.0
      %1506 = vmatprep.subr.mxu0 0.0
      %1507 = vmatpush1.msra.mxu0 0.0
      %1508 = vmatprep.subr.mxu0 0.0
      %1509 = vmatpush1.msra.mxu0 0.0
      %1510 = vmatprep.subr.mxu0 0.0
      %1511 = vmatpush1.msra.mxu0 0.0
      %1512 = vmatprep.subr.mxu0 0.0
      %1513 = vmatpush1.msra.mxu0 0.0
      %1514 = vmatprep.subr.mxu0 0.0
      %1515 = vmatpush1.msra.mxu0 0.0
      %1516 = vmatprep.subr.mxu0 0.0
      %1517 = vmatpush1.msra.mxu0 0.0
      %1518 = vmatprep.subr.mxu0 0.0
      %1519 = vmatpush1.msra.mxu0 0.0
      %1520 = vmatprep.subr.mxu0 0.0
      %1521 = vmatpush1.msra.mxu0 0.0
      %1522 = vmatprep.subr.mxu0 0.0
      %1523 = vmatpush1.msra.mxu0 0.0
      %1524 = vmatprep.subr.mxu0 0.0
      %1525 = vmatpush1.msra.mxu0 0.0
      %1526 = vmatprep.subr.mxu0 0.0
      %1527 = vmatpush1.msra.mxu0 0.0
      %1528 = vmatprep.subr.mxu0 0.0
      %1529 = vmatpush1.msra.mxu0 0.0
      %1530 = vmatprep.subr.mxu0 0.0
      %1531 = vmatpush1.msra.mxu0 0.0
      %1532 = vmatprep.subr.mxu0 0.0
      %1533 = vmatpush1.msra.mxu0 0.0
      %1534 = vmatprep.subr.mxu0 0.0
      %1535 = vmatpush1.msra.mxu0 0.0
      %1536 = vmatprep.subr.mxu0 0.0
      %1537 = vmatpush1.msra.mxu0 0.0
      %1538 = vmatprep.subr.mxu0 0.0
      %1539 = vmatpush1.msra.mxu0 0.0
      %1540 = vmatprep.subr.mxu0 0.0
      %1541 = vmatpush1.msra.mxu0 0.0
      %1542 = vmatprep.subr.mxu0 0.0
      %1543 = vmatpush1.msra.mxu0 0.0
      %1544 = vmatprep.subr.mxu0 0.0
      %1545 = vmatpush1.msra.mxu0 0.0
      %1546 = vmatprep.subr.mxu0 0.0
      %1547 = vmatpush1.msra.mxu0 0.0
      %1548 = vmatprep.subr.mxu0 0.0
      %1549 = vmatpush1.msra.mxu0 0.0
      %1550 = vmatprep.subr.mxu0 0.0
      %1551 = vmatpush1.msra.mxu0 0.0
      %1552 = vmatprep.subr.mxu0 0.0
      %1553 = vmatpush1.msra.mxu0 0.0
      %1554 = vmatprep.subr.mxu0 0.0
      %1555 = vmatpush1.msra.mxu0 0.0
      %1556 = vmatprep.subr.mxu0 0.0
      %1557 = vmatpush1.msra.mxu0 0.0
      %1558 = vmatprep.subr.mxu0 0.0
      %1559 = vmatpush1.msra.mxu0 0.0
      %1560 = vmatprep.subr.mxu0 0.0
      %1561 = vmatpush1.msra.mxu0 0.0
      %1562 = vmatprep.mubr.f32.mxu0 0.0
      %1563 = vmatmul.mubr.f32.gmra.mrb[0].mxu0 %v1490
      %v1564 = vpop.f32.mrb[0].mxu0
      %v1565 = vadd.f32 0.0, %v1564
      %v1566 = vpop.f32.mrb[0].mxu0
      %v1567 = vadd.f32 0.0, %v1566
      %1568 = vdwg.mxu0
      %1569 = vmatprep.subr.mxu0 0.0
      %1570 = vmatpush1.msra.mxu0 %v1496
      %1571 = vmatprep.subr.mxu0 0.0
      %1572 = vmatpush1.msra.mxu0 0.0
      %1573 = vmatprep.subr.mxu0 0.0
      %1574 = vmatpush1.msra.mxu0 0.0
      %1575 = vmatprep.subr.mxu0 0.0
      %1576 = vmatpush1.msra.mxu0 0.0
      %1577 = vmatprep.subr.mxu0 0.0
      %1578 = vmatpush1.msra.mxu0 0.0
      %1579 = vmatprep.subr.mxu0 0.0
      %1580 = vmatpush1.msra.mxu0 0.0
      %1581 = vmatprep.subr.mxu0 0.0
      %1582 = vmatpush1.msra.mxu0 0.0
      %1583 = vmatprep.subr.mxu0 0.0
      %1584 = vmatpush1.msra.mxu0 0.0
      %1585 = vmatprep.subr.mxu0 0.0
      %1586 = vmatpush1.msra.mxu0 0.0
      %1587 = vmatprep.subr.mxu0 0.0
      %1588 = vmatpush1.msra.mxu0 0.0
      %1589 = vmatprep.subr.mxu0 0.0
      %1590 = vmatpush1.msra.mxu0 0.0
      %1591 = vmatprep.subr.mxu0 0.0
      %1592 = vmatpush1.msra.mxu0 0.0
      %1593 = vmatprep.subr.mxu0 0.0
      %1594 = vmatpush1.msra.mxu0 0.0
      %1595 = vmatprep.subr.mxu0 0.0
      %1596 = vmatpush1.msra.mxu0 0.0
      %1597 = vmatprep.subr.mxu0 0.0
      %1598 = vmatpush1.msra.mxu0 0.0
      %1599 = vmatprep.subr.mxu0 0.0
      %1600 = vmatpush1.msra.mxu0 0.0
      %1601 = vmatprep.subr.mxu0 0.0
      %1602 = vmatpush1.msra.mxu0 0.0
      %1603 = vmatprep.subr.mxu0 0.0
      %1604 = vmatpush1.msra.mxu0 0.0
      %1605 = vmatprep.subr.mxu0 0.0
      %1606 = vmatpush1.msra.mxu0 0.0
      %1607 = vmatprep.subr.mxu0 0.0
      %1608 = vmatpush1.msra.mxu0 0.0
      %1609 = vmatprep.subr.mxu0 0.0
      %1610 = vmatpush1.msra.mxu0 0.0
      %1611 = vmatprep.subr.mxu0 0.0
      %1612 = vmatpush1.msra.mxu0 0.0
      %1613 = vmatprep.subr.mxu0 0.0
      %1614 = vmatpush1.msra.mxu0 0.0
      %1615 = vmatprep.subr.mxu0 0.0
      %1616 = vmatpush1.msra.mxu0 0.0
      %1617 = vmatprep.subr.mxu0 0.0
      %1618 = vmatpush1.msra.mxu0 0.0
      %1619 = vmatprep.subr.mxu0 0.0
      %1620 = vmatpush1.msra.mxu0 0.0
      %1621 = vmatprep.subr.mxu0 0.0
      %1622 = vmatpush1.msra.mxu0 0.0
      %1623 = vmatprep.subr.mxu0 0.0
      %1624 = vmatpush1.msra.mxu0 0.0
      %1625 = vmatprep.subr.mxu0 0.0
      %1626 = vmatpush1.msra.mxu0 0.0
      %1627 = vmatprep.subr.mxu0 0.0
      %1628 = vmatpush1.msra.mxu0 0.0
      %1629 = vmatprep.subr.mxu0 0.0
      %1630 = vmatpush1.msra.mxu0 0.0
      %1631 = vmatprep.subr.mxu0 0.0
      %1632 = vmatpush1.msra.mxu0 0.0
      %1633 = vmatprep.mubr.f32.mxu0 0.0
      %1634 = vmatmul.mubr.f32.gmra.mrb[0].mxu0 %v1490
      %v1635 = vpop.f32.mrb[0].mxu0
      %v1636 = vadd.f32 0.0, %v1635
      %v1637 = vpop.f32.mrb[0].mxu0
      %1638 = vdwg.mxu0
      %v1639 = vadd.f32 %v1474, %v1565
      %v1640 = vadd.f32 %v1475, %v1567
      %v1641 = vadd.f32 %v1476, %v1636
      %v1642 = vld [vmem:[%s1] sm:$0xff]
      %1644 = vrot.lane.b32.xlu0 %v1642, 96
      %v1645 = vpop.permute.xlu0 %1644
      %1646 = vrot.lane.b32.xlu0 %v334, 90
      %v1647 = vpop.permute.xlu0 %1646
      %1648 = vrot.lane.b32.xlu0 %v342, 90
      %v1649 = vpop.permute.xlu0 %1648
      %1650 = vrot.lane.b32.xlu0 %v335, 90
      %v1651 = vpop.permute.xlu0 %1650
      %vm1652 = vcmask 736256
      %v1653 = vsel %vm1652, %v1647, %v1649
      %v1654 = vsel %vm1652, %v1649, %v1651
      %v1655 = vsel %vm352, %v1645, 0
      %v1657 = vsel %vm355, %v1653, 0
      %v1659 = vsel %vm355, %v1654, 0
      %v1661 = vsel %vm355, %v1651, 0
      %1663 = vmatprep.subr.mxu0 %v1659
      %1664 = vmatpush1.msra.mxu0 %v1657
      %1665 = vmatprep.subr.mxu0 0.0
      %1666 = vmatpush1.msra.mxu0 0.0
      %1667 = vmatprep.subr.mxu0 0.0
      %1668 = vmatpush1.msra.mxu0 0.0
      %1669 = vmatprep.subr.mxu0 0.0
      %1670 = vmatpush1.msra.mxu0 0.0
      %1671 = vmatprep.subr.mxu0 0.0
      %1672 = vmatpush1.msra.mxu0 0.0
      %1673 = vmatprep.subr.mxu0 0.0
      %1674 = vmatpush1.msra.mxu0 0.0
      %1675 = vmatprep.subr.mxu0 0.0
      %1676 = vmatpush1.msra.mxu0 0.0
      %1677 = vmatprep.subr.mxu0 0.0
      %1678 = vmatpush1.msra.mxu0 0.0
      %1679 = vmatprep.subr.mxu0 0.0
      %1680 = vmatpush1.msra.mxu0 0.0
      %1681 = vmatprep.subr.mxu0 0.0
      %1682 = vmatpush1.msra.mxu0 0.0
      %1683 = vmatprep.subr.mxu0 0.0
      %1684 = vmatpush1.msra.mxu0 0.0
      %1685 = vmatprep.subr.mxu0 0.0
      %1686 = vmatpush1.msra.mxu0 0.0
      %1687 = vmatprep.subr.mxu0 0.0
      %1688 = vmatpush1.msra.mxu0 0.0
      %1689 = vmatprep.subr.mxu0 0.0
      %1690 = vmatpush1.msra.mxu0 0.0
      %1691 = vmatprep.subr.mxu0 0.0
      %1692 = vmatpush1.msra.mxu0 0.0
      %1693 = vmatprep.subr.mxu0 0.0
      %1694 = vmatpush1.msra.mxu0 0.0
      %1695 = vmatprep.subr.mxu0 0.0
      %1696 = vmatpush1.msra.mxu0 0.0
      %1697 = vmatprep.subr.mxu0 0.0
      %1698 = vmatpush1.msra.mxu0 0.0
      %1699 = vmatprep.subr.mxu0 0.0
      %1700 = vmatpush1.msra.mxu0 0.0
      %1701 = vmatprep.subr.mxu0 0.0
      %1702 = vmatpush1.msra.mxu0 0.0
      %1703 = vmatprep.subr.mxu0 0.0
      %1704 = vmatpush1.msra.mxu0 0.0
      %1705 = vmatprep.subr.mxu0 0.0
      %1706 = vmatpush1.msra.mxu0 0.0
      %1707 = vmatprep.subr.mxu0 0.0
      %1708 = vmatpush1.msra.mxu0 0.0
      %1709 = vmatprep.subr.mxu0 0.0
      %1710 = vmatpush1.msra.mxu0 0.0
      %1711 = vmatprep.subr.mxu0 0.0
      %1712 = vmatpush1.msra.mxu0 0.0
      %1713 = vmatprep.subr.mxu0 0.0
      %1714 = vmatpush1.msra.mxu0 0.0
      %1715 = vmatprep.subr.mxu0 0.0
      %1716 = vmatpush1.msra.mxu0 0.0
      %1717 = vmatprep.subr.mxu0 0.0
      %1718 = vmatpush1.msra.mxu0 0.0
      %1719 = vmatprep.subr.mxu0 0.0
      %1720 = vmatpush1.msra.mxu0 0.0
      %1721 = vmatprep.subr.mxu0 0.0
      %1722 = vmatpush1.msra.mxu0 0.0
      %1723 = vmatprep.subr.mxu0 0.0
      %1724 = vmatpush1.msra.mxu0 0.0
      %1725 = vmatprep.subr.mxu0 0.0
      %1726 = vmatpush1.msra.mxu0 0.0
      %1727 = vmatprep.mubr.f32.mxu0 0.0
      %1728 = vmatmul.mubr.f32.gmra.mrb[0].mxu0 %v1655
      %v1729 = vpop.f32.mrb[0].mxu0
      %v1730 = vadd.f32 0.0, %v1729
      %v1731 = vpop.f32.mrb[0].mxu0
      %v1732 = vadd.f32 0.0, %v1731
      %1733 = vdwg.mxu0
      %1734 = vmatprep.subr.mxu0 0.0
      %1735 = vmatpush1.msra.mxu0 %v1661
      %1736 = vmatprep.subr.mxu0 0.0
      %1737 = vmatpush1.msra.mxu0 0.0
      %1738 = vmatprep.subr.mxu0 0.0
      %1739 = vmatpush1.msra.mxu0 0.0
      %1740 = vmatprep.subr.mxu0 0.0
      %1741 = vmatpush1.msra.mxu0 0.0
      %1742 = vmatprep.subr.mxu0 0.0
      %1743 = vmatpush1.msra.mxu0 0.0
      %1744 = vmatprep.subr.mxu0 0.0
      %1745 = vmatpush1.msra.mxu0 0.0
      %1746 = vmatprep.subr.mxu0 0.0
      %1747 = vmatpush1.msra.mxu0 0.0
      %1748 = vmatprep.subr.mxu0 0.0
      %1749 = vmatpush1.msra.mxu0 0.0
      %1750 = vmatprep.subr.mxu0 0.0
      %1751 = vmatpush1.msra.mxu0 0.0
      %1752 = vmatprep.subr.mxu0 0.0
      %1753 = vmatpush1.msra.mxu0 0.0
      %1754 = vmatprep.subr.mxu0 0.0
      %1755 = vmatpush1.msra.mxu0 0.0
      %1756 = vmatprep.subr.mxu0 0.0
      %1757 = vmatpush1.msra.mxu0 0.0
      %1758 = vmatprep.subr.mxu0 0.0
      %1759 = vmatpush1.msra.mxu0 0.0
      %1760 = vmatprep.subr.mxu0 0.0
      %1761 = vmatpush1.msra.mxu0 0.0
      %1762 = vmatprep.subr.mxu0 0.0
      %1763 = vmatpush1.msra.mxu0 0.0
      %1764 = vmatprep.subr.mxu0 0.0
      %1765 = vmatpush1.msra.mxu0 0.0
      %1766 = vmatprep.subr.mxu0 0.0
      %1767 = vmatpush1.msra.mxu0 0.0
      %1768 = vmatprep.subr.mxu0 0.0
      %1769 = vmatpush1.msra.mxu0 0.0
      %1770 = vmatprep.subr.mxu0 0.0
      %1771 = vmatpush1.msra.mxu0 0.0
      %1772 = vmatprep.subr.mxu0 0.0
      %1773 = vmatpush1.msra.mxu0 0.0
      %1774 = vmatprep.subr.mxu0 0.0
      %1775 = vmatpush1.msra.mxu0 0.0
      %1776 = vmatprep.subr.mxu0 0.0
      %1777 = vmatpush1.msra.mxu0 0.0
      %1778 = vmatprep.subr.mxu0 0.0
      %1779 = vmatpush1.msra.mxu0 0.0
      %1780 = vmatprep.subr.mxu0 0.0
      %1781 = vmatpush1.msra.mxu0 0.0
      %1782 = vmatprep.subr.mxu0 0.0
      %1783 = vmatpush1.msra.mxu0 0.0
      %1784 = vmatprep.subr.mxu0 0.0
      %1785 = vmatpush1.msra.mxu0 0.0
      %1786 = vmatprep.subr.mxu0 0.0
      %1787 = vmatpush1.msra.mxu0 0.0
      %1788 = vmatprep.subr.mxu0 0.0
      %1789 = vmatpush1.msra.mxu0 0.0
      %1790 = vmatprep.subr.mxu0 0.0
      %1791 = vmatpush1.msra.mxu0 0.0
      %1792 = vmatprep.subr.mxu0 0.0
      %1793 = vmatpush1.msra.mxu0 0.0
      %1794 = vmatprep.subr.mxu0 0.0
      %1795 = vmatpush1.msra.mxu0 0.0
      %1796 = vmatprep.subr.mxu0 0.0
      %1797 = vmatpush1.msra.mxu0 0.0
      %1798 = vmatprep.mubr.f32.mxu0 0.0
      %1799 = vmatmul.mubr.f32.gmra.mrb[0].mxu0 %v1655
      %v1800 = vpop.f32.mrb[0].mxu0
      %v1801 = vadd.f32 0.0, %v1800
      %v1802 = vpop.f32.mrb[0].mxu0
      %1803 = vdwg.mxu0
      %v1804 = vadd.f32 %v1639, %v1730
      %v1805 = vadd.f32 %v1640, %v1732
      %v1806 = vadd.f32 %v1641, %v1801
      %v1807 = vld [vmem:[%s2] sm:$0xff]
      %1809 = vset.pattern.permute.xlu0 0
      %1810 = vperm.xlu0 %1809, %v1807
      %v1811 = vpop.permute.xlu0 %1810
      %v1813 = vadd.f32 %v1804, %v1811
      %v1814 = vadd.f32 %v1805, %v1811
      %v1815 = vadd.f32 %v1806, %v1811
      %v1816 = vmax.f32 %v1813, 0.0
      %v1817 = vmax.f32 %v1814, 0.0
      %v1818 = vmax.f32 %v1815, 0.0
      %1822 = vrot.lane.b32.xlu0 %v1816, 127
      %v1823 = vpop.permute.xlu0 %1822
      %1824 = vrot.lane.b32.xlu0 %v1817, 127
      %v1825 = vpop.permute.xlu0 %1824
      %1826 = vrot.lane.b32.xlu0 %v1818, 127
      %v1827 = vpop.permute.xlu0 %1826
      %v1828 = vsel %vm349, %v1823, %v1825
      %v1829 = vsel %vm349, %v1825, %v1827
      %v1833 = vmax.f32 %v1816, %v1828
      %v1834 = vmax.f32 %v1817, %v1829
      %v1835 = vmax.f32 %v1818, %v1827
      %1836 = vrot.lane.b32.xlu0 %v1816, 110
      %v1837 = vpop.permute.xlu0 %1836
      %1838 = vrot.lane.b32.xlu0 %v1817, 110
      %v1839 = vpop.permute.xlu0 %1838
      %1840 = vrot.lane.b32.xlu0 %v1818, 110
      %v1841 = vpop.permute.xlu0 %1840
      %v1842 = vsel %vm827, %v1837, %v1839
      %v1843 = vsel %vm827, %v1839, %v1841
      %v1847 = vmax.f32 %v1833, %v1842
      %v1848 = vmax.f32 %v1834, %v1843
      %v1849 = vmax.f32 %v1835, %v1841
      %1850 = vrot.lane.b32.xlu0 %v1816, 109
      %v1851 = vpop.permute.xlu0 %1850
      %1852 = vrot.lane.b32.xlu0 %v1817, 109
      %v1853 = vpop.permute.xlu0 %1852
      %1854 = vrot.lane.b32.xlu0 %v1818, 109
      %v1855 = vpop.permute.xlu0 %1854
      %v1856 = vsel %vm992, %v1851, %v1853
      %v1857 = vsel %vm992, %v1853, %v1855
      %v1861 = vmax.f32 %v1847, %v1856
      %v1862 = vmax.f32 %v1848, %v1857
      %v1863 = vmax.f32 %v1849, %v1855
      %vm1864 = vcmp.gt.f32.partialorder %v333, 0.5
      %v1865 = vsel %vm1864, 1, 0
      %v1866 = vlaneseq
      %v1867 = vshrl.u32 %v1866, 7
      %v1868 = vsub.s32 0, %v1867
      %v1869 = vrot.slane %v1865, %v1868
      %v1870 = vlaneseq
      %v1871 = vshrl.u32 %v1870, 7
      %v1872 = vsub.s32 1, %v1871
      %v1873 = vrot.slane %v1865, %v1872
      %v1874 = vlaneseq
      %v1875 = vshrl.u32 %v1874, 7
      %v1876 = vsub.s32 2, %v1875
      %v1877 = vrot.slane %v1865, %v1876
      %vm1878 = vcmp.eq.s32.totalorder %v1869, 1
      %vm1879 = vcmp.eq.s32.totalorder %v1873, 1
      %vm1880 = vcmp.eq.s32.totalorder %v1877, 1
      %v1881 = vsel %vm1878, %v1861, -1e+30
      %v1882 = vsel %vm1879, %v1862, -1e+30
      %v1883 = vsel %vm1880, %v1863, -1e+30
      %v1885 = vlaneseq
      %v1886 = vshrl.u32 %v1885, 7
      %v1887 = vsub.s32 0, %v1886
      %v1888 = vrot.slane %v333, %v1887
      %v1889 = vlaneseq
      %v1890 = vshrl.u32 %v1889, 7
      %v1891 = vsub.s32 1, %v1890
      %v1892 = vrot.slane %v333, %v1891
      %v1893 = vlaneseq
      %v1894 = vshrl.u32 %v1893, 7
      %v1895 = vsub.s32 2, %v1894
      %v1896 = vrot.slane %v333, %v1895
      %v1900 = vmul.f32 %v1861, %v1888
      %v1901 = vmul.f32 %v1862, %v1892
      %v1902 = vmul.f32 %v1863, %v1896
      %v1903 = vadd.f32 %v1900, %v1901
      %vm1904 = vcmask 89088
      %v1905 = vsel %vm1904, %v1902, 0.0
      %v1906 = vadd.f32 %v1903, %v1905
      %1907 = vadd.xlane.f32.xlu0 %v1906
      %v1908 = vpop.xlane.xlu0 %1907
      %v1909 = vmul.f32 %v1908, 0.0044444446
      %v1910 = vsel %vm1904, %v1883, -inf
      %v1911 = vmax.f32 %v1881, %v1882
      %v1912 = vmax.f32 %v1911, %v1910
      %1913 = vmax.xlane.f32.xlu0 %v1912
      %v1914 = vpop.xlane.xlu0 %1913
      %v1915 = vmul.f32 %v1861, %v1861
      %v1916 = vmul.f32 %v1862, %v1862
      %v1917 = vmul.f32 %v1863, %v1863
      %v1918 = vmul.f32 %v1915, %v1888
      %v1919 = vmul.f32 %v1916, %v1892
      %v1920 = vmul.f32 %v1917, %v1896
      %v1921 = vadd.f32 %v1918, %v1919
      %v1922 = vsel %vm1904, %v1920, 0.0
      %v1923 = vadd.f32 %v1921, %v1922
      %1924 = vadd.xlane.f32.xlu0 %v1923
      %v1925 = vpop.xlane.xlu0 %1924
      %v1926 = vrsqrt.pop %v1925
      %v1927 = vmul.f32 %v1925, %v1926
      %vm1928 = vcmp.eq.f32.partialorder %v1925, inf
      %v1929 = vsel %vm1928, %v1925, %v1927
      %vm1930 = vcmp.eq.f32.partialorder %v1925, 0.0
      %v1931 = vand.u32 %v1925, 2147483648
      %v1932 = vsel %vm1930, %v1931, %v1929
      %v1933 = vsub.f32 %v1881, %v1914
      %v1934 = vsub.f32 %v1882, %v1914
      %v1935 = vsub.f32 %v1883, %v1914
      %v1936 = vmul.f32 %v1933, 1.442695
      %v1937 = vpow.pop %v1936
      %v1938 = vmul.f32 %v1934, 1.442695
      %v1939 = vpow.pop %v1938
      %v1940 = vmul.f32 %v1935, 1.442695
      %v1941 = vpow.pop %v1940
      %v1942 = vadd.f32 %v1937, %v1939
      %v1943 = vsel %vm1904, %v1941, 0.0
      %v1944 = vadd.f32 %v1942, %v1943
      %1945 = vadd.xlane.f32.xlu0 %v1944
      %v1946 = vpop.xlane.xlu0 %1945
      %v1947 = vlog2.pop %v1946
      %v1948 = vmul.f32 %v1947, 0.6931472
      %v1949 = vadd.f32 %v1914, %v1948
      %vm1950 = vcmask 7168
      %v1951 = vsel %vm1950, %v1909, %v1914
      %vm1952 = vcmask 15360
      %v1953 = vsel %vm1952, %v1951, %v1932
      %vm1954 = vcmask 23552
      %v1955 = vsel %vm1954, %v1953, %v1949
      %v1956 = vld [vmem:[%s3] sm:$0xf]
      %v1957 = vld [vmem:[%s4] sm:$0xf]
      %1959 = vset.pattern.permute.xlu0 0
      %1960 = vperm.xlu0 %1959, %v1957
      %v1961 = vpop.permute.xlu0 %1960
      %vm1963 = vcmask 64512
      %v1965 = vsel %vm1963, %v1956, 0
      %1967 = vmatprep.subr.mxu0 0.0
      %1968 = vmatpush1.msra.mxu0 %v1955
      %1969 = vmatprep.subr.mxu0 0.0
      %1970 = vmatpush1.msra.mxu0 0.0
      %1971 = vmatprep.subr.mxu0 0.0
      %1972 = vmatpush1.msra.mxu0 0.0
      %1973 = vmatprep.subr.mxu0 0.0
      %1974 = vmatpush1.msra.mxu0 0.0
      %1975 = vmatprep.subr.mxu0 0.0
      %1976 = vmatpush1.msra.mxu0 0.0
      %1977 = vmatprep.subr.mxu0 0.0
      %1978 = vmatpush1.msra.mxu0 0.0
      %1979 = vmatprep.subr.mxu0 0.0
      %1980 = vmatpush1.msra.mxu0 0.0
      %1981 = vmatprep.subr.mxu0 0.0
      %1982 = vmatpush1.msra.mxu0 0.0
      %1983 = vmatprep.subr.mxu0 0.0
      %1984 = vmatpush1.msra.mxu0 0.0
      %1985 = vmatprep.subr.mxu0 0.0
      %1986 = vmatpush1.msra.mxu0 0.0
      %1987 = vmatprep.subr.mxu0 0.0
      %1988 = vmatpush1.msra.mxu0 0.0
      %1989 = vmatprep.subr.mxu0 0.0
      %1990 = vmatpush1.msra.mxu0 0.0
      %1991 = vmatprep.subr.mxu0 0.0
      %1992 = vmatpush1.msra.mxu0 0.0
      %1993 = vmatprep.subr.mxu0 0.0
      %1994 = vmatpush1.msra.mxu0 0.0
      %1995 = vmatprep.subr.mxu0 0.0
      %1996 = vmatpush1.msra.mxu0 0.0
      %1997 = vmatprep.subr.mxu0 0.0
      %1998 = vmatpush1.msra.mxu0 0.0
      %1999 = vmatprep.subr.mxu0 0.0
      %2000 = vmatpush1.msra.mxu0 0.0
      %2001 = vmatprep.subr.mxu0 0.0
      %2002 = vmatpush1.msra.mxu0 0.0
      %2003 = vmatprep.subr.mxu0 0.0
      %2004 = vmatpush1.msra.mxu0 0.0
      %2005 = vmatprep.subr.mxu0 0.0
      %2006 = vmatpush1.msra.mxu0 0.0
      %2007 = vmatprep.subr.mxu0 0.0
      %2008 = vmatpush1.msra.mxu0 0.0
      %2009 = vmatprep.subr.mxu0 0.0
      %2010 = vmatpush1.msra.mxu0 0.0
      %2011 = vmatprep.subr.mxu0 0.0
      %2012 = vmatpush1.msra.mxu0 0.0
      %2013 = vmatprep.subr.mxu0 0.0
      %2014 = vmatpush1.msra.mxu0 0.0
      %2015 = vmatprep.subr.mxu0 0.0
      %2016 = vmatpush1.msra.mxu0 0.0
      %2017 = vmatprep.subr.mxu0 0.0
      %2018 = vmatpush1.msra.mxu0 0.0
      %2019 = vmatprep.subr.mxu0 0.0
      %2020 = vmatpush1.msra.mxu0 0.0
      %2021 = vmatprep.subr.mxu0 0.0
      %2022 = vmatpush1.msra.mxu0 0.0
      %2023 = vmatprep.subr.mxu0 0.0
      %2024 = vmatpush1.msra.mxu0 0.0
      %2025 = vmatprep.subr.mxu0 0.0
      %2026 = vmatpush1.msra.mxu0 0.0
      %2027 = vmatprep.subr.mxu0 0.0
      %2028 = vmatpush1.msra.mxu0 0.0
      %2029 = vmatprep.subr.mxu0 0.0
      %2030 = vmatpush1.msra.mxu0 0.0
      %2031 = vmatprep.mubr.f32.mxu0 0.0
      %2032 = vmatmul.mubr.f32.gmra.mrb[0].mxu0 %v1965
      %v2033 = vpop.f32.mrb[0].mxu0
      %v2034 = vadd.f32 %v1961, %v2033
      %v2035 = vpop.f32.mrb[0].mxu0
      %2036 = vdwg.mxu0
      %v2037 = vmax.f32 %v2034, 0.0
      %v2038 = vld [vmem:[%s5] sm:$0xff]
      %v2039 = vld [vmem:[%s6] sm:$0xff]
      %2041 = vset.pattern.permute.xlu0 0
      %2042 = vperm.xlu0 %2041, %v2039
      %v2043 = vpop.permute.xlu0 %2042
      %v2046 = vsel %vm352, %v2038, 0
      %v2049 = vsel %vm355, %v2037, 0
      %2051 = vmatprep.subr.mxu0 0.0
      %2052 = vmatpush1.msra.mxu0 %v2049
      %2053 = vmatprep.subr.mxu0 0.0
      %2054 = vmatpush1.msra.mxu0 0.0
      %2055 = vmatprep.subr.mxu0 0.0
      %2056 = vmatpush1.msra.mxu0 0.0
      %2057 = vmatprep.subr.mxu0 0.0
      %2058 = vmatpush1.msra.mxu0 0.0
      %2059 = vmatprep.subr.mxu0 0.0
      %2060 = vmatpush1.msra.mxu0 0.0
      %2061 = vmatprep.subr.mxu0 0.0
      %2062 = vmatpush1.msra.mxu0 0.0
      %2063 = vmatprep.subr.mxu0 0.0
      %2064 = vmatpush1.msra.mxu0 0.0
      %2065 = vmatprep.subr.mxu0 0.0
      %2066 = vmatpush1.msra.mxu0 0.0
      %2067 = vmatprep.subr.mxu0 0.0
      %2068 = vmatpush1.msra.mxu0 0.0
      %2069 = vmatprep.subr.mxu0 0.0
      %2070 = vmatpush1.msra.mxu0 0.0
      %2071 = vmatprep.subr.mxu0 0.0
      %2072 = vmatpush1.msra.mxu0 0.0
      %2073 = vmatprep.subr.mxu0 0.0
      %2074 = vmatpush1.msra.mxu0 0.0
      %2075 = vmatprep.subr.mxu0 0.0
      %2076 = vmatpush1.msra.mxu0 0.0
      %2077 = vmatprep.subr.mxu0 0.0
      %2078 = vmatpush1.msra.mxu0 0.0
      %2079 = vmatprep.subr.mxu0 0.0
      %2080 = vmatpush1.msra.mxu0 0.0
      %2081 = vmatprep.subr.mxu0 0.0
      %2082 = vmatpush1.msra.mxu0 0.0
      %2083 = vmatprep.subr.mxu0 0.0
      %2084 = vmatpush1.msra.mxu0 0.0
      %2085 = vmatprep.subr.mxu0 0.0
      %2086 = vmatpush1.msra.mxu0 0.0
      %2087 = vmatprep.subr.mxu0 0.0
      %2088 = vmatpush1.msra.mxu0 0.0
      %2089 = vmatprep.subr.mxu0 0.0
      %2090 = vmatpush1.msra.mxu0 0.0
      %2091 = vmatprep.subr.mxu0 0.0
      %2092 = vmatpush1.msra.mxu0 0.0
      %2093 = vmatprep.subr.mxu0 0.0
      %2094 = vmatpush1.msra.mxu0 0.0
      %2095 = vmatprep.subr.mxu0 0.0
      %2096 = vmatpush1.msra.mxu0 0.0
      %2097 = vmatprep.subr.mxu0 0.0
      %2098 = vmatpush1.msra.mxu0 0.0
      %2099 = vmatprep.subr.mxu0 0.0
      %2100 = vmatpush1.msra.mxu0 0.0
      %2101 = vmatprep.subr.mxu0 0.0
      %2102 = vmatpush1.msra.mxu0 0.0
      %2103 = vmatprep.subr.mxu0 0.0
      %2104 = vmatpush1.msra.mxu0 0.0
      %2105 = vmatprep.subr.mxu0 0.0
      %2106 = vmatpush1.msra.mxu0 0.0
      %2107 = vmatprep.subr.mxu0 0.0
      %2108 = vmatpush1.msra.mxu0 0.0
      %2109 = vmatprep.subr.mxu0 0.0
      %2110 = vmatpush1.msra.mxu0 0.0
      %2111 = vmatprep.subr.mxu0 0.0
      %2112 = vmatpush1.msra.mxu0 0.0
      %2113 = vmatprep.subr.mxu0 0.0
      %2114 = vmatpush1.msra.mxu0 0.0
      %2115 = vmatprep.mubr.f32.mxu0 0.0
      %2116 = vmatmul.mubr.f32.gmra.mrb[0].mxu0 %v2046
      %v2117 = vpop.f32.mrb[0].mxu0
      %v2118 = vadd.f32 %v2043, %v2117
      %v2119 = vpop.f32.mrb[0].mxu0
      %2120 = vdwg.mxu0
      %v2121 = vsel %vm352, %v2118, 0.0
      %2122 = vadd.xlane.f32.xlu0 %v2121
      %v2123 = vpop.xlane.xlu0 %2122
      %v2124 = vxor.u32 %v2123, 2147483648
      %v2125 = vmul.f32 %v2124, 1.442695
      %v2126 = vpow.pop %v2125
      %v2127 = vadd.f32 %v2126, 1.0
      %v2128 = vrcp.pop %v2127
      %v2129 = vmul.f32 1.0, %v2128
      %v2130 = vmul.f32 %v1861, %v2129
      %v2131 = vmul.f32 %v1862, %v2129
      %v2132 = vmul.f32 %v1863, %v2129
      %v2133 = vrot.slane %v2130, 4
      %v2134 = vmax.f32 %v2130, %v2133
      %v2135 = vrot.slane %v2134, 2
      %v2136 = vmax.f32 %v2134, %v2135
      %v2137 = vrot.slane %v2136, 1
      %v2138 = vmax.f32 %v2136, %v2137
      %v2139 = vrot.slane %v2131, 4
      %v2140 = vmax.f32 %v2131, %v2139
      %v2141 = vrot.slane %v2140, 2
      %v2142 = vmax.f32 %v2140, %v2141
      %v2143 = vrot.slane %v2142, 1
      %v2144 = vmax.f32 %v2142, %v2143
      %v2145 = vsel %vm1904, %v2132, -inf
      %v2146 = vrot.slane %v2145, 4
      %v2147 = vmax.f32 %v2145, %v2146
      %v2148 = vrot.slane %v2147, 2
      %v2149 = vmax.f32 %v2147, %v2148
      %v2150 = vrot.slane %v2149, 1
      %v2151 = vmax.f32 %v2149, %v2150
      %v2152 = vrot.slane %v2130, 4
      %v2153 = vadd.f32 %v2130, %v2152
      %v2154 = vrot.slane %v2153, 2
      %v2155 = vadd.f32 %v2153, %v2154
      %v2156 = vrot.slane %v2155, 1
      %v2157 = vadd.f32 %v2155, %v2156
      %v2158 = vrot.slane %v2131, 4
      %v2159 = vadd.f32 %v2131, %v2158
      %v2160 = vrot.slane %v2159, 2
      %v2161 = vadd.f32 %v2159, %v2160
      %v2162 = vrot.slane %v2161, 1
      %v2163 = vadd.f32 %v2161, %v2162
      %v2164 = vsel %vm1904, %v2132, 0.0
      %v2165 = vrot.slane %v2164, 4
      %v2166 = vadd.f32 %v2164, %v2165
      %v2167 = vrot.slane %v2166, 2
      %v2168 = vadd.f32 %v2166, %v2167
      %v2169 = vrot.slane %v2168, 1
      %v2170 = vadd.f32 %v2168, %v2169
      %v2171 = vrcp.pop 8.0
      %v2172 = vmul.f32 %v2157, %v2171
      %v2173 = vmul.f32 %v2163, %v2171
      %v2174 = vmul.f32 %v2170, %v2171
      %vm2175 = vcmask 1040384
      %v2176 = vsel %vm2175, %v2138, %v2172
      %v2177 = vsel %vm2175, %v2144, %v2173
      %v2178 = vsel %vm2175, %v2151, %v2174
      %v2179 = vmul.f32 %v2176, %v1888
      %v2180 = vmul.f32 %v2177, %v1892
      %v2181 = vmul.f32 %v2178, %v1896
      %2185 = vrot.lane.b32.xlu0 %v2179, 57
      %v2186 = vpop.permute.xlu0 %2185
      %2187 = vrot.lane.b32.xlu0 %v2180, 57
      %v2188 = vpop.permute.xlu0 %2187
      %2189 = vrot.lane.b32.xlu0 %v2181, 57
      %v2190 = vpop.permute.xlu0 %2189
      %vm2191 = vcmask 465920
      %v2192 = vsel %vm2191, %v2186, %v2188
      %v2193 = vsel %vm2191, %v2188, %v2190
      %v2197 = vsel %vm2191, 0.0, %v2186
      %vm2198 = vcmask 556032
      %v2199 = vsel %vm2198, %v2193, 0.0
      %v2200 = vld [vmem:[%s7] sm:$0x3]
      %2202 = vset.pattern.permute.xlu0 0
      %2203 = vperm.xlu0 %2202, %v2200
      %v2204 = vpop.permute.xlu0 %2203
      %v2206 = vmul.f32 %v2204, %v2197
      %v2207 = vmul.f32 %v2204, %v2192
      %v2208 = vmul.f32 %v2204, %v2199
      %v2209 = vadd.f32 %v2206, 0.0
      %v2210 = vadd.f32 %v2207, 0.0
      %v2211 = vadd.f32 %v2208, 0.0
      %2212 = vset.pattern.permute.xlu0 1
      %2213 = vperm.xlu0 %2212, %v2200
      %v2214 = vpop.permute.xlu0 %2213
      %v2216 = vmul.f32 %v2214, %v2197
      %v2217 = vmul.f32 %v2214, %v2192
      %v2218 = vmul.f32 %v2214, %v2199
      %2222 = vrot.lane.b32.xlu0 %v2216, 127
      %v2223 = vpop.permute.xlu0 %2222
      %2224 = vrot.lane.b32.xlu0 %v2217, 127
      %v2225 = vpop.permute.xlu0 %2224
      %2226 = vrot.lane.b32.xlu0 %v2218, 127
      %v2227 = vpop.permute.xlu0 %2226
      %v2228 = vsel %vm349, %v2223, %v2225
      %v2229 = vsel %vm349, %v2225, %v2227
      %v2233 = vadd.f32 %v2209, %v2228
      %v2234 = vadd.f32 %v2210, %v2229
      %v2235 = vadd.f32 %v2211, %v2227
      %2236 = vset.pattern.permute.xlu0 2
      %2237 = vperm.xlu0 %2236, %v2200
      %v2238 = vpop.permute.xlu0 %2237
      %v2240 = vmul.f32 %v2238, %v2197
      %v2241 = vmul.f32 %v2238, %v2192
      %v2242 = vmul.f32 %v2238, %v2199
      %2246 = vrot.lane.b32.xlu0 %v2240, 126
      %v2247 = vpop.permute.xlu0 %2246
      %2248 = vrot.lane.b32.xlu0 %v2241, 126
      %v2249 = vpop.permute.xlu0 %2248
      %2250 = vrot.lane.b32.xlu0 %v2242, 126
      %v2251 = vpop.permute.xlu0 %2250
      %v2252 = vsel %vm662, %v2247, %v2249
      %v2253 = vsel %vm662, %v2249, %v2251
      %v2257 = vadd.f32 %v2233, %v2252
      %v2258 = vadd.f32 %v2234, %v2253
      %v2259 = vadd.f32 %v2235, %v2251
      %2260 = vset.pattern.permute.xlu0 3
      %2261 = vperm.xlu0 %2260, %v2200
      %v2262 = vpop.permute.xlu0 %2261
      %v2264 = vmul.f32 %v2262, %v2197
      %v2265 = vmul.f32 %v2262, %v2192
      %v2266 = vmul.f32 %v2262, %v2199
      %2270 = vrot.lane.b32.xlu0 %v2264, 125
      %v2271 = vpop.permute.xlu0 %2270
      %2272 = vrot.lane.b32.xlu0 %v2265, 125
      %v2273 = vpop.permute.xlu0 %2272
      %2274 = vrot.lane.b32.xlu0 %v2266, 125
      %v2275 = vpop.permute.xlu0 %2274
      %vm2276 = vcmask 1022976
      %v2277 = vsel %vm2276, %v2271, %v2273
      %v2278 = vsel %vm2276, %v2273, %v2275
      %v2282 = vadd.f32 %v2257, %v2277
      %v2283 = vadd.f32 %v2258, %v2278
      %v2284 = vadd.f32 %v2259, %v2275
      %2285 = vset.pattern.permute.xlu0 4
      %2286 = vperm.xlu0 %2285, %v2200
      %v2287 = vpop.permute.xlu0 %2286
      %v2289 = vmul.f32 %v2287, %v2197
      %v2290 = vmul.f32 %v2287, %v2192
      %v2291 = vmul.f32 %v2287, %v2199
      %2295 = vrot.lane.b32.xlu0 %v2289, 124
      %v2296 = vpop.permute.xlu0 %2295
      %2297 = vrot.lane.b32.xlu0 %v2290, 124
      %v2298 = vpop.permute.xlu0 %2297
      %2299 = vrot.lane.b32.xlu0 %v2291, 124
      %v2300 = vpop.permute.xlu0 %2299
      %vm2301 = vcmask 1014784
      %v2302 = vsel %vm2301, %v2296, %v2298
      %v2303 = vsel %vm2301, %v2298, %v2300
      %v2307 = vadd.f32 %v2282, %v2302
      %v2308 = vadd.f32 %v2283, %v2303
      %v2309 = vadd.f32 %v2284, %v2300
      %2310 = vset.pattern.permute.xlu0 5
      %2311 = vperm.xlu0 %2310, %v2200
      %v2312 = vpop.permute.xlu0 %2311
      %v2314 = vmul.f32 %v2312, %v2197
      %v2315 = vmul.f32 %v2312, %v2192
      %v2316 = vmul.f32 %v2312, %v2199
      %2320 = vrot.lane.b32.xlu0 %v2314, 123
      %v2321 = vpop.permute.xlu0 %2320
      %2322 = vrot.lane.b32.xlu0 %v2315, 123
      %v2323 = vpop.permute.xlu0 %2322
      %2324 = vrot.lane.b32.xlu0 %v2316, 123
      %v2325 = vpop.permute.xlu0 %2324
      %vm2326 = vcmask 1006592
      %v2327 = vsel %vm2326, %v2321, %v2323
      %v2328 = vsel %vm2326, %v2323, %v2325
      %v2332 = vadd.f32 %v2307, %v2327
      %v2333 = vadd.f32 %v2308, %v2328
      %v2334 = vadd.f32 %v2309, %v2325
      %2335 = vset.pattern.permute.xlu0 6
      %2336 = vperm.xlu0 %2335, %v2200
      %v2337 = vpop.permute.xlu0 %2336
      %v2339 = vmul.f32 %v2337, %v2197
      %v2340 = vmul.f32 %v2337, %v2192
      %v2341 = vmul.f32 %v2337, %v2199
      %2345 = vrot.lane.b32.xlu0 %v2339, 122
      %v2346 = vpop.permute.xlu0 %2345
      %2347 = vrot.lane.b32.xlu0 %v2340, 122
      %v2348 = vpop.permute.xlu0 %2347
      %2349 = vrot.lane.b32.xlu0 %v2341, 122
      %v2350 = vpop.permute.xlu0 %2349
      %vm2351 = vcmask 998400
      %v2352 = vsel %vm2351, %v2346, %v2348
      %v2353 = vsel %vm2351, %v2348, %v2350
      %v2357 = vadd.f32 %v2332, %v2352
      %v2358 = vadd.f32 %v2333, %v2353
      %v2359 = vadd.f32 %v2334, %v2350
      %2360 = vset.pattern.permute.xlu0 7
      %2361 = vperm.xlu0 %2360, %v2200
      %v2362 = vpop.permute.xlu0 %2361
      %v2364 = vmul.f32 %v2362, %v2197
      %v2365 = vmul.f32 %v2362, %v2192
      %v2366 = vmul.f32 %v2362, %v2199
      %2370 = vrot.lane.b32.xlu0 %v2364, 110
      %v2371 = vpop.permute.xlu0 %2370
      %2372 = vrot.lane.b32.xlu0 %v2365, 110
      %v2373 = vpop.permute.xlu0 %2372
      %2374 = vrot.lane.b32.xlu0 %v2366, 110
      %v2375 = vpop.permute.xlu0 %2374
      %v2376 = vsel %vm827, %v2371, %v2373
      %v2377 = vsel %vm827, %v2373, %v2375
      %v2381 = vadd.f32 %v2357, %v2376
      %v2382 = vadd.f32 %v2358, %v2377
      %v2383 = vadd.f32 %v2359, %v2375
      %2384 = vset.pattern.permute.xlu0 8
      %2385 = vperm.xlu0 %2384, %v2200
      %v2386 = vpop.permute.xlu0 %2385
      %v2388 = vmul.f32 %v2386, %v2197
      %v2389 = vmul.f32 %v2386, %v2192
      %v2390 = vmul.f32 %v2386, %v2199
      %2394 = vrot.lane.b32.xlu0 %v2388, 109
      %v2395 = vpop.permute.xlu0 %2394
      %2396 = vrot.lane.b32.xlu0 %v2389, 109
      %v2397 = vpop.permute.xlu0 %2396
      %2398 = vrot.lane.b32.xlu0 %v2390, 109
      %v2399 = vpop.permute.xlu0 %2398
      %v2400 = vsel %vm992, %v2395, %v2397
      %v2401 = vsel %vm992, %v2397, %v2399
      %v2405 = vadd.f32 %v2381, %v2400
      %v2406 = vadd.f32 %v2382, %v2401
      %v2407 = vadd.f32 %v2383, %v2399
      %2408 = vset.pattern.permute.xlu0 9
      %2409 = vperm.xlu0 %2408, %v2200
      %v2410 = vpop.permute.xlu0 %2409
      %v2412 = vmul.f32 %v2410, %v2197
      %v2413 = vmul.f32 %v2410, %v2192
      %v2414 = vmul.f32 %v2410, %v2199
      %2418 = vrot.lane.b32.xlu0 %v2412, 108
      %v2419 = vpop.permute.xlu0 %2418
      %2420 = vrot.lane.b32.xlu0 %v2413, 108
      %v2421 = vpop.permute.xlu0 %2420
      %2422 = vrot.lane.b32.xlu0 %v2414, 108
      %v2423 = vpop.permute.xlu0 %2422
      %v2424 = vsel %vm1157, %v2419, %v2421
      %v2425 = vsel %vm1157, %v2421, %v2423
      %v2429 = vadd.f32 %v2405, %v2424
      %v2430 = vadd.f32 %v2406, %v2425
      %v2431 = vadd.f32 %v2407, %v2423
      %2432 = vset.pattern.permute.xlu0 10
      %2433 = vperm.xlu0 %2432, %v2200
      %v2434 = vpop.permute.xlu0 %2433
      %v2436 = vmul.f32 %v2434, %v2197
      %v2437 = vmul.f32 %v2434, %v2192
      %v2438 = vmul.f32 %v2434, %v2199
      %2442 = vrot.lane.b32.xlu0 %v2436, 107
      %v2443 = vpop.permute.xlu0 %2442
      %2444 = vrot.lane.b32.xlu0 %v2437, 107
      %v2445 = vpop.permute.xlu0 %2444
      %2446 = vrot.lane.b32.xlu0 %v2438, 107
      %v2447 = vpop.permute.xlu0 %2446
      %vm2448 = vcmask 875520
      %v2449 = vsel %vm2448, %v2443, %v2445
      %v2450 = vsel %vm2448, %v2445, %v2447
      %v2454 = vadd.f32 %v2429, %v2449
      %v2455 = vadd.f32 %v2430, %v2450
      %v2456 = vadd.f32 %v2431, %v2447
      %2457 = vset.pattern.permute.xlu0 11
      %2458 = vperm.xlu0 %2457, %v2200
      %v2459 = vpop.permute.xlu0 %2458
      %v2461 = vmul.f32 %v2459, %v2197
      %v2462 = vmul.f32 %v2459, %v2192
      %v2463 = vmul.f32 %v2459, %v2199
      %2467 = vrot.lane.b32.xlu0 %v2461, 106
      %v2468 = vpop.permute.xlu0 %2467
      %2469 = vrot.lane.b32.xlu0 %v2462, 106
      %v2470 = vpop.permute.xlu0 %2469
      %2471 = vrot.lane.b32.xlu0 %v2463, 106
      %v2472 = vpop.permute.xlu0 %2471
      %vm2473 = vcmask 867328
      %v2474 = vsel %vm2473, %v2468, %v2470
      %v2475 = vsel %vm2473, %v2470, %v2472
      %v2479 = vadd.f32 %v2454, %v2474
      %v2480 = vadd.f32 %v2455, %v2475
      %v2481 = vadd.f32 %v2456, %v2472
      %2482 = vset.pattern.permute.xlu0 12
      %2483 = vperm.xlu0 %2482, %v2200
      %v2484 = vpop.permute.xlu0 %2483
      %v2486 = vmul.f32 %v2484, %v2197
      %v2487 = vmul.f32 %v2484, %v2192
      %v2488 = vmul.f32 %v2484, %v2199
      %2492 = vrot.lane.b32.xlu0 %v2486, 105
      %v2493 = vpop.permute.xlu0 %2492
      %2494 = vrot.lane.b32.xlu0 %v2487, 105
      %v2495 = vpop.permute.xlu0 %2494
      %2496 = vrot.lane.b32.xlu0 %v2488, 105
      %v2497 = vpop.permute.xlu0 %2496
      %vm2498 = vcmask 859136
      %v2499 = vsel %vm2498, %v2493, %v2495
      %v2500 = vsel %vm2498, %v2495, %v2497
      %v2504 = vadd.f32 %v2479, %v2499
      %v2505 = vadd.f32 %v2480, %v2500
      %v2506 = vadd.f32 %v2481, %v2497
      %2507 = vset.pattern.permute.xlu0 13
      %2508 = vperm.xlu0 %2507, %v2200
      %v2509 = vpop.permute.xlu0 %2508
      %v2511 = vmul.f32 %v2509, %v2197
      %v2512 = vmul.f32 %v2509, %v2192
      %v2513 = vmul.f32 %v2509, %v2199
      %2517 = vrot.lane.b32.xlu0 %v2511, 104
      %v2518 = vpop.permute.xlu0 %2517
      %2519 = vrot.lane.b32.xlu0 %v2512, 104
      %v2520 = vpop.permute.xlu0 %2519
      %2521 = vrot.lane.b32.xlu0 %v2513, 104
      %v2522 = vpop.permute.xlu0 %2521
      %vm2523 = vcmask 850944
      %v2524 = vsel %vm2523, %v2518, %v2520
      %v2525 = vsel %vm2523, %v2520, %v2522
      %v2529 = vadd.f32 %v2504, %v2524
      %v2530 = vadd.f32 %v2505, %v2525
      %v2531 = vadd.f32 %v2506, %v2522
      %2532 = vset.pattern.permute.xlu0 14
      %2533 = vperm.xlu0 %2532, %v2200
      %v2534 = vpop.permute.xlu0 %2533
      %v2536 = vmul.f32 %v2534, %v2197
      %v2537 = vmul.f32 %v2534, %v2192
      %v2538 = vmul.f32 %v2534, %v2199
      %2542 = vrot.lane.b32.xlu0 %v2536, 92
      %v2543 = vpop.permute.xlu0 %2542
      %2544 = vrot.lane.b32.xlu0 %v2537, 92
      %v2545 = vpop.permute.xlu0 %2544
      %2546 = vrot.lane.b32.xlu0 %v2538, 92
      %v2547 = vpop.permute.xlu0 %2546
      %v2548 = vsel %vm1322, %v2543, %v2545
      %v2549 = vsel %vm1322, %v2545, %v2547
      %v2553 = vadd.f32 %v2529, %v2548
      %v2554 = vadd.f32 %v2530, %v2549
      %v2555 = vadd.f32 %v2531, %v2547
      %2556 = vset.pattern.permute.xlu0 15
      %2557 = vperm.xlu0 %2556, %v2200
      %v2558 = vpop.permute.xlu0 %2557
      %v2560 = vmul.f32 %v2558, %v2197
      %v2561 = vmul.f32 %v2558, %v2192
      %v2562 = vmul.f32 %v2558, %v2199
      %2566 = vrot.lane.b32.xlu0 %v2560, 91
      %v2567 = vpop.permute.xlu0 %2566
      %2568 = vrot.lane.b32.xlu0 %v2561, 91
      %v2569 = vpop.permute.xlu0 %2568
      %2570 = vrot.lane.b32.xlu0 %v2562, 91
      %v2571 = vpop.permute.xlu0 %2570
      %v2572 = vsel %vm1487, %v2567, %v2569
      %v2573 = vsel %vm1487, %v2569, %v2571
      %v2577 = vadd.f32 %v2553, %v2572
      %v2578 = vadd.f32 %v2554, %v2573
      %v2579 = vadd.f32 %v2555, %v2571
      %2580 = vset.pattern.permute.xlu0 16
      %2581 = vperm.xlu0 %2580, %v2200
      %v2582 = vpop.permute.xlu0 %2581
      %v2584 = vmul.f32 %v2582, %v2197
      %v2585 = vmul.f32 %v2582, %v2192
      %v2586 = vmul.f32 %v2582, %v2199
      %2590 = vrot.lane.b32.xlu0 %v2584, 90
      %v2591 = vpop.permute.xlu0 %2590
      %2592 = vrot.lane.b32.xlu0 %v2585, 90
      %v2593 = vpop.permute.xlu0 %2592
      %2594 = vrot.lane.b32.xlu0 %v2586, 90
      %v2595 = vpop.permute.xlu0 %2594
      %v2596 = vsel %vm1652, %v2591, %v2593
      %v2597 = vsel %vm1652, %v2593, %v2595
      %v2601 = vadd.f32 %v2577, %v2596
      %v2602 = vadd.f32 %v2578, %v2597
      %v2603 = vadd.f32 %v2579, %v2595
      %2604 = vset.pattern.permute.xlu0 17
      %2605 = vperm.xlu0 %2604, %v2200
      %v2606 = vpop.permute.xlu0 %2605
      %v2608 = vmul.f32 %v2606, %v2197
      %v2609 = vmul.f32 %v2606, %v2192
      %v2610 = vmul.f32 %v2606, %v2199
      %2614 = vrot.lane.b32.xlu0 %v2608, 89
      %v2615 = vpop.permute.xlu0 %2614
      %2616 = vrot.lane.b32.xlu0 %v2609, 89
      %v2617 = vpop.permute.xlu0 %2616
      %2618 = vrot.lane.b32.xlu0 %v2610, 89
      %v2619 = vpop.permute.xlu0 %2618
      %vm2620 = vcmask 728064
      %v2621 = vsel %vm2620, %v2615, %v2617
      %v2622 = vsel %vm2620, %v2617, %v2619
      %v2626 = vadd.f32 %v2601, %v2621
      %v2627 = vadd.f32 %v2602, %v2622
      %v2628 = vadd.f32 %v2603, %v2619
      %2629 = vset.pattern.permute.xlu0 18
      %2630 = vperm.xlu0 %2629, %v2200
      %v2631 = vpop.permute.xlu0 %2630
      %v2633 = vmul.f32 %v2631, %v2197
      %v2634 = vmul.f32 %v2631, %v2192
      %v2635 = vmul.f32 %v2631, %v2199
      %2639 = vrot.lane.b32.xlu0 %v2633, 88
      %v2640 = vpop.permute.xlu0 %2639
      %2641 = vrot.lane.b32.xlu0 %v2634, 88
      %v2642 = vpop.permute.xlu0 %2641
      %2643 = vrot.lane.b32.xlu0 %v2635, 88
      %v2644 = vpop.permute.xlu0 %2643
      %vm2645 = vcmask 719872
      %v2646 = vsel %vm2645, %v2640, %v2642
      %v2647 = vsel %vm2645, %v2642, %v2644
      %v2651 = vadd.f32 %v2626, %v2646
      %v2652 = vadd.f32 %v2627, %v2647
      %v2653 = vadd.f32 %v2628, %v2644
      %2654 = vset.pattern.permute.xlu0 19
      %2655 = vperm.xlu0 %2654, %v2200
      %v2656 = vpop.permute.xlu0 %2655
      %v2658 = vmul.f32 %v2656, %v2197
      %v2659 = vmul.f32 %v2656, %v2192
      %v2660 = vmul.f32 %v2656, %v2199
      %2664 = vrot.lane.b32.xlu0 %v2658, 87
      %v2665 = vpop.permute.xlu0 %2664
      %2666 = vrot.lane.b32.xlu0 %v2659, 87
      %v2667 = vpop.permute.xlu0 %2666
      %2668 = vrot.lane.b32.xlu0 %v2660, 87
      %v2669 = vpop.permute.xlu0 %2668
      %vm2670 = vcmask 711680
      %v2671 = vsel %vm2670, %v2665, %v2667
      %v2672 = vsel %vm2670, %v2667, %v2669
      %v2676 = vadd.f32 %v2651, %v2671
      %v2677 = vadd.f32 %v2652, %v2672
      %v2678 = vadd.f32 %v2653, %v2669
      %2679 = vset.pattern.permute.xlu0 20
      %2680 = vperm.xlu0 %2679, %v2200
      %v2681 = vpop.permute.xlu0 %2680
      %v2683 = vmul.f32 %v2681, %v2197
      %v2684 = vmul.f32 %v2681, %v2192
      %v2685 = vmul.f32 %v2681, %v2199
      %2689 = vrot.lane.b32.xlu0 %v2683, 86
      %v2690 = vpop.permute.xlu0 %2689
      %2691 = vrot.lane.b32.xlu0 %v2684, 86
      %v2692 = vpop.permute.xlu0 %2691
      %2693 = vrot.lane.b32.xlu0 %v2685, 86
      %v2694 = vpop.permute.xlu0 %2693
      %vm2695 = vcmask 703488
      %v2696 = vsel %vm2695, %v2690, %v2692
      %v2697 = vsel %vm2695, %v2692, %v2694
      %v2701 = vadd.f32 %v2676, %v2696
      %v2702 = vadd.f32 %v2677, %v2697
      %v2703 = vadd.f32 %v2678, %v2694
      %2704 = vset.pattern.permute.xlu0 21
      %2705 = vperm.xlu0 %2704, %v2200
      %v2706 = vpop.permute.xlu0 %2705
      %v2708 = vmul.f32 %v2706, %v2197
      %v2709 = vmul.f32 %v2706, %v2192
      %v2710 = vmul.f32 %v2706, %v2199
      %2714 = vrot.lane.b32.xlu0 %v2708, 74
      %v2715 = vpop.permute.xlu0 %2714
      %2716 = vrot.lane.b32.xlu0 %v2709, 74
      %v2717 = vpop.permute.xlu0 %2716
      %2718 = vrot.lane.b32.xlu0 %v2710, 74
      %v2719 = vpop.permute.xlu0 %2718
      %vm2720 = vcmask 605184
      %v2721 = vsel %vm2720, %v2715, %v2717
      %v2722 = vsel %vm2720, %v2717, %v2719
      %v2726 = vadd.f32 %v2701, %v2721
      %v2727 = vadd.f32 %v2702, %v2722
      %v2728 = vadd.f32 %v2703, %v2719
      %2729 = vset.pattern.permute.xlu0 22
      %2730 = vperm.xlu0 %2729, %v2200
      %v2731 = vpop.permute.xlu0 %2730
      %v2733 = vmul.f32 %v2731, %v2197
      %v2734 = vmul.f32 %v2731, %v2192
      %v2735 = vmul.f32 %v2731, %v2199
      %2739 = vrot.lane.b32.xlu0 %v2733, 73
      %v2740 = vpop.permute.xlu0 %2739
      %2741 = vrot.lane.b32.xlu0 %v2734, 73
      %v2742 = vpop.permute.xlu0 %2741
      %2743 = vrot.lane.b32.xlu0 %v2735, 73
      %v2744 = vpop.permute.xlu0 %2743
      %vm2745 = vcmask 596992
      %v2746 = vsel %vm2745, %v2740, %v2742
      %v2747 = vsel %vm2745, %v2742, %v2744
      %v2751 = vadd.f32 %v2726, %v2746
      %v2752 = vadd.f32 %v2727, %v2747
      %v2753 = vadd.f32 %v2728, %v2744
      %2754 = vset.pattern.permute.xlu0 23
      %2755 = vperm.xlu0 %2754, %v2200
      %v2756 = vpop.permute.xlu0 %2755
      %v2758 = vmul.f32 %v2756, %v2197
      %v2759 = vmul.f32 %v2756, %v2192
      %v2760 = vmul.f32 %v2756, %v2199
      %2764 = vrot.lane.b32.xlu0 %v2758, 72
      %v2765 = vpop.permute.xlu0 %2764
      %2766 = vrot.lane.b32.xlu0 %v2759, 72
      %v2767 = vpop.permute.xlu0 %2766
      %2768 = vrot.lane.b32.xlu0 %v2760, 72
      %v2769 = vpop.permute.xlu0 %2768
      %vm2770 = vcmask 588800
      %v2771 = vsel %vm2770, %v2765, %v2767
      %v2772 = vsel %vm2770, %v2767, %v2769
      %v2776 = vadd.f32 %v2751, %v2771
      %v2777 = vadd.f32 %v2752, %v2772
      %v2778 = vadd.f32 %v2753, %v2769
      %2779 = vset.pattern.permute.xlu0 24
      %2780 = vperm.xlu0 %2779, %v2200
      %v2781 = vpop.permute.xlu0 %2780
      %v2783 = vmul.f32 %v2781, %v2197
      %v2784 = vmul.f32 %v2781, %v2192
      %v2785 = vmul.f32 %v2781, %v2199
      %2789 = vrot.lane.b32.xlu0 %v2783, 71
      %v2790 = vpop.permute.xlu0 %2789
      %2791 = vrot.lane.b32.xlu0 %v2784, 71
      %v2792 = vpop.permute.xlu0 %2791
      %2793 = vrot.lane.b32.xlu0 %v2785, 71
      %v2794 = vpop.permute.xlu0 %2793
      %vm2795 = vcmask 580608
      %v2796 = vsel %vm2795, %v2790, %v2792
      %v2797 = vsel %vm2795, %v2792, %v2794
      %v2801 = vadd.f32 %v2776, %v2796
      %v2802 = vadd.f32 %v2777, %v2797
      %v2803 = vadd.f32 %v2778, %v2794
      %2804 = vset.pattern.permute.xlu0 25
      %2805 = vperm.xlu0 %2804, %v2200
      %v2806 = vpop.permute.xlu0 %2805
      %v2808 = vmul.f32 %v2806, %v2197
      %v2809 = vmul.f32 %v2806, %v2192
      %v2810 = vmul.f32 %v2806, %v2199
      %2814 = vrot.lane.b32.xlu0 %v2808, 70
      %v2815 = vpop.permute.xlu0 %2814
      %2816 = vrot.lane.b32.xlu0 %v2809, 70
      %v2817 = vpop.permute.xlu0 %2816
      %2818 = vrot.lane.b32.xlu0 %v2810, 70
      %v2819 = vpop.permute.xlu0 %2818
      %vm2820 = vcmask 572416
      %v2821 = vsel %vm2820, %v2815, %v2817
      %v2822 = vsel %vm2820, %v2817, %v2819
      %v2826 = vadd.f32 %v2801, %v2821
      %v2827 = vadd.f32 %v2802, %v2822
      %v2828 = vadd.f32 %v2803, %v2819
      %2829 = vset.pattern.permute.xlu0 26
      %2830 = vperm.xlu0 %2829, %v2200
      %v2831 = vpop.permute.xlu0 %2830
      %v2833 = vmul.f32 %v2831, %v2197
      %v2834 = vmul.f32 %v2831, %v2192
      %v2835 = vmul.f32 %v2831, %v2199
      %2839 = vrot.lane.b32.xlu0 %v2833, 69
      %v2840 = vpop.permute.xlu0 %2839
      %2841 = vrot.lane.b32.xlu0 %v2834, 69
      %v2842 = vpop.permute.xlu0 %2841
      %2843 = vrot.lane.b32.xlu0 %v2835, 69
      %v2844 = vpop.permute.xlu0 %2843
      %vm2845 = vcmask 564224
      %v2846 = vsel %vm2845, %v2840, %v2842
      %v2847 = vsel %vm2845, %v2842, %v2844
      %v2851 = vadd.f32 %v2826, %v2846
      %v2852 = vadd.f32 %v2827, %v2847
      %v2853 = vadd.f32 %v2828, %v2844
      %2854 = vset.pattern.permute.xlu0 27
      %2855 = vperm.xlu0 %2854, %v2200
      %v2856 = vpop.permute.xlu0 %2855
      %v2858 = vmul.f32 %v2856, %v2197
      %v2859 = vmul.f32 %v2856, %v2192
      %v2860 = vmul.f32 %v2856, %v2199
      %2864 = vrot.lane.b32.xlu0 %v2858, 68
      %v2865 = vpop.permute.xlu0 %2864
      %2866 = vrot.lane.b32.xlu0 %v2859, 68
      %v2867 = vpop.permute.xlu0 %2866
      %2868 = vrot.lane.b32.xlu0 %v2860, 68
      %v2869 = vpop.permute.xlu0 %2868
      %v2870 = vsel %vm2198, %v2865, %v2867
      %v2871 = vsel %vm2198, %v2867, %v2869
      %v2875 = vadd.f32 %v2851, %v2870
      %v2876 = vadd.f32 %v2852, %v2871
      %v2877 = vadd.f32 %v2853, %v2869
      %2878 = vset.pattern.permute.xlu0 28
      %2879 = vperm.xlu0 %2878, %v2200
      %v2880 = vpop.permute.xlu0 %2879
      %v2882 = vmul.f32 %v2880, %v2197
      %v2883 = vmul.f32 %v2880, %v2192
      %v2884 = vmul.f32 %v2880, %v2199
      %2888 = vrot.lane.b32.xlu0 %v2882, 56
      %v2889 = vpop.permute.xlu0 %2888
      %2890 = vrot.lane.b32.xlu0 %v2883, 56
      %v2891 = vpop.permute.xlu0 %2890
      %2892 = vrot.lane.b32.xlu0 %v2884, 56
      %v2893 = vpop.permute.xlu0 %2892
      %vm2894 = vcmask 457728
      %v2895 = vsel %vm2894, %v2889, %v2891
      %v2896 = vsel %vm2894, %v2891, %v2893
      %v2900 = vadd.f32 %v2875, %v2895
      %v2901 = vadd.f32 %v2876, %v2896
      %v2902 = vadd.f32 %v2877, %v2893
      %2903 = vset.pattern.permute.xlu0 29
      %2904 = vperm.xlu0 %2903, %v2200
      %v2905 = vpop.permute.xlu0 %2904
      %v2907 = vmul.f32 %v2905, %v2197
      %v2908 = vmul.f32 %v2905, %v2192
      %v2909 = vmul.f32 %v2905, %v2199
      %2913 = vrot.lane.b32.xlu0 %v2907, 55
      %v2914 = vpop.permute.xlu0 %2913
      %2915 = vrot.lane.b32.xlu0 %v2908, 55
      %v2916 = vpop.permute.xlu0 %2915
      %2917 = vrot.lane.b32.xlu0 %v2909, 55
      %v2918 = vpop.permute.xlu0 %2917
      %vm2919 = vcmask 449536
      %v2920 = vsel %vm2919, %v2914, %v2916
      %v2921 = vsel %vm2919, %v2916, %v2918
      %v2925 = vadd.f32 %v2900, %v2920
      %v2926 = vadd.f32 %v2901, %v2921
      %v2927 = vadd.f32 %v2902, %v2918
      %2928 = vset.pattern.permute.xlu0 30
      %2929 = vperm.xlu0 %2928, %v2200
      %v2930 = vpop.permute.xlu0 %2929
      %v2932 = vmul.f32 %v2930, %v2197
      %v2933 = vmul.f32 %v2930, %v2192
      %v2934 = vmul.f32 %v2930, %v2199
      %2938 = vrot.lane.b32.xlu0 %v2932, 54
      %v2939 = vpop.permute.xlu0 %2938
      %2940 = vrot.lane.b32.xlu0 %v2933, 54
      %v2941 = vpop.permute.xlu0 %2940
      %2942 = vrot.lane.b32.xlu0 %v2934, 54
      %v2943 = vpop.permute.xlu0 %2942
      %vm2944 = vcmask 441344
      %v2945 = vsel %vm2944, %v2939, %v2941
      %v2946 = vsel %vm2944, %v2941, %v2943
      %v2950 = vadd.f32 %v2925, %v2945
      %v2951 = vadd.f32 %v2926, %v2946
      %v2952 = vadd.f32 %v2927, %v2943
      %2953 = vset.pattern.permute.xlu0 31
      %2954 = vperm.xlu0 %2953, %v2200
      %v2955 = vpop.permute.xlu0 %2954
      %v2957 = vmul.f32 %v2955, %v2197
      %v2958 = vmul.f32 %v2955, %v2192
      %v2959 = vmul.f32 %v2955, %v2199
      %2963 = vrot.lane.b32.xlu0 %v2957, 53
      %v2964 = vpop.permute.xlu0 %2963
      %2965 = vrot.lane.b32.xlu0 %v2958, 53
      %v2966 = vpop.permute.xlu0 %2965
      %2967 = vrot.lane.b32.xlu0 %v2959, 53
      %v2968 = vpop.permute.xlu0 %2967
      %vm2969 = vcmask 433152
      %v2970 = vsel %vm2969, %v2964, %v2966
      %v2971 = vsel %vm2969, %v2966, %v2968
      %v2975 = vadd.f32 %v2950, %v2970
      %v2976 = vadd.f32 %v2951, %v2971
      %v2977 = vadd.f32 %v2952, %v2968
      %2978 = vset.pattern.permute.xlu0 32
      %2979 = vperm.xlu0 %2978, %v2200
      %v2980 = vpop.permute.xlu0 %2979
      %v2982 = vmul.f32 %v2980, %v2197
      %v2983 = vmul.f32 %v2980, %v2192
      %v2984 = vmul.f32 %v2980, %v2199
      %2988 = vrot.lane.b32.xlu0 %v2982, 52
      %v2989 = vpop.permute.xlu0 %2988
      %2990 = vrot.lane.b32.xlu0 %v2983, 52
      %v2991 = vpop.permute.xlu0 %2990
      %2992 = vrot.lane.b32.xlu0 %v2984, 52
      %v2993 = vpop.permute.xlu0 %2992
      %vm2994 = vcmask 424960
      %v2995 = vsel %vm2994, %v2989, %v2991
      %v2996 = vsel %vm2994, %v2991, %v2993
      %v3000 = vadd.f32 %v2975, %v2995
      %v3001 = vadd.f32 %v2976, %v2996
      %v3002 = vadd.f32 %v2977, %v2993
      %3003 = vset.pattern.permute.xlu0 33
      %3004 = vperm.xlu0 %3003, %v2200
      %v3005 = vpop.permute.xlu0 %3004
      %v3007 = vmul.f32 %v3005, %v2197
      %v3008 = vmul.f32 %v3005, %v2192
      %v3009 = vmul.f32 %v3005, %v2199
      %3013 = vrot.lane.b32.xlu0 %v3007, 51
      %v3014 = vpop.permute.xlu0 %3013
      %3015 = vrot.lane.b32.xlu0 %v3008, 51
      %v3016 = vpop.permute.xlu0 %3015
      %3017 = vrot.lane.b32.xlu0 %v3009, 51
      %v3018 = vpop.permute.xlu0 %3017
      %vm3019 = vcmask 416768
      %v3020 = vsel %vm3019, %v3014, %v3016
      %v3021 = vsel %vm3019, %v3016, %v3018
      %v3025 = vadd.f32 %v3000, %v3020
      %v3026 = vadd.f32 %v3001, %v3021
      %v3027 = vadd.f32 %v3002, %v3018
      %3028 = vset.pattern.permute.xlu0 34
      %3029 = vperm.xlu0 %3028, %v2200
      %v3030 = vpop.permute.xlu0 %3029
      %v3032 = vmul.f32 %v3030, %v2197
      %v3033 = vmul.f32 %v3030, %v2192
      %v3034 = vmul.f32 %v3030, %v2199
      %3038 = vrot.lane.b32.xlu0 %v3032, 50
      %v3039 = vpop.permute.xlu0 %3038
      %3040 = vrot.lane.b32.xlu0 %v3033, 50
      %v3041 = vpop.permute.xlu0 %3040
      %3042 = vrot.lane.b32.xlu0 %v3034, 50
      %v3043 = vpop.permute.xlu0 %3042
      %vm3044 = vcmask 408576
      %v3045 = vsel %vm3044, %v3039, %v3041
      %v3046 = vsel %vm3044, %v3041, %v3043
      %v3050 = vadd.f32 %v3025, %v3045
      %v3051 = vadd.f32 %v3026, %v3046
      %v3052 = vadd.f32 %v3027, %v3043
      %3053 = vset.pattern.permute.xlu0 35
      %3054 = vperm.xlu0 %3053, %v2200
      %v3055 = vpop.permute.xlu0 %3054
      %v3057 = vmul.f32 %v3055, %v2197
      %v3058 = vmul.f32 %v3055, %v2192
      %v3059 = vmul.f32 %v3055, %v2199
      %3063 = vrot.lane.b32.xlu0 %v3057, 38
      %v3064 = vpop.permute.xlu0 %3063
      %3065 = vrot.lane.b32.xlu0 %v3058, 38
      %v3066 = vpop.permute.xlu0 %3065
      %3067 = vrot.lane.b32.xlu0 %v3059, 38
      %v3068 = vpop.permute.xlu0 %3067
      %vm3069 = vcmask 310272
      %v3070 = vsel %vm3069, %v3064, %v3066
      %v3071 = vsel %vm3069, %v3066, %v3068
      %v3075 = vadd.f32 %v3050, %v3070
      %v3076 = vadd.f32 %v3051, %v3071
      %v3077 = vadd.f32 %v3052, %v3068
      %3078 = vset.pattern.permute.xlu0 36
      %3079 = vperm.xlu0 %3078, %v2200
      %v3080 = vpop.permute.xlu0 %3079
      %v3082 = vmul.f32 %v3080, %v2197
      %v3083 = vmul.f32 %v3080, %v2192
      %v3084 = vmul.f32 %v3080, %v2199
      %3088 = vrot.lane.b32.xlu0 %v3082, 37
      %v3089 = vpop.permute.xlu0 %3088
      %3090 = vrot.lane.b32.xlu0 %v3083, 37
      %v3091 = vpop.permute.xlu0 %3090
      %3092 = vrot.lane.b32.xlu0 %v3084, 37
      %v3093 = vpop.permute.xlu0 %3092
      %vm3094 = vcmask 302080
      %v3095 = vsel %vm3094, %v3089, %v3091
      %v3096 = vsel %vm3094, %v3091, %v3093
      %v3100 = vadd.f32 %v3075, %v3095
      %v3101 = vadd.f32 %v3076, %v3096
      %v3102 = vadd.f32 %v3077, %v3093
      %3103 = vset.pattern.permute.xlu0 37
      %3104 = vperm.xlu0 %3103, %v2200
      %v3105 = vpop.permute.xlu0 %3104
      %v3107 = vmul.f32 %v3105, %v2197
      %v3108 = vmul.f32 %v3105, %v2192
      %v3109 = vmul.f32 %v3105, %v2199
      %3113 = vrot.lane.b32.xlu0 %v3107, 36
      %v3114 = vpop.permute.xlu0 %3113
      %3115 = vrot.lane.b32.xlu0 %v3108, 36
      %v3116 = vpop.permute.xlu0 %3115
      %3117 = vrot.lane.b32.xlu0 %v3109, 36
      %v3118 = vpop.permute.xlu0 %3117
      %vm3119 = vcmask 293888
      %v3120 = vsel %vm3119, %v3114, %v3116
      %v3121 = vsel %vm3119, %v3116, %v3118
      %v3125 = vadd.f32 %v3100, %v3120
      %v3126 = vadd.f32 %v3101, %v3121
      %v3127 = vadd.f32 %v3102, %v3118
      %3128 = vset.pattern.permute.xlu0 38
      %3129 = vperm.xlu0 %3128, %v2200
      %v3130 = vpop.permute.xlu0 %3129
      %v3132 = vmul.f32 %v3130, %v2197
      %v3133 = vmul.f32 %v3130, %v2192
      %v3134 = vmul.f32 %v3130, %v2199
      %3138 = vrot.lane.b32.xlu0 %v3132, 35
      %v3139 = vpop.permute.xlu0 %3138
      %3140 = vrot.lane.b32.xlu0 %v3133, 35
      %v3141 = vpop.permute.xlu0 %3140
      %3142 = vrot.lane.b32.xlu0 %v3134, 35
      %v3143 = vpop.permute.xlu0 %3142
      %vm3144 = vcmask 285696
      %v3145 = vsel %vm3144, %v3139, %v3141
      %v3146 = vsel %vm3144, %v3141, %v3143
      %v3150 = vadd.f32 %v3125, %v3145
      %v3151 = vadd.f32 %v3126, %v3146
      %v3152 = vadd.f32 %v3127, %v3143
      %3153 = vset.pattern.permute.xlu0 39
      %3154 = vperm.xlu0 %3153, %v2200
      %v3155 = vpop.permute.xlu0 %3154
      %v3157 = vmul.f32 %v3155, %v2197
      %v3158 = vmul.f32 %v3155, %v2192
      %v3159 = vmul.f32 %v3155, %v2199
      %3163 = vrot.lane.b32.xlu0 %v3157, 34
      %v3164 = vpop.permute.xlu0 %3163
      %3165 = vrot.lane.b32.xlu0 %v3158, 34
      %v3166 = vpop.permute.xlu0 %3165
      %3167 = vrot.lane.b32.xlu0 %v3159, 34
      %v3168 = vpop.permute.xlu0 %3167
      %vm3169 = vcmask 277504
      %v3170 = vsel %vm3169, %v3164, %v3166
      %v3171 = vsel %vm3169, %v3166, %v3168
      %v3175 = vadd.f32 %v3150, %v3170
      %v3176 = vadd.f32 %v3151, %v3171
      %v3177 = vadd.f32 %v3152, %v3168
      %3178 = vset.pattern.permute.xlu0 40
      %3179 = vperm.xlu0 %3178, %v2200
      %v3180 = vpop.permute.xlu0 %3179
      %v3182 = vmul.f32 %v3180, %v2197
      %v3183 = vmul.f32 %v3180, %v2192
      %v3184 = vmul.f32 %v3180, %v2199
      %3188 = vrot.lane.b32.xlu0 %v3182, 33
      %v3189 = vpop.permute.xlu0 %3188
      %3190 = vrot.lane.b32.xlu0 %v3183, 33
      %v3191 = vpop.permute.xlu0 %3190
      %3192 = vrot.lane.b32.xlu0 %v3184, 33
      %v3193 = vpop.permute.xlu0 %3192
      %vm3194 = vcmask 269312
      %v3195 = vsel %vm3194, %v3189, %v3191
      %v3196 = vsel %vm3194, %v3191, %v3193
      %v3200 = vadd.f32 %v3175, %v3195
      %v3201 = vadd.f32 %v3176, %v3196
      %v3202 = vadd.f32 %v3177, %v3193
      %3203 = vset.pattern.permute.xlu0 41
      %3204 = vperm.xlu0 %3203, %v2200
      %v3205 = vpop.permute.xlu0 %3204
      %v3207 = vmul.f32 %v3205, %v2197
      %v3208 = vmul.f32 %v3205, %v2192
      %v3209 = vmul.f32 %v3205, %v2199
      %3213 = vrot.lane.b32.xlu0 %v3207, 32
      %v3214 = vpop.permute.xlu0 %3213
      %3215 = vrot.lane.b32.xlu0 %v3208, 32
      %v3216 = vpop.permute.xlu0 %3215
      %3217 = vrot.lane.b32.xlu0 %v3209, 32
      %v3218 = vpop.permute.xlu0 %3217
      %vm3219 = vcmask 261120
      %v3220 = vsel %vm3219, %v3214, %v3216
      %v3221 = vsel %vm3219, %v3216, %v3218
      %v3225 = vadd.f32 %v3200, %v3220
      %v3226 = vadd.f32 %v3201, %v3221
      %v3227 = vadd.f32 %v3202, %v3218
      %3228 = vset.pattern.permute.xlu0 42
      %3229 = vperm.xlu0 %3228, %v2200
      %v3230 = vpop.permute.xlu0 %3229
      %v3232 = vmul.f32 %v3230, %v2197
      %v3233 = vmul.f32 %v3230, %v2192
      %v3234 = vmul.f32 %v3230, %v2199
      %3238 = vrot.lane.b32.xlu0 %v3232, 20
      %v3239 = vpop.permute.xlu0 %3238
      %3240 = vrot.lane.b32.xlu0 %v3233, 20
      %v3241 = vpop.permute.xlu0 %3240
      %3242 = vrot.lane.b32.xlu0 %v3234, 20
      %v3243 = vpop.permute.xlu0 %3242
      %vm3244 = vcmask 162816
      %v3245 = vsel %vm3244, %v3239, %v3241
      %v3246 = vsel %vm3244, %v3241, %v3243
      %v3250 = vadd.f32 %v3225, %v3245
      %v3251 = vadd.f32 %v3226, %v3246
      %v3252 = vadd.f32 %v3227, %v3243
      %3253 = vset.pattern.permute.xlu0 43
      %3254 = vperm.xlu0 %3253, %v2200
      %v3255 = vpop.permute.xlu0 %3254
      %v3257 = vmul.f32 %v3255, %v2197
      %v3258 = vmul.f32 %v3255, %v2192
      %v3259 = vmul.f32 %v3255, %v2199
      %3263 = vrot.lane.b32.xlu0 %v3257, 19
      %v3264 = vpop.permute.xlu0 %3263
      %3265 = vrot.lane.b32.xlu0 %v3258, 19
      %v3266 = vpop.permute.xlu0 %3265
      %3267 = vrot.lane.b32.xlu0 %v3259, 19
      %v3268 = vpop.permute.xlu0 %3267
      %vm3269 = vcmask 154624
      %v3270 = vsel %vm3269, %v3264, %v3266
      %v3271 = vsel %vm3269, %v3266, %v3268
      %v3275 = vadd.f32 %v3250, %v3270
      %v3276 = vadd.f32 %v3251, %v3271
      %v3277 = vadd.f32 %v3252, %v3268
      %3278 = vset.pattern.permute.xlu0 44
      %3279 = vperm.xlu0 %3278, %v2200
      %v3280 = vpop.permute.xlu0 %3279
      %v3282 = vmul.f32 %v3280, %v2197
      %v3283 = vmul.f32 %v3280, %v2192
      %v3284 = vmul.f32 %v3280, %v2199
      %3288 = vrot.lane.b32.xlu0 %v3282, 18
      %v3289 = vpop.permute.xlu0 %3288
      %3290 = vrot.lane.b32.xlu0 %v3283, 18
      %v3291 = vpop.permute.xlu0 %3290
      %3292 = vrot.lane.b32.xlu0 %v3284, 18
      %v3293 = vpop.permute.xlu0 %3292
      %vm3294 = vcmask 146432
      %v3295 = vsel %vm3294, %v3289, %v3291
      %v3296 = vsel %vm3294, %v3291, %v3293
      %v3300 = vadd.f32 %v3275, %v3295
      %v3301 = vadd.f32 %v3276, %v3296
      %v3302 = vadd.f32 %v3277, %v3293
      %3303 = vset.pattern.permute.xlu0 45
      %3304 = vperm.xlu0 %3303, %v2200
      %v3305 = vpop.permute.xlu0 %3304
      %v3307 = vmul.f32 %v3305, %v2197
      %v3308 = vmul.f32 %v3305, %v2192
      %v3309 = vmul.f32 %v3305, %v2199
      %3313 = vrot.lane.b32.xlu0 %v3307, 17
      %v3314 = vpop.permute.xlu0 %3313
      %3315 = vrot.lane.b32.xlu0 %v3308, 17
      %v3316 = vpop.permute.xlu0 %3315
      %3317 = vrot.lane.b32.xlu0 %v3309, 17
      %v3318 = vpop.permute.xlu0 %3317
      %vm3319 = vcmask 138240
      %v3320 = vsel %vm3319, %v3314, %v3316
      %v3321 = vsel %vm3319, %v3316, %v3318
      %v3325 = vadd.f32 %v3300, %v3320
      %v3326 = vadd.f32 %v3301, %v3321
      %v3327 = vadd.f32 %v3302, %v3318
      %3328 = vset.pattern.permute.xlu0 46
      %3329 = vperm.xlu0 %3328, %v2200
      %v3330 = vpop.permute.xlu0 %3329
      %v3332 = vmul.f32 %v3330, %v2197
      %v3333 = vmul.f32 %v3330, %v2192
      %v3334 = vmul.f32 %v3330, %v2199
      %3338 = vrot.lane.b32.xlu0 %v3332, 16
      %v3339 = vpop.permute.xlu0 %3338
      %3340 = vrot.lane.b32.xlu0 %v3333, 16
      %v3341 = vpop.permute.xlu0 %3340
      %3342 = vrot.lane.b32.xlu0 %v3334, 16
      %v3343 = vpop.permute.xlu0 %3342
      %vm3344 = vcmask 130048
      %v3345 = vsel %vm3344, %v3339, %v3341
      %v3346 = vsel %vm3344, %v3341, %v3343
      %v3350 = vadd.f32 %v3325, %v3345
      %v3351 = vadd.f32 %v3326, %v3346
      %v3352 = vadd.f32 %v3327, %v3343
      %3353 = vset.pattern.permute.xlu0 47
      %3354 = vperm.xlu0 %3353, %v2200
      %v3355 = vpop.permute.xlu0 %3354
      %v3357 = vmul.f32 %v3355, %v2197
      %v3358 = vmul.f32 %v3355, %v2192
      %v3359 = vmul.f32 %v3355, %v2199
      %3363 = vrot.lane.b32.xlu0 %v3357, 15
      %v3364 = vpop.permute.xlu0 %3363
      %3365 = vrot.lane.b32.xlu0 %v3358, 15
      %v3366 = vpop.permute.xlu0 %3365
      %3367 = vrot.lane.b32.xlu0 %v3359, 15
      %v3368 = vpop.permute.xlu0 %3367
      %vm3369 = vcmask 121856
      %v3370 = vsel %vm3369, %v3364, %v3366
      %v3371 = vsel %vm3369, %v3366, %v3368
      %v3375 = vadd.f32 %v3350, %v3370
      %v3376 = vadd.f32 %v3351, %v3371
      %v3377 = vadd.f32 %v3352, %v3368
      %3378 = vset.pattern.permute.xlu0 48
      %3379 = vperm.xlu0 %3378, %v2200
      %v3380 = vpop.permute.xlu0 %3379
      %v3382 = vmul.f32 %v3380, %v2197
      %v3383 = vmul.f32 %v3380, %v2192
      %v3384 = vmul.f32 %v3380, %v2199
      %3388 = vrot.lane.b32.xlu0 %v3382, 14
      %v3389 = vpop.permute.xlu0 %3388
      %3390 = vrot.lane.b32.xlu0 %v3383, 14
      %v3391 = vpop.permute.xlu0 %3390
      %3392 = vrot.lane.b32.xlu0 %v3384, 14
      %v3393 = vpop.permute.xlu0 %3392
      %vm3394 = vcmask 113664
      %v3395 = vsel %vm3394, %v3389, %v3391
      %v3396 = vsel %vm3394, %v3391, %v3393
      %v3400 = vadd.f32 %v3375, %v3395
      %v3401 = vadd.f32 %v3376, %v3396
      %v3402 = vadd.f32 %v3377, %v3393
      %vm3403 = vcmask 1041408
      %v3404 = vsel %vm3403, %v3400, 0.0
      %v3405 = vrot.slane %v3404, 4
      %v3406 = vadd.f32 %v3404, %v3405
      %v3407 = vrot.slane %v3406, 2
      %v3408 = vadd.f32 %v3406, %v3407
      %v3409 = vrot.slane %v3408, 1
      %v3410 = vadd.f32 %v3408, %v3409
      %v3411 = vsel %vm3403, %v3401, 0.0
      %v3412 = vrot.slane %v3411, 4
      %v3413 = vadd.f32 %v3411, %v3412
      %v3414 = vrot.slane %v3413, 2
      %v3415 = vadd.f32 %v3413, %v3414
      %v3416 = vrot.slane %v3415, 1
      %v3417 = vadd.f32 %v3415, %v3416
      %vm3418 = vcmask 82944
      %v3419 = vsel %vm3418, %v3402, 0.0
      %v3420 = vrot.slane %v3419, 4
      %v3421 = vadd.f32 %v3419, %v3420
      %v3422 = vrot.slane %v3421, 2
      %v3423 = vadd.f32 %v3421, %v3422
      %v3424 = vrot.slane %v3423, 1
      %v3425 = vadd.f32 %v3423, %v3424
      %v3426 = vmul.f32 %v3410, 0.999995
      %v3427 = vmul.f32 %v3417, 0.999995
      %v3428 = vmul.f32 %v3425, 0.999995
      %v3429 = vxor.u32 %v3426, 2147483648
      %v3430 = vxor.u32 %v3427, 2147483648
      %v3431 = vxor.u32 %v3428, 2147483648
      %v3432 = vmul.f32 %v3429, 1.442695
      %v3433 = vpow.pop %v3432
      %v3434 = vmul.f32 %v3430, 1.442695
      %v3435 = vpow.pop %v3434
      %v3436 = vmul.f32 %v3431, 1.442695
      %v3437 = vpow.pop %v3436
      %v3438 = vadd.f32 %v3433, 1.0
      %v3439 = vadd.f32 %v3435, 1.0
      %v3440 = vadd.f32 %v3437, 1.0
      %v3441 = vrcp.pop %v3438
      %v3442 = vmul.f32 1.0, %v3441
      %v3443 = vrcp.pop %v3439
      %v3444 = vmul.f32 1.0, %v3443
      %v3445 = vrcp.pop %v3440
      %v3446 = vmul.f32 1.0, %v3445
      %v3447 = vmul.f32 %v2130, %v3442
      %v3448 = vmul.f32 %v2131, %v3444
      %v3449 = vmul.f32 %v2132, %v3446
      %v3450 = vsel %vm1904, %v3449, 0.0
      %3451 = vst [vmem:[%s332] sm:$0xff] %v3447
      %3452 = vst [vmem:[%s332 + $0x8] sm:$0xff] %v3448
      %3453 = vst.msk [vmem:[%s332 + $0x10] sm:$0xff] %vm3394, %v3450
      %p3454 = scmp.lt.s32.totalorder %s20, 1
      %s3455 = scalar_select %p3454, %s20, 1
      %s3456 = smul.addr %s3455, 3
      %s3457 = smul.addr %s3456, 8
      %s3458 = scalar_lea.vmem %s9, %s3457
      // Predicated region
      $region57: #{down_block_forward.1} parent=55 // pred_check
        %p3459 = pneg %p232
      $region58: #{down_block_forward.1} parent=55 // pred_check_branch
        %3461 = sbr.rel (%p3459) target = $region60
      $region59: #{down_block_forward.1} parent=55 // pred_region
        _
      $region60: #{down_block_forward.1} parent=55 // pred_fallthru
        _
    $region56: #{down_block_forward.1} parent=5 // pred_fallthru
      _
    %p3462 = scmp.le.s32.totalorder 2, %s15
    // Predicated region
    $region61: #{down_block_forward.1} parent=5 // pred_check
      %p3463 = pneg %p3462
    $region62: #{down_block_forward.1} parent=5 // pred_check_branch
      %3465 = sbr.rel (%p3463) target = $region64
    $region63: #{down_block_forward.1} parent=5 // pred_region
      %s3466 = ssub.s32 %s15, 2
      // Predicated region
      $region65: #{down_block_forward.1} parent=63 // pred_check
        %p3467 = pneg %p238
      $region66: #{down_block_forward.1} parent=63 // pred_check_branch
        %3469 = sbr.rel (%p3467) target = $region68
      $region67: #{down_block_forward.1} parent=63 // pred_region
        %p3470 = scmp.lt.s32.totalorder %s21, 1
        %s3471 = scalar_select %p3470, %s21, 1
        %s3472 = smul.addr %s3471, 3
        %s3473 = smul.addr %s3472, 8
        %s3474 = scalar_lea.vmem %s9, %s3473
      $region68: #{down_block_forward.1} parent=63 // pred_fallthru
        _
    $region64: #{down_block_forward.1} parent=5 // pred_fallthru
      _
  $region6: #{down_block_forward.1} parent=0 // loop_footer
    %s19 = sadd.s32 1, %s15
  $region7: #{down_block_forward.1} parent=0 // loop_footer_branch
    %14 = sbr.rel target = $region3
  $region8: #{down_block_forward.1} parent=0 // loop_exit
    _

</llo_original>
